<compile_context>
chip_gen: v5e
topology: v5e:2x2
jax: 0.10.0
libtpu: 0.0.40
codegen_flags: <defaults>
</compile_context>

<pallas_src>
import functools

import jax
import jax.numpy as jnp
from jax import lax
from jax.experimental import pallas as pl
from jax.experimental.pallas import tpu as pltpu

# ----------------------------- configuration ------------------------------ #
BATCH = 2
TARGET_DIM = 32
LATENT_DIM = 32                    # = target_dim so conv output feeds encoder d_model
NUM_TIME_FEAT = 4
INPUT_SIZE = TARGET_DIM + NUM_TIME_FEAT   # cat(future_target_cdf, time_embeds)
PRED_LEN = 16
HIST_LEN = 48
N_HEADS = 4
D_MODEL = 32
D_FF = 4 * D_MODEL
E_LAYERS = 2
CODEBOOK_NUM = 64
CODEBOOK_BETA = 0.25
OUT_TAIL = 8                       # extra sublane-aligned rows carrying the q_loss partial


# ------------------------------ fused kernel ------------------------------ #
def fused_forward_kernel(
        ftf_ref, ftc_ref,
        tproj_ref, inproj_w_ref, inproj_b_ref,
        attn_w_ref, attn_b_ref,
        w1_ref, b1_ref, w2_ref, b2_ref,
        ln_ref,
        kvmask_ref, grpmat_ref,
        enc_w_ref, enc_b_ref,
        quant_w_ref, quant_b_ref,
        codebook_ref, esq_ref,
        postq_w_ref, postq_b_ref,
        dec_w_ref, dec_b_ref,
        out_ref,
        pad_ref,
        *, n_heads, n_layers):
    """Entire forward for one batch element (grid=(B,), one step per element)."""
    f32 = jnp.float32
    P = ftc_ref.shape[1]            # prediction length
    D = ftc_ref.shape[2]            # target / latent dim
    hd = D // n_heads

    x_in = ftc_ref[0].astype(f32)                              # (P, D)
    ftf = ftf_ref[0].astype(f32)                               # (P, F)

    # ---- time_proj: Linear(F, F, bias=False) ----
    time_emb = jnp.dot(ftf, tproj_ref[...], preferred_element_type=f32)   # (P, F)

    # ---- K=3 "same"-padded conv helper ----
    # The padding scratch is zeroed exactly once; every conv overwrites rows 1..P of
    # the columns it reads, while rows 0 and P+1 (the zero padding) are never written.
    pad_ref[...] = jnp.zeros_like(pad_ref)

    def conv3(x, w_ref, b_ref):
        cin = x.shape[1]
        pad_ref[1:P + 1, 0:cin] = x
        acc = jnp.dot(pad_ref[0:P, 0:cin], w_ref[0], preferred_element_type=f32)
        acc = acc + jnp.dot(pad_ref[1:P + 1, 0:cin], w_ref[1],
                            preferred_element_type=f32)
        acc = acc + jnp.dot(pad_ref[2:P + 2, 0:cin], w_ref[2],
                            preferred_element_type=f32)
        return acc + b_ref[...]

    # ---- input_projection: Conv1d(INPUT_SIZE -> target_dim, k=3, padding=1) ----
    inp = jnp.concatenate([x_in, time_emb], axis=-1)           # (P, D+F)
    x = conv3(inp, inproj_w_ref, inproj_b_ref)                 # (P, D)

    # ---- fused multi-head attention helpers ----
    kv_mask = kvmask_ref[...]                                  # (H*P, D) block-diag mask
    grp_mat = grpmat_ref[...]                                  # (H*P, H*P) group-sum mat
    scale = 1.0 / (float(hd) ** 0.5)

    def dense(a, w, b):
        return jnp.dot(a, w, preferred_element_type=f32) + b

    def layer_norm(a, g, b):
        mu = jnp.mean(a, axis=-1, keepdims=True)
        var = jnp.mean((a - mu) ** 2, axis=-1, keepdims=True)
        return (a - mu) * lax.rsqrt(var + 1e-5) * g + b

    # TODO(synk): Transformer_EncModel source not provided; implemented as e_layers of
    # standard post-norm full-attention encoder layers (dropout=identity).
    for l in range(n_layers):                                  # static unroll (E_LAYERS=2)
        q = dense(x, attn_w_ref[l, 0], attn_b_ref[l, 0])       # (P, D)
        k = dense(x, attn_w_ref[l, 1], attn_b_ref[l, 1])
        v = dense(x, attn_w_ref[l, 2], attn_b_ref[l, 2])
        # Stack all heads block-diagonally: one MXU push for all head scores.
        k_blk = jnp.concatenate([k] * n_heads, axis=0) * kv_mask   # (H*P, D)
        v_blk = jnp.concatenate([v] * n_heads, axis=0) * kv_mask   # (H*P, D)
        s = lax.dot_general(q, k_blk, (((1,), (1,)), ((), ())),
                            preferred_element_type=f32) * scale    # (P, H*P)
        s = s - jnp.max(s, axis=-1, keepdims=True)                 # row max: same softmax
        p = jnp.exp(s)
        denom = jnp.dot(p, grp_mat, preferred_element_type=f32)    # per-head row sums
        p = p * pl.reciprocal(denom, approx=True)
        attn = jnp.dot(p, v_blk, preferred_element_type=f32)       # (P, D), heads concat
        attn = dense(attn, attn_w_ref[l, 3], attn_b_ref[l, 3])
        h1 = layer_norm(x + attn, ln_ref[l, 0], ln_ref[l, 1])
        ff = jnp.maximum(dense(h1, w1_ref[l], b1_ref[l]), 0.0)
        ff = dense(ff, w2_ref[l], b2_ref[l])
        x = layer_norm(h1 + ff, ln_ref[l, 2], ln_ref[l, 3])

    # TODO(synk): Encoder/Decoder module sources not provided; implemented as single
    # same-padded K=3 Conv1d blocks (ReLU on the encoder).
    enc = jnp.maximum(conv3(x, enc_w_ref, enc_b_ref), 0.0)         # (P, D)
    z = dense(enc, quant_w_ref[...], quant_b_ref[...])             # quant_conv (1x1)

    # ---- VQ codebook nearest neighbour (straight-through forward value) ----
    e = codebook_ref[...]                                          # (N, D)
    n_codes = e.shape[0]
    z_sq = jnp.sum(z * z, axis=-1, keepdims=True)                  # (P, 1)
    cross = lax.dot_general(z, e, (((1,), (1,)), ((), ())),
                            preferred_element_type=f32)            # (P, N)
    dist = z_sq - 2.0 * cross + esq_ref[...]                       # (P, N)
    dmin = jnp.min(dist, axis=-1, keepdims=True)
    code_iota = lax.broadcasted_iota(jnp.int32, dist.shape, 1)
    idx = jnp.min(jnp.where(dist <= dmin, code_iota, n_codes),
                  axis=-1, keepdims=True)                          # torch.argmin tie-break
    onehot = (code_iota == idx).astype(f32)
    zq = jnp.dot(onehot, e, preferred_element_type=f32)            # (P, D)

    qdiff = zq - z
    qpart = jnp.sum(jnp.sum(qdiff * qdiff, axis=1, keepdims=True),
                    axis=0, keepdims=True)                         # (1, 1) partial sum

    # ---- post_quant (1x1) -> output decoder conv ----
    post = dense(zq, postq_w_ref[...], postq_b_ref[...])
    dec = conv3(post, dec_w_ref, dec_b_ref)                        # (P, D)

    # Two direct, sublane-aligned stores: rows [0:P) = decoder output,
    # rows [P:) carry the per-batch codebook-loss partial sum (broadcast).
    tail = out_ref.shape[1] - P
    out_ref[0, 0:P, :] = dec.astype(out_ref.dtype)
    out_ref[0, P:P + tail, :] = jnp.broadcast_to(qpart, (tail, D)).astype(out_ref.dtype)


# ------------------------------- parameters -------------------------------- #
def init_params(key):
    def nrm(k, shape, scale=0.1):
        return scale * jax.random.normal(k, shape, jnp.float32)

    keys = iter(jax.random.split(key, 48))
    E, D, FF = E_LAYERS, LATENT_DIM, D_FF
    p = {}
    p['embed'] = nrm(next(keys), (TARGET_DIM, 1))                       # nn.Embedding
    p['time_proj_w'] = nrm(next(keys), (NUM_TIME_FEAT, NUM_TIME_FEAT))  # Linear(4,4,bias=False)
    p['inproj_w'] = nrm(next(keys), (3, INPUT_SIZE, TARGET_DIM))        # Conv1d k=3 pad=1
    p['inproj_b'] = nrm(next(keys), (1, TARGET_DIM))
    # transformer encoder-layer weights, stacked on leading (E_LAYERS, 4) axes
    wq = nrm(next(keys), (E, D, D)); wk = nrm(next(keys), (E, D, D))
    wv = nrm(next(keys), (E, D, D)); wo = nrm(next(keys), (E, D, D))
    p['attn_w'] = jnp.stack([wq, wk, wv, wo], axis=1)                   # (E, 4, D, D)
    bq = nrm(next(keys), (E, 1, D)); bk = nrm(next(keys), (E, 1, D))
    bv = nrm(next(keys), (E, 1, D)); bo = nrm(next(keys), (E, 1, D))
    p['attn_b'] = jnp.stack([bq, bk, bv, bo], axis=1)                   # (E, 4, 1, D)
    p['w1'] = nrm(next(keys), (E, D, FF)); p['b1'] = nrm(next(keys), (E, 1, FF))
    p['w2'] = nrm(next(keys), (E, FF, D)); p['b2'] = nrm(next(keys), (E, 1, D))
    ones = jnp.ones((E, 1, D), jnp.float32); zeros = jnp.zeros((E, 1, D), jnp.float32)
    p['ln'] = jnp.stack([ones, zeros, ones, zeros], axis=1)             # (E, 4, 1, D): g1,b1,g2,b2
    p['enc_w'] = nrm(next(keys), (3, D, D)); p['enc_b'] = nrm(next(keys), (1, D))   # input_encoder
    p['quant_w'] = nrm(next(keys), (D, D)); p['quant_b'] = nrm(next(keys), (1, D))  # quant_conv 1x1
    p['codebook'] = nrm(next(keys), (CODEBOOK_NUM, D), scale=1.0)
    p['postq_w'] = nrm(next(keys), (D, D)); p['postq_b'] = nrm(next(keys), (1, D))  # post_quant 1x1
    p['dec_w'] = nrm(next(keys), (3, D, TARGET_DIM)); p['dec_b'] = nrm(next(keys), (1, TARGET_DIM))
    return p


# ------------------------------- forward pass ------------------------------ #
def forward(params, target_dimension_indicator, past_time_feat, past_target_cdf,
            past_observed_values, past_is_pad, future_time_feat, future_target_cdf,
            future_observed_values):
    # ---- create_network_input ----
    # Index embeddings are computed by the reference but never consumed downstream
    # (DCE'd under jit).
    _ = params['embed'][target_dimension_indicator]
    # TODO(synk): MeanScaler / past_observed masking results are discarded by the
    # reference forward(); omitted here since they do not affect any output.
    target_inputs = future_target_cdf                                   # (B, P, target_dim)

    B, P, F = future_time_feat.shape
    D = future_target_cdf.shape[-1]
    hd = D // N_HEADS

    # compile-time-constant attention masks / codebook norms (folded by XLA)
    row_head = jnp.arange(N_HEADS * P, dtype=jnp.int32) // P            # (H*P,)
    col_head = jnp.arange(D, dtype=jnp.int32) // hd                     # (D,)
    kv_mask = (row_head[:, None] == col_head[None, :]).astype(jnp.float32)   # (H*P, D)
    grp_mat = (row_head[:, None] == row_head[None, :]).astype(jnp.float32)   # (H*P, H*P)
    e_sq = jnp.sum(params['codebook'] * params['codebook'], axis=-1)[None, :]  # (1, N)

    consts = [params['time_proj_w'], params['inproj_w'], params['inproj_b'],
              params['attn_w'], params['attn_b'],
              params['w1'], params['b1'], params['w2'], params['b2'],
              params['ln'],
              kv_mask, grp_mat,
              params['enc_w'], params['enc_b'],
              params['quant_w'], params['quant_b'],
              params['codebook'], e_sq,
              params['postq_w'], params['postq_b'],
              params['dec_w'], params['dec_b']]

    def _const_spec(a):
        return pl.BlockSpec(a.shape, lambda i, nd=a.ndim: (0,) * nd)

    # rough scheduler hints (advisory only)
    flops = B * (
        2 * P * F * F
        + 3 * 2 * P * (D + F) * D
        + E_LAYERS * (4 * 2 * P * D * D
                      + 2 * P * D * (N_HEADS * P)
                      + 2 * P * (N_HEADS * P) * (N_HEADS * P)
                      + 2 * P * (N_HEADS * P) * D
                      + 2 * 2 * P * D * D_FF)
        + 2 * (3 * 2 * P * D * D)
        + 2 * (2 * P * D * D)
        + 2 * (2 * P * D * CODEBOOK_NUM))
    transcendentals = B * E_LAYERS * P * N_HEADS * P * 2
    bytes_accessed = 4 * (sum(int(a.size) for a in consts)
                          + int(future_time_feat.size) + int(future_target_cdf.size)
                          + B * (P + OUT_TAIL) * D)

    out = pl.pallas_call(
        functools.partial(fused_forward_kernel, n_heads=N_HEADS, n_layers=E_LAYERS),
        out_shape=jax.ShapeDtypeStruct((B, P + OUT_TAIL, D), jnp.float32),
        grid=(B,),
        in_specs=[pl.BlockSpec((1, P, F), lambda i: (i, 0, 0)),
                  pl.BlockSpec((1, P, D), lambda i: (i, 0, 0))]
                 + [_const_spec(a) for a in consts],
        out_specs=pl.BlockSpec((1, P + OUT_TAIL, D), lambda i: (i, 0, 0)),
        scratch_shapes=[pltpu.VMEM((P + 2, INPUT_SIZE), jnp.float32)],
        compiler_params=pltpu.CompilerParams(dimension_semantics=("parallel",)),
        cost_estimate=pl.CostEstimate(flops=flops, transcendentals=transcendentals,
                                      bytes_accessed=bytes_accessed),
    )(future_time_feat, future_target_cdf, *consts)

    dec_output = out[:, :P, :]                                           # (B, P, target_dim)
    # Forward value of the VQGAN codebook loss (detach() only changes gradients):
    q_loss = (1.0 + CODEBOOK_BETA) * jnp.sum(out[:, P, 0]) / float(B * P * D)
    return target_inputs, dec_output, q_loss


# ----------------------------------- main ---------------------------------- #
if __name__ == "__main__":
    key = jax.random.PRNGKey(0)
    pk, dk = jax.random.split(key)
    params = init_params(pk)
    ks = jax.random.split(dk, 8)

    target_dimension_indicator = jnp.tile(
        jnp.arange(TARGET_DIM, dtype=jnp.int32)[None, :], (BATCH, 1))
    past_time_feat = jax.random.normal(ks[0], (BATCH, HIST_LEN, NUM_TIME_FEAT), jnp.float32)
    past_target_cdf = jax.random.normal(ks[1], (BATCH, HIST_LEN, TARGET_DIM), jnp.float32)
    past_observed_values = jnp.ones((BATCH, HIST_LEN, TARGET_DIM), jnp.float32)
    past_is_pad = jnp.zeros((BATCH, HIST_LEN), jnp.float32)
    future_time_feat = jax.random.normal(ks[2], (BATCH, PRED_LEN, NUM_TIME_FEAT), jnp.float32)
    future_target_cdf = jax.random.normal(ks[3], (BATCH, PRED_LEN, TARGET_DIM), jnp.float32)
    future_observed_values = jnp.ones((BATCH, PRED_LEN, TARGET_DIM), jnp.float32)

    fwd = jax.jit(functools.partial(forward, params))
    target_inputs, dec_output, q_loss = fwd(
        target_dimension_indicator, past_time_feat, past_target_cdf,
        past_observed_values, past_is_pad, future_time_feat, future_target_cdf,
        future_observed_values)
    jax.block_until_ready((target_inputs, dec_output, q_loss))

    assert target_inputs.shape == (BATCH, PRED_LEN, TARGET_DIM)
    assert dec_output.shape == (BATCH, PRED_LEN, TARGET_DIM)
    assert q_loss.shape == ()
    assert bool(jnp.all(jnp.isfinite(dec_output))) and bool(jnp.isfinite(q_loss))
    print("KERNEL_OK")
</pallas_src>

<mosaic_0001>
module attributes {stable_mosaic.version = 11 : i64} {
  func.func @fused_forward_kernel(%arg0: i32, %arg1: memref<1x16x4xf32, #tpu.memory_space<vmem>>, %arg2: memref<1x16x32xf32, #tpu.memory_space<vmem>>, %arg3: memref<4x4xf32, #tpu.memory_space<vmem>>, %arg4: memref<3x36x32xf32, #tpu.memory_space<vmem>>, %arg5: memref<1x32xf32, #tpu.memory_space<vmem>>, %arg6: memref<2x4x32x32xf32, #tpu.memory_space<vmem>>, %arg7: memref<2x4x1x32xf32, #tpu.memory_space<vmem>>, %arg8: memref<2x32x128xf32, #tpu.memory_space<vmem>>, %arg9: memref<2x1x128xf32, #tpu.memory_space<vmem>>, %arg10: memref<2x128x32xf32, #tpu.memory_space<vmem>>, %arg11: memref<2x1x32xf32, #tpu.memory_space<vmem>>, %arg12: memref<2x4x1x32xf32, #tpu.memory_space<vmem>>, %arg13: memref<64x32xf32, #tpu.memory_space<vmem>>, %arg14: memref<64x64xf32, #tpu.memory_space<vmem>>, %arg15: memref<3x32x32xf32, #tpu.memory_space<vmem>>, %arg16: memref<1x32xf32, #tpu.memory_space<vmem>>, %arg17: memref<32x32xf32, #tpu.memory_space<vmem>>, %arg18: memref<1x32xf32, #tpu.memory_space<vmem>>, %arg19: memref<64x32xf32, #tpu.memory_space<vmem>>, %arg20: memref<1x64xf32, #tpu.memory_space<vmem>>, %arg21: memref<32x32xf32, #tpu.memory_space<vmem>>, %arg22: memref<1x32xf32, #tpu.memory_space<vmem>>, %arg23: memref<3x32x32xf32, #tpu.memory_space<vmem>>, %arg24: memref<1x32xf32, #tpu.memory_space<vmem>>, %arg25: memref<1x24x32xf32, #tpu.memory_space<vmem>>, %arg26: memref<18x36xf32, #tpu.memory_space<vmem>>) attributes {dimension_semantics = [#tpu.dimension_semantics<parallel>], iteration_bounds = array<i64: 2>, scalar_prefetch = 0 : i64, scratch_operands = 1 : i64, tpu.core_type = #tpu.core_type<tc>, window_params = [{transform_indices = @transform_0, window_bounds = array<i64: 1, 16, 4>}, {transform_indices = @transform_1, window_bounds = array<i64: 1, 16, 32>}, {pipeline_mode = #tpu.pipeline_mode<synchronous>, transform_indices = @transform_2, window_bounds = array<i64: 4, 4>}, {pipeline_mode = #tpu.pipeline_mode<synchronous>, transform_indices = @transform_3, window_bounds = array<i64: 3, 36, 32>}, {pipeline_mode = #tpu.pipeline_mode<synchronous>, transform_indices = @transform_4, window_bounds = array<i64: 1, 32>}, {pipeline_mode = #tpu.pipeline_mode<synchronous>, transform_indices = @transform_5, window_bounds = array<i64: 2, 4, 32, 32>}, {pipeline_mode = #tpu.pipeline_mode<synchronous>, transform_indices = @transform_6, window_bounds = array<i64: 2, 4, 1, 32>}, {pipeline_mode = #tpu.pipeline_mode<synchronous>, transform_indices = @transform_7, window_bounds = array<i64: 2, 32, 128>}, {pipeline_mode = #tpu.pipeline_mode<synchronous>, transform_indices = @transform_8, window_bounds = array<i64: 2, 1, 128>}, {pipeline_mode = #tpu.pipeline_mode<synchronous>, transform_indices = @transform_9, window_bounds = array<i64: 2, 128, 32>}, {pipeline_mode = #tpu.pipeline_mode<synchronous>, transform_indices = @transform_10, window_bounds = array<i64: 2, 1, 32>}, {pipeline_mode = #tpu.pipeline_mode<synchronous>, transform_indices = @transform_11, window_bounds = array<i64: 2, 4, 1, 32>}, {pipeline_mode = #tpu.pipeline_mode<synchronous>, transform_indices = @transform_12, window_bounds = array<i64: 64, 32>}, {pipeline_mode = #tpu.pipeline_mode<synchronous>, transform_indices = @transform_13, window_bounds = array<i64: 64, 64>}, {pipeline_mode = #tpu.pipeline_mode<synchronous>, transform_indices = @transform_14, window_bounds = array<i64: 3, 32, 32>}, {pipeline_mode = #tpu.pipeline_mode<synchronous>, transform_indices = @transform_15, window_bounds = array<i64: 1, 32>}, {pipeline_mode = #tpu.pipeline_mode<synchronous>, transform_indices = @transform_16, window_bounds = array<i64: 32, 32>}, {pipeline_mode = #tpu.pipeline_mode<synchronous>, transform_indices = @transform_17, window_bounds = array<i64: 1, 32>}, {pipeline_mode = #tpu.pipeline_mode<synchronous>, transform_indices = @transform_18, window_bounds = array<i64: 64, 32>}, {pipeline_mode = #tpu.pipeline_mode<synchronous>, transform_indices = @transform_19, window_bounds = array<i64: 1, 64>}, {pipeline_mode = #tpu.pipeline_mode<synchronous>, transform_indices = @transform_20, window_bounds = array<i64: 32, 32>}, {pipeline_mode = #tpu.pipeline_mode<synchronous>, transform_indices = @transform_21, window_bounds = array<i64: 1, 32>}, {pipeline_mode = #tpu.pipeline_mode<synchronous>, transform_indices = @transform_22, window_bounds = array<i64: 3, 32, 32>}, {pipeline_mode = #tpu.pipeline_mode<synchronous>, transform_indices = @transform_23, window_bounds = array<i64: 1, 32>}, {transform_indices = @transform_24, window_bounds = array<i64: 1, 24, 32>}]} {
    %c0 = arith.constant 0 : index
    %c0_0 = arith.constant 0 : index
    %c0_1 = arith.constant 0 : index
    %0 = vector.load %arg2[%c0, %c0_0, %c0_1] : memref<1x16x32xf32, #tpu.memory_space<vmem>>, vector<1x16x32xf32>
    %1 = vector.shape_cast %0 : vector<1x16x32xf32> to vector<16x32xf32>
    %c0_2 = arith.constant 0 : index
    %c0_3 = arith.constant 0 : index
    %c0_4 = arith.constant 0 : index
    %2 = vector.load %arg1[%c0_2, %c0_3, %c0_4] : memref<1x16x4xf32, #tpu.memory_space<vmem>>, vector<1x16x4xf32>
    %3 = vector.shape_cast %2 : vector<1x16x4xf32> to vector<16x4xf32>
    %c0_5 = arith.constant 0 : index
    %c0_6 = arith.constant 0 : index
    %4 = vector.load %arg3[%c0_5, %c0_6] : memref<4x4xf32, #tpu.memory_space<vmem>>, vector<4x4xf32>
    %cst = arith.constant dense<0.000000e+00> : vector<16x4xf32>
    %5 = tpu.matmul %3, %4, %cst {dimension_numbers = #tpu.dot_dimension_numbers<[1], [0], [0], [1], [0, 0, 1, 1], [], []>} : vector<16x4xf32>, vector<4x4xf32>, vector<16x4xf32> -> vector<16x4xf32>
    %cst_7 = arith.constant 0.000000e+00 : f32
    %6 = vector.broadcast %cst_7 : f32 to vector<18x36xf32>
    %c0_8 = arith.constant 0 : index
    %c0_9 = arith.constant 0 : index
    %7 = vector.load %arg26[%c0_8, %c0_9] : memref<18x36xf32, #tpu.memory_space<vmem>>, vector<18x36xf32>
    tpu.vector_store %arg26[%c0_8, %c0_9], %6 {strides = array<i32>} : memref<18x36xf32, #tpu.memory_space<vmem>>, vector<18x36xf32>,
    %8 = tpu.concatenate %1, %5 in 1 : vector<16x32xf32>, vector<16x4xf32> -> vector<16x36xf32>
    %c1 = arith.constant 1 : index
    %c0_10 = arith.constant 0 : index
    %9 = vector.load %arg26[%c1, %c0_10] : memref<18x36xf32, #tpu.memory_space<vmem>>, vector<16x36xf32>
    tpu.vector_store %arg26[%c1, %c0_10], %8 {strides = array<i32>} : memref<18x36xf32, #tpu.memory_space<vmem>>, vector<16x36xf32>,
    %c0_11 = arith.constant 0 : index
    %c0_12 = arith.constant 0 : index
    %10 = vector.load %arg26[%c0_11, %c0_12] : memref<18x36xf32, #tpu.memory_space<vmem>>, vector<16x36xf32>
    %c0_13 = arith.constant 0 : index
    %c0_14 = arith.constant 0 : index
    %c0_15 = arith.constant 0 : index
    %11 = vector.load %arg4[%c0_13, %c0_14, %c0_15] : memref<3x36x32xf32, #tpu.memory_space<vmem>>, vector<1x36x32xf32>
    %12 = vector.shape_cast %11 : vector<1x36x32xf32> to vector<36x32xf32>
    %cst_16 = arith.constant dense<0.000000e+00> : vector<16x32xf32>
    %13 = tpu.matmul %10, %12, %cst_16 {dimension_numbers = #tpu.dot_dimension_numbers<[1], [0], [0], [1], [0, 0, 1, 1], [], []>} : vector<16x36xf32>, vector<36x32xf32>, vector<16x32xf32> -> vector<16x32xf32>
    %c1_17 = arith.constant 1 : index
    %c0_18 = arith.constant 0 : index
    %14 = vector.load %arg26[%c1_17, %c0_18] : memref<18x36xf32, #tpu.memory_space<vmem>>, vector<16x36xf32>
    %c1_19 = arith.constant 1 : index
    %c0_20 = arith.constant 0 : index
    %c0_21 = arith.constant 0 : index
    %15 = vector.load %arg4[%c1_19, %c0_20, %c0_21] : memref<3x36x32xf32, #tpu.memory_space<vmem>>, vector<1x36x32xf32>
    %16 = vector.shape_cast %15 : vector<1x36x32xf32> to vector<36x32xf32>
    %cst_22 = arith.constant dense<0.000000e+00> : vector<16x32xf32>
    %17 = tpu.matmul %14, %16, %cst_22 {dimension_numbers = #tpu.dot_dimension_numbers<[1], [0], [0], [1], [0, 0, 1, 1], [], []>} : vector<16x36xf32>, vector<36x32xf32>, vector<16x32xf32> -> vector<16x32xf32>
    %18 = arith.addf %13, %17 : vector<16x32xf32>
    %c2 = arith.constant 2 : index
    %c0_23 = arith.constant 0 : index
    %19 = vector.load %arg26[%c2, %c0_23] : memref<18x36xf32, #tpu.memory_space<vmem>>, vector<16x36xf32>
    %c2_24 = arith.constant 2 : index
    %c0_25 = arith.constant 0 : index
    %c0_26 = arith.constant 0 : index
    %20 = vector.load %arg4[%c2_24, %c0_25, %c0_26] : memref<3x36x32xf32, #tpu.memory_space<vmem>>, vector<1x36x32xf32>
    %21 = vector.shape_cast %20 : vector<1x36x32xf32> to vector<36x32xf32>
    %cst_27 = arith.constant dense<0.000000e+00> : vector<16x32xf32>
    %22 = tpu.matmul %19, %21, %cst_27 {dimension_numbers = #tpu.dot_dimension_numbers<[1], [0], [0], [1], [0, 0, 1, 1], [], []>} : vector<16x36xf32>, vector<36x32xf32>, vector<16x32xf32> -> vector<16x32xf32>
    %23 = arith.addf %18, %22 : vector<16x32xf32>
    %c0_28 = arith.constant 0 : index
    %c0_29 = arith.constant 0 : index
    %24 = vector.load %arg5[%c0_28, %c0_29] : memref<1x32xf32, #tpu.memory_space<vmem>>, vector<1x32xf32>
    %25 = vector.broadcast %24 : vector<1x32xf32> to vector<16x32xf32>
    %26 = arith.addf %23, %25 : vector<16x32xf32>
    %c0_30 = arith.constant 0 : index
    %c0_31 = arith.constant 0 : index
    %27 = vector.load %arg13[%c0_30, %c0_31] : memref<64x32xf32, #tpu.memory_space<vmem>>, vector<64x32xf32>
    %c0_32 = arith.constant 0 : index
    %c0_33 = arith.constant 0 : index
    %28 = vector.load %arg14[%c0_32, %c0_33] : memref<64x64xf32, #tpu.memory_space<vmem>>, vector<64x64xf32>
    %c0_34 = arith.constant 0 : index
    %c0_35 = arith.constant 0 : index
    %c0_36 = arith.constant 0 : index
    %c0_37 = arith.constant 0 : index
    %29 = vector.load %arg6[%c0_34, %c0_35, %c0_36, %c0_37] : memref<2x4x32x32xf32, #tpu.memory_space<vmem>>, vector<1x1x32x32xf32>
    %30 = vector.shape_cast %29 : vector<1x1x32x32xf32> to vector<32x32xf32>
    %c0_38 = arith.constant 0 : index
    %c0_39 = arith.constant 0 : index
    %c0_40 = arith.constant 0 : index
    %c0_41 = arith.constant 0 : index
    %31 = vector.load %arg7[%c0_38, %c0_39, %c0_40, %c0_41] : memref<2x4x1x32xf32, #tpu.memory_space<vmem>>, vector<1x1x1x32xf32>
    %32 = vector.shape_cast %31 : vector<1x1x1x32xf32> to vector<1x32xf32>
    %cst_42 = arith.constant dense<0.000000e+00> : vector<16x32xf32>
    %33 = tpu.matmul %26, %30, %cst_42 {dimension_numbers = #tpu.dot_dimension_numbers<[1], [0], [0], [1], [0, 0, 1, 1], [], []>} : vector<16x32xf32>, vector<32x32xf32>, vector<16x32xf32> -> vector<16x32xf32>
    %34 = vector.broadcast %32 : vector<1x32xf32> to vector<16x32xf32>
    %35 = arith.addf %33, %34 : vector<16x32xf32>
    %c0_43 = arith.constant 0 : index
    %c1_44 = arith.constant 1 : index
    %c0_45 = arith.constant 0 : index
    %c0_46 = arith.constant 0 : index
    %36 = vector.load %arg6[%c0_43, %c1_44, %c0_45, %c0_46] : memref<2x4x32x32xf32, #tpu.memory_space<vmem>>, vector<1x1x32x32xf32>
    %37 = vector.shape_cast %36 : vector<1x1x32x32xf32> to vector<32x32xf32>
    %c0_47 = arith.constant 0 : index
    %c1_48 = arith.constant 1 : index
    %c0_49 = arith.constant 0 : index
    %c0_50 = arith.constant 0 : index
    %38 = vector.load %arg7[%c0_47, %c1_48, %c0_49, %c0_50] : memref<2x4x1x32xf32, #tpu.memory_space<vmem>>, vector<1x1x1x32xf32>
    %39 = vector.shape_cast %38 : vector<1x1x1x32xf32> to vector<1x32xf32>
    %cst_51 = arith.constant dense<0.000000e+00> : vector<16x32xf32>
    %40 = tpu.matmul %26, %37, %cst_51 {dimension_numbers = #tpu.dot_dimension_numbers<[1], [0], [0], [1], [0, 0, 1, 1], [], []>} : vector<16x32xf32>, vector<32x32xf32>, vector<16x32xf32> -> vector<16x32xf32>
    %41 = vector.broadcast %39 : vector<1x32xf32> to vector<16x32xf32>
    %42 = arith.addf %40, %41 : vector<16x32xf32>
    %c0_52 = arith.constant 0 : index
    %c2_53 = arith.constant 2 : index
    %c0_54 = arith.constant 0 : index
    %c0_55 = arith.constant 0 : index
    %43 = vector.load %arg6[%c0_52, %c2_53, %c0_54, %c0_55] : memref<2x4x32x32xf32, #tpu.memory_space<vmem>>, vector<1x1x32x32xf32>
    %44 = vector.shape_cast %43 : vector<1x1x32x32xf32> to vector<32x32xf32>
    %c0_56 = arith.constant 0 : index
    %c2_57 = arith.constant 2 : index
    %c0_58 = arith.constant 0 : index
    %c0_59 = arith.constant 0 : index
    %45 = vector.load %arg7[%c0_56, %c2_57, %c0_58, %c0_59] : memref<2x4x1x32xf32, #tpu.memory_space<vmem>>, vector<1x1x1x32xf32>
    %46 = vector.shape_cast %45 : vector<1x1x1x32xf32> to vector<1x32xf32>
    %cst_60 = arith.constant dense<0.000000e+00> : vector<16x32xf32>
    %47 = tpu.matmul %26, %44, %cst_60 {dimension_numbers = #tpu.dot_dimension_numbers<[1], [0], [0], [1], [0, 0, 1, 1], [], []>} : vector<16x32xf32>, vector<32x32xf32>, vector<16x32xf32> -> vector<16x32xf32>
    %48 = vector.broadcast %46 : vector<1x32xf32> to vector<16x32xf32>
    %49 = arith.addf %47, %48 : vector<16x32xf32>
    %50 = tpu.concatenate %42, %42, %42, %42 in 0 : vector<16x32xf32>, vector<16x32xf32>, vector<16x32xf32>, vector<16x32xf32> -> vector<64x32xf32>
    %51 = arith.mulf %50, %27 : vector<64x32xf32>
    %52 = tpu.concatenate %49, %49, %49, %49 in 0 : vector<16x32xf32>, vector<16x32xf32>, vector<16x32xf32>, vector<16x32xf32> -> vector<64x32xf32>
    %53 = arith.mulf %52, %27 : vector<64x32xf32>
    %cst_61 = arith.constant dense<0.000000e+00> : vector<16x64xf32>
    %54 = tpu.matmul %35, %51, %cst_61 {dimension_numbers = #tpu.dot_dimension_numbers<[1], [1], [0], [0], [0, 0, 1, 0], [], []>} : vector<16x32xf32>, vector<64x32xf32>, vector<16x64xf32> -> vector<16x64xf32>
    %cst_62 = arith.constant 0.353553385 : f32
    %55 = vector.broadcast %cst_62 : f32 to vector<16x64xf32>
    %56 = arith.mulf %54, %55 : vector<16x64xf32>
    %cst_63 = arith.constant dense<0xFF800000> : vector<16xf32>
    %57 = vector.multi_reduction <maximumf>, %56, %cst_63 [1] : vector<16x64xf32> to vector<16xf32>
    %58 = vector.shape_cast %57 : vector<16xf32> to vector<16x1xf32>
    %59 = vector.broadcast %58 : vector<16x1xf32> to vector<16x64xf32>
    %60 = arith.subf %56, %59 : vector<16x64xf32>
    %61 = math.exp %60 : vector<16x64xf32>
    %cst_64 = arith.constant dense<0.000000e+00> : vector<16x64xf32>
    %62 = tpu.matmul %61, %28, %cst_64 {dimension_numbers = #tpu.dot_dimension_numbers<[1], [0], [0], [1], [0, 0, 1, 1], [], []>} : vector<16x64xf32>, vector<64x64xf32>, vector<16x64xf32> -> vector<16x64xf32>
    %63 = tpu.reciprocal %62 {approx = true} : vector<16x64xf32> -> vector<16x64xf32>
    %64 = arith.mulf %61, %63 : vector<16x64xf32>
    %cst_65 = arith.constant dense<0.000000e+00> : vector<16x32xf32>
    %65 = tpu.matmul %64, %53, %cst_65 {dimension_numbers = #tpu.dot_dimension_numbers<[1], [0], [0], [1], [0, 0, 1, 1], [], []>} : vector<16x64xf32>, vector<64x32xf32>, vector<16x32xf32> -> vector<16x32xf32>
    %c0_66 = arith.constant 0 : index
    %c3 = arith.constant 3 : index
    %c0_67 = arith.constant 0 : index
    %c0_68 = arith.constant 0 : index
    %66 = vector.load %arg6[%c0_66, %c3, %c0_67, %c0_68] : memref<2x4x32x32xf32, #tpu.memory_space<vmem>>, vector<1x1x32x32xf32>
    %67 = vector.shape_cast %66 : vector<1x1x32x32xf32> to vector<32x32xf32>
    %c0_69 = arith.constant 0 : index
    %c3_70 = arith.constant 3 : index
    %c0_71 = arith.constant 0 : index
    %c0_72 = arith.constant 0 : index
    %68 = vector.load %arg7[%c0_69, %c3_70, %c0_71, %c0_72] : memref<2x4x1x32xf32, #tpu.memory_space<vmem>>, vector<1x1x1x32xf32>
    %69 = vector.shape_cast %68 : vector<1x1x1x32xf32> to vector<1x32xf32>
    %cst_73 = arith.constant dense<0.000000e+00> : vector<16x32xf32>
    %70 = tpu.matmul %65, %67, %cst_73 {dimension_numbers = #tpu.dot_dimension_numbers<[1], [0], [0], [1], [0, 0, 1, 1], [], []>} : vector<16x32xf32>, vector<32x32xf32>, vector<16x32xf32> -> vector<16x32xf32>
    %71 = vector.broadcast %69 : vector<1x32xf32> to vector<16x32xf32>
    %72 = arith.addf %70, %71 : vector<16x32xf32>
    %73 = arith.addf %26, %72 : vector<16x32xf32>
    %c0_74 = arith.constant 0 : index
    %c0_75 = arith.constant 0 : index
    %c0_76 = arith.constant 0 : index
    %c0_77 = arith.constant 0 : index
    %74 = vector.load %arg12[%c0_74, %c0_75, %c0_76, %c0_77] : memref<2x4x1x32xf32, #tpu.memory_space<vmem>>, vector<1x1x1x32xf32>
    %75 = vector.shape_cast %74 : vector<1x1x1x32xf32> to vector<1x32xf32>
    %c0_78 = arith.constant 0 : index
    %c1_79 = arith.constant 1 : index
    %c0_80 = arith.constant 0 : index
    %c0_81 = arith.constant 0 : index
    %76 = vector.load %arg12[%c0_78, %c1_79, %c0_80, %c0_81] : memref<2x4x1x32xf32, #tpu.memory_space<vmem>>, vector<1x1x1x32xf32>
    %77 = vector.shape_cast %76 : vector<1x1x1x32xf32> to vector<1x32xf32>
    %cst_82 = arith.constant dense<0.000000e+00> : vector<16xf32>
    %78 = vector.multi_reduction <add>, %73, %cst_82 [1] : vector<16x32xf32> to vector<16xf32>
    %79 = vector.shape_cast %78 : vector<16xf32> to vector<16x1xf32>
    %cst_83 = arith.constant 3.200000e+01 : f32
    %80 = vector.broadcast %cst_83 : f32 to vector<16x1xf32>
    %81 = arith.divf %79, %80 : vector<16x1xf32>
    %82 = vector.broadcast %81 : vector<16x1xf32> to vector<16x32xf32>
    %83 = arith.subf %73, %82 : vector<16x32xf32>
    %84 = arith.mulf %83, %83 : vector<16x32xf32>
    %cst_84 = arith.constant dense<0.000000e+00> : vector<16xf32>
    %85 = vector.multi_reduction <add>, %84, %cst_84 [1] : vector<16x32xf32> to vector<16xf32>
    %86 = vector.shape_cast %85 : vector<16xf32> to vector<16x1xf32>
    %cst_85 = arith.constant 3.200000e+01 : f32
    %87 = vector.broadcast %cst_85 : f32 to vector<16x1xf32>
    %88 = arith.divf %86, %87 : vector<16x1xf32>
    %89 = vector.broadcast %81 : vector<16x1xf32> to vector<16x32xf32>
    %90 = arith.subf %73, %89 : vector<16x32xf32>
    %cst_86 = arith.constant 9.99999974E-6 : f32
    %91 = vector.broadcast %cst_86 : f32 to vector<16x1xf32>
    %92 = arith.addf %88, %91 : vector<16x1xf32>
    %93 = math.rsqrt %92 : vector<16x1xf32>
    %94 = vector.broadcast %93 : vector<16x1xf32> to vector<16x32xf32>
    %95 = arith.mulf %90, %94 : vector<16x32xf32>
    %96 = vector.broadcast %75 : vector<1x32xf32> to vector<16x32xf32>
    %97 = arith.mulf %95, %96 : vector<16x32xf32>
    %98 = vector.broadcast %77 : vector<1x32xf32> to vector<16x32xf32>
    %99 = arith.addf %97, %98 : vector<16x32xf32>
    %c0_87 = arith.constant 0 : index
    %c0_88 = arith.constant 0 : index
    %c0_89 = arith.constant 0 : index
    %100 = vector.load %arg8[%c0_87, %c0_88, %c0_89] : memref<2x32x128xf32, #tpu.memory_space<vmem>>, vector<1x32x128xf32>
    %101 = vector.shape_cast %100 : vector<1x32x128xf32> to vector<32x128xf32>
    %c0_90 = arith.constant 0 : index
    %c0_91 = arith.constant 0 : index
    %c0_92 = arith.constant 0 : index
    %102 = vector.load %arg9[%c0_90, %c0_91, %c0_92] : memref<2x1x128xf32, #tpu.memory_space<vmem>>, vector<1x1x128xf32>
    %103 = vector.shape_cast %102 : vector<1x1x128xf32> to vector<1x128xf32>
    %cst_93 = arith.constant dense<0.000000e+00> : vector<16x128xf32>
    %104 = tpu.matmul %99, %101, %cst_93 {dimension_numbers = #tpu.dot_dimension_numbers<[1], [0], [0], [1], [0, 0, 1, 1], [], []>} : vector<16x32xf32>, vector<32x128xf32>, vector<16x128xf32> -> vector<16x128xf32>
    %105 = vector.broadcast %103 : vector<1x128xf32> to vector<16x128xf32>
    %106 = arith.addf %104, %105 : vector<16x128xf32>
    %cst_94 = arith.constant 0.000000e+00 : f32
    %107 = vector.broadcast %cst_94 : f32 to vector<16x128xf32>
    %108 = arith.maximumf %106, %107 : vector<16x128xf32>
    %c0_95 = arith.constant 0 : index
    %c0_96 = arith.constant 0 : index
    %c0_97 = arith.constant 0 : index
    %109 = vector.load %arg10[%c0_95, %c0_96, %c0_97] : memref<2x128x32xf32, #tpu.memory_space<vmem>>, vector<1x128x32xf32>
    %110 = vector.shape_cast %109 : vector<1x128x32xf32> to vector<128x32xf32>
    %c0_98 = arith.constant 0 : index
    %c0_99 = arith.constant 0 : index
    %c0_100 = arith.constant 0 : index
    %111 = vector.load %arg11[%c0_98, %c0_99, %c0_100] : memref<2x1x32xf32, #tpu.memory_space<vmem>>, vector<1x1x32xf32>
    %112 = vector.shape_cast %111 : vector<1x1x32xf32> to vector<1x32xf32>
    %cst_101 = arith.constant dense<0.000000e+00> : vector<16x32xf32>
    %113 = tpu.matmul %108, %110, %cst_101 {dimension_numbers = #tpu.dot_dimension_numbers<[1], [0], [0], [1], [0, 0, 1, 1], [], []>} : vector<16x128xf32>, vector<128x32xf32>, vector<16x32xf32> -> vector<16x32xf32>
    %114 = vector.broadcast %112 : vector<1x32xf32> to vector<16x32xf32>
    %115 = arith.addf %113, %114 : vector<16x32xf32>
    %116 = arith.addf %99, %115 : vector<16x32xf32>
    %c0_102 = arith.constant 0 : index
    %c2_103 = arith.constant 2 : index
    %c0_104 = arith.constant 0 : index
    %c0_105 = arith.constant 0 : index
    %117 = vector.load %arg12[%c0_102, %c2_103, %c0_104, %c0_105] : memref<2x4x1x32xf32, #tpu.memory_space<vmem>>, vector<1x1x1x32xf32>
    %118 = vector.shape_cast %117 : vector<1x1x1x32xf32> to vector<1x32xf32>
    %c0_106 = arith.constant 0 : index
    %c3_107 = arith.constant 3 : index
    %c0_108 = arith.constant 0 : index
    %c0_109 = arith.constant 0 : index
    %119 = vector.load %arg12[%c0_106, %c3_107, %c0_108, %c0_109] : memref<2x4x1x32xf32, #tpu.memory_space<vmem>>, vector<1x1x1x32xf32>
    %120 = vector.shape_cast %119 : vector<1x1x1x32xf32> to vector<1x32xf32>
    %cst_110 = arith.constant dense<0.000000e+00> : vector<16xf32>
    %121 = vector.multi_reduction <add>, %116, %cst_110 [1] : vector<16x32xf32> to vector<16xf32>
    %122 = vector.shape_cast %121 : vector<16xf32> to vector<16x1xf32>
    %cst_111 = arith.constant 3.200000e+01 : f32
    %123 = vector.broadcast %cst_111 : f32 to vector<16x1xf32>
    %124 = arith.divf %122, %123 : vector<16x1xf32>
    %125 = vector.broadcast %124 : vector<16x1xf32> to vector<16x32xf32>
    %126 = arith.subf %116, %125 : vector<16x32xf32>
    %127 = arith.mulf %126, %126 : vector<16x32xf32>
    %cst_112 = arith.constant dense<0.000000e+00> : vector<16xf32>
    %128 = vector.multi_reduction <add>, %127, %cst_112 [1] : vector<16x32xf32> to vector<16xf32>
    %129 = vector.shape_cast %128 : vector<16xf32> to vector<16x1xf32>
    %cst_113 = arith.constant 3.200000e+01 : f32
    %130 = vector.broadcast %cst_113 : f32 to vector<16x1xf32>
    %131 = arith.divf %129, %130 : vector<16x1xf32>
    %132 = vector.broadcast %124 : vector<16x1xf32> to vector<16x32xf32>
    %133 = arith.subf %116, %132 : vector<16x32xf32>
    %cst_114 = arith.constant 9.99999974E-6 : f32
    %134 = vector.broadcast %cst_114 : f32 to vector<16x1xf32>
    %135 = arith.addf %131, %134 : vector<16x1xf32>
    %136 = math.rsqrt %135 : vector<16x1xf32>
    %137 = vector.broadcast %136 : vector<16x1xf32> to vector<16x32xf32>
    %138 = arith.mulf %133, %137 : vector<16x32xf32>
    %139 = vector.broadcast %118 : vector<1x32xf32> to vector<16x32xf32>
    %140 = arith.mulf %138, %139 : vector<16x32xf32>
    %141 = vector.broadcast %120 : vector<1x32xf32> to vector<16x32xf32>
    %142 = arith.addf %140, %141 : vector<16x32xf32>
    %c1_115 = arith.constant 1 : index
    %c0_116 = arith.constant 0 : index
    %c0_117 = arith.constant 0 : index
    %c0_118 = arith.constant 0 : index
    %143 = vector.load %arg6[%c1_115, %c0_116, %c0_117, %c0_118] : memref<2x4x32x32xf32, #tpu.memory_space<vmem>>, vector<1x1x32x32xf32>
    %144 = vector.shape_cast %143 : vector<1x1x32x32xf32> to vector<32x32xf32>
    %c1_119 = arith.constant 1 : index
    %c0_120 = arith.constant 0 : index
    %c0_121 = arith.constant 0 : index
    %c0_122 = arith.constant 0 : index
    %145 = vector.load %arg7[%c1_119, %c0_120, %c0_121, %c0_122] : memref<2x4x1x32xf32, #tpu.memory_space<vmem>>, vector<1x1x1x32xf32>
    %146 = vector.shape_cast %145 : vector<1x1x1x32xf32> to vector<1x32xf32>
    %cst_123 = arith.constant dense<0.000000e+00> : vector<16x32xf32>
    %147 = tpu.matmul %142, %144, %cst_123 {dimension_numbers = #tpu.dot_dimension_numbers<[1], [0], [0], [1], [0, 0, 1, 1], [], []>} : vector<16x32xf32>, vector<32x32xf32>, vector<16x32xf32> -> vector<16x32xf32>
    %148 = vector.broadcast %146 : vector<1x32xf32> to vector<16x32xf32>
    %149 = arith.addf %147, %148 : vector<16x32xf32>
    %c1_124 = arith.constant 1 : index
    %c1_125 = arith.constant 1 : index
    %c0_126 = arith.constant 0 : index
    %c0_127 = arith.constant 0 : index
    %150 = vector.load %arg6[%c1_124, %c1_125, %c0_126, %c0_127] : memref<2x4x32x32xf32, #tpu.memory_space<vmem>>, vector<1x1x32x32xf32>
    %151 = vector.shape_cast %150 : vector<1x1x32x32xf32> to vector<32x32xf32>
    %c1_128 = arith.constant 1 : index
    %c1_129 = arith.constant 1 : index
    %c0_130 = arith.constant 0 : index
    %c0_131 = arith.constant 0 : index
    %152 = vector.load %arg7[%c1_128, %c1_129, %c0_130, %c0_131] : memref<2x4x1x32xf32, #tpu.memory_space<vmem>>, vector<1x1x1x32xf32>
    %153 = vector.shape_cast %152 : vector<1x1x1x32xf32> to vector<1x32xf32>
    %cst_132 = arith.constant dense<0.000000e+00> : vector<16x32xf32>
    %154 = tpu.matmul %142, %151, %cst_132 {dimension_numbers = #tpu.dot_dimension_numbers<[1], [0], [0], [1], [0, 0, 1, 1], [], []>} : vector<16x32xf32>, vector<32x32xf32>, vector<16x32xf32> -> vector<16x32xf32>
    %155 = vector.broadcast %153 : vector<1x32xf32> to vector<16x32xf32>
    %156 = arith.addf %154, %155 : vector<16x32xf32>
    %c1_133 = arith.constant 1 : index
    %c2_134 = arith.constant 2 : index
    %c0_135 = arith.constant 0 : index
    %c0_136 = arith.constant 0 : index
    %157 = vector.load %arg6[%c1_133, %c2_134, %c0_135, %c0_136] : memref<2x4x32x32xf32, #tpu.memory_space<vmem>>, vector<1x1x32x32xf32>
    %158 = vector.shape_cast %157 : vector<1x1x32x32xf32> to vector<32x32xf32>
    %c1_137 = arith.constant 1 : index
    %c2_138 = arith.constant 2 : index
    %c0_139 = arith.constant 0 : index
    %c0_140 = arith.constant 0 : index
    %159 = vector.load %arg7[%c1_137, %c2_138, %c0_139, %c0_140] : memref<2x4x1x32xf32, #tpu.memory_space<vmem>>, vector<1x1x1x32xf32>
    %160 = vector.shape_cast %159 : vector<1x1x1x32xf32> to vector<1x32xf32>
    %cst_141 = arith.constant dense<0.000000e+00> : vector<16x32xf32>
    %161 = tpu.matmul %142, %158, %cst_141 {dimension_numbers = #tpu.dot_dimension_numbers<[1], [0], [0], [1], [0, 0, 1, 1], [], []>} : vector<16x32xf32>, vector<32x32xf32>, vector<16x32xf32> -> vector<16x32xf32>
    %162 = vector.broadcast %160 : vector<1x32xf32> to vector<16x32xf32>
    %163 = arith.addf %161, %162 : vector<16x32xf32>
    %164 = tpu.concatenate %156, %156, %156, %156 in 0 : vector<16x32xf32>, vector<16x32xf32>, vector<16x32xf32>, vector<16x32xf32> -> vector<64x32xf32>
    %165 = arith.mulf %164, %27 : vector<64x32xf32>
    %166 = tpu.concatenate %163, %163, %163, %163 in 0 : vector<16x32xf32>, vector<16x32xf32>, vector<16x32xf32>, vector<16x32xf32> -> vector<64x32xf32>
    %167 = arith.mulf %166, %27 : vector<64x32xf32>
    %cst_142 = arith.constant dense<0.000000e+00> : vector<16x64xf32>
    %168 = tpu.matmul %149, %165, %cst_142 {dimension_numbers = #tpu.dot_dimension_numbers<[1], [1], [0], [0], [0, 0, 1, 0], [], []>} : vector<16x32xf32>, vector<64x32xf32>, vector<16x64xf32> -> vector<16x64xf32>
    %cst_143 = arith.constant 0.353553385 : f32
    %169 = vector.broadcast %cst_143 : f32 to vector<16x64xf32>
    %170 = arith.mulf %168, %169 : vector<16x64xf32>
    %cst_144 = arith.constant dense<0xFF800000> : vector<16xf32>
    %171 = vector.multi_reduction <maximumf>, %170, %cst_144 [1] : vector<16x64xf32> to vector<16xf32>
    %172 = vector.shape_cast %171 : vector<16xf32> to vector<16x1xf32>
    %173 = vector.broadcast %172 : vector<16x1xf32> to vector<16x64xf32>
    %174 = arith.subf %170, %173 : vector<16x64xf32>
    %175 = math.exp %174 : vector<16x64xf32>
    %cst_145 = arith.constant dense<0.000000e+00> : vector<16x64xf32>
    %176 = tpu.matmul %175, %28, %cst_145 {dimension_numbers = #tpu.dot_dimension_numbers<[1], [0], [0], [1], [0, 0, 1, 1], [], []>} : vector<16x64xf32>, vector<64x64xf32>, vector<16x64xf32> -> vector<16x64xf32>
    %177 = tpu.reciprocal %176 {approx = true} : vector<16x64xf32> -> vector<16x64xf32>
    %178 = arith.mulf %175, %177 : vector<16x64xf32>
    %cst_146 = arith.constant dense<0.000000e+00> : vector<16x32xf32>
    %179 = tpu.matmul %178, %167, %cst_146 {dimension_numbers = #tpu.dot_dimension_numbers<[1], [0], [0], [1], [0, 0, 1, 1], [], []>} : vector<16x64xf32>, vector<64x32xf32>, vector<16x32xf32> -> vector<16x32xf32>
    %c1_147 = arith.constant 1 : index
    %c3_148 = arith.constant 3 : index
    %c0_149 = arith.constant 0 : index
    %c0_150 = arith.constant 0 : index
    %180 = vector.load %arg6[%c1_147, %c3_148, %c0_149, %c0_150] : memref<2x4x32x32xf32, #tpu.memory_space<vmem>>, vector<1x1x32x32xf32>
    %181 = vector.shape_cast %180 : vector<1x1x32x32xf32> to vector<32x32xf32>
    %c1_151 = arith.constant 1 : index
    %c3_152 = arith.constant 3 : index
    %c0_153 = arith.constant 0 : index
    %c0_154 = arith.constant 0 : index
    %182 = vector.load %arg7[%c1_151, %c3_152, %c0_153, %c0_154] : memref<2x4x1x32xf32, #tpu.memory_space<vmem>>, vector<1x1x1x32xf32>
    %183 = vector.shape_cast %182 : vector<1x1x1x32xf32> to vector<1x32xf32>
    %cst_155 = arith.constant dense<0.000000e+00> : vector<16x32xf32>
    %184 = tpu.matmul %179, %181, %cst_155 {dimension_numbers = #tpu.dot_dimension_numbers<[1], [0], [0], [1], [0, 0, 1, 1], [], []>} : vector<16x32xf32>, vector<32x32xf32>, vector<16x32xf32> -> vector<16x32xf32>
    %185 = vector.broadcast %183 : vector<1x32xf32> to vector<16x32xf32>
    %186 = arith.addf %184, %185 : vector<16x32xf32>
    %187 = arith.addf %142, %186 : vector<16x32xf32>
    %c1_156 = arith.constant 1 : index
    %c0_157 = arith.constant 0 : index
    %c0_158 = arith.constant 0 : index
    %c0_159 = arith.constant 0 : index
    %188 = vector.load %arg12[%c1_156, %c0_157, %c0_158, %c0_159] : memref<2x4x1x32xf32, #tpu.memory_space<vmem>>, vector<1x1x1x32xf32>
    %189 = vector.shape_cast %188 : vector<1x1x1x32xf32> to vector<1x32xf32>
    %c1_160 = arith.constant 1 : index
    %c1_161 = arith.constant 1 : index
    %c0_162 = arith.constant 0 : index
    %c0_163 = arith.constant 0 : index
    %190 = vector.load %arg12[%c1_160, %c1_161, %c0_162, %c0_163] : memref<2x4x1x32xf32, #tpu.memory_space<vmem>>, vector<1x1x1x32xf32>
    %191 = vector.shape_cast %190 : vector<1x1x1x32xf32> to vector<1x32xf32>
    %cst_164 = arith.constant dense<0.000000e+00> : vector<16xf32>
    %192 = vector.multi_reduction <add>, %187, %cst_164 [1] : vector<16x32xf32> to vector<16xf32>
    %193 = vector.shape_cast %192 : vector<16xf32> to vector<16x1xf32>
    %cst_165 = arith.constant 3.200000e+01 : f32
    %194 = vector.broadcast %cst_165 : f32 to vector<16x1xf32>
    %195 = arith.divf %193, %194 : vector<16x1xf32>
    %196 = vector.broadcast %195 : vector<16x1xf32> to vector<16x32xf32>
    %197 = arith.subf %187, %196 : vector<16x32xf32>
    %198 = arith.mulf %197, %197 : vector<16x32xf32>
    %cst_166 = arith.constant dense<0.000000e+00> : vector<16xf32>
    %199 = vector.multi_reduction <add>, %198, %cst_166 [1] : vector<16x32xf32> to vector<16xf32>
    %200 = vector.shape_cast %199 : vector<16xf32> to vector<16x1xf32>
    %cst_167 = arith.constant 3.200000e+01 : f32
    %201 = vector.broadcast %cst_167 : f32 to vector<16x1xf32>
    %202 = arith.divf %200, %201 : vector<16x1xf32>
    %203 = vector.broadcast %195 : vector<16x1xf32> to vector<16x32xf32>
    %204 = arith.subf %187, %203 : vector<16x32xf32>
    %cst_168 = arith.constant 9.99999974E-6 : f32
    %205 = vector.broadcast %cst_168 : f32 to vector<16x1xf32>
    %206 = arith.addf %202, %205 : vector<16x1xf32>
    %207 = math.rsqrt %206 : vector<16x1xf32>
    %208 = vector.broadcast %207 : vector<16x1xf32> to vector<16x32xf32>
    %209 = arith.mulf %204, %208 : vector<16x32xf32>
    %210 = vector.broadcast %189 : vector<1x32xf32> to vector<16x32xf32>
    %211 = arith.mulf %209, %210 : vector<16x32xf32>
    %212 = vector.broadcast %191 : vector<1x32xf32> to vector<16x32xf32>
    %213 = arith.addf %211, %212 : vector<16x32xf32>
    %c1_169 = arith.constant 1 : index
    %c0_170 = arith.constant 0 : index
    %c0_171 = arith.constant 0 : index
    %214 = vector.load %arg8[%c1_169, %c0_170, %c0_171] : memref<2x32x128xf32, #tpu.memory_space<vmem>>, vector<1x32x128xf32>
    %215 = vector.shape_cast %214 : vector<1x32x128xf32> to vector<32x128xf32>
    %c1_172 = arith.constant 1 : index
    %c0_173 = arith.constant 0 : index
    %c0_174 = arith.constant 0 : index
    %216 = vector.load %arg9[%c1_172, %c0_173, %c0_174] : memref<2x1x128xf32, #tpu.memory_space<vmem>>, vector<1x1x128xf32>
    %217 = vector.shape_cast %216 : vector<1x1x128xf32> to vector<1x128xf32>
    %cst_175 = arith.constant dense<0.000000e+00> : vector<16x128xf32>
    %218 = tpu.matmul %213, %215, %cst_175 {dimension_numbers = #tpu.dot_dimension_numbers<[1], [0], [0], [1], [0, 0, 1, 1], [], []>} : vector<16x32xf32>, vector<32x128xf32>, vector<16x128xf32> -> vector<16x128xf32>
    %219 = vector.broadcast %217 : vector<1x128xf32> to vector<16x128xf32>
    %220 = arith.addf %218, %219 : vector<16x128xf32>
    %cst_176 = arith.constant 0.000000e+00 : f32
    %221 = vector.broadcast %cst_176 : f32 to vector<16x128xf32>
    %222 = arith.maximumf %220, %221 : vector<16x128xf32>
    %c1_177 = arith.constant 1 : index
    %c0_178 = arith.constant 0 : index
    %c0_179 = arith.constant 0 : index
    %223 = vector.load %arg10[%c1_177, %c0_178, %c0_179] : memref<2x128x32xf32, #tpu.memory_space<vmem>>, vector<1x128x32xf32>
    %224 = vector.shape_cast %223 : vector<1x128x32xf32> to vector<128x32xf32>
    %c1_180 = arith.constant 1 : index
    %c0_181 = arith.constant 0 : index
    %c0_182 = arith.constant 0 : index
    %225 = vector.load %arg11[%c1_180, %c0_181, %c0_182] : memref<2x1x32xf32, #tpu.memory_space<vmem>>, vector<1x1x32xf32>
    %226 = vector.shape_cast %225 : vector<1x1x32xf32> to vector<1x32xf32>
    %cst_183 = arith.constant dense<0.000000e+00> : vector<16x32xf32>
    %227 = tpu.matmul %222, %224, %cst_183 {dimension_numbers = #tpu.dot_dimension_numbers<[1], [0], [0], [1], [0, 0, 1, 1], [], []>} : vector<16x128xf32>, vector<128x32xf32>, vector<16x32xf32> -> vector<16x32xf32>
    %228 = vector.broadcast %226 : vector<1x32xf32> to vector<16x32xf32>
    %229 = arith.addf %227, %228 : vector<16x32xf32>
    %230 = arith.addf %213, %229 : vector<16x32xf32>
    %c1_184 = arith.constant 1 : index
    %c2_185 = arith.constant 2 : index
    %c0_186 = arith.constant 0 : index
    %c0_187 = arith.constant 0 : index
    %231 = vector.load %arg12[%c1_184, %c2_185, %c0_186, %c0_187] : memref<2x4x1x32xf32, #tpu.memory_space<vmem>>, vector<1x1x1x32xf32>
    %232 = vector.shape_cast %231 : vector<1x1x1x32xf32> to vector<1x32xf32>
    %c1_188 = arith.constant 1 : index
    %c3_189 = arith.constant 3 : index
    %c0_190 = arith.constant 0 : index
    %c0_191 = arith.constant 0 : index
    %233 = vector.load %arg12[%c1_188, %c3_189, %c0_190, %c0_191] : memref<2x4x1x32xf32, #tpu.memory_space<vmem>>, vector<1x1x1x32xf32>
    %234 = vector.shape_cast %233 : vector<1x1x1x32xf32> to vector<1x32xf32>
    %cst_192 = arith.constant dense<0.000000e+00> : vector<16xf32>
    %235 = vector.multi_reduction <add>, %230, %cst_192 [1] : vector<16x32xf32> to vector<16xf32>
    %236 = vector.shape_cast %235 : vector<16xf32> to vector<16x1xf32>
    %cst_193 = arith.constant 3.200000e+01 : f32
    %237 = vector.broadcast %cst_193 : f32 to vector<16x1xf32>
    %238 = arith.divf %236, %237 : vector<16x1xf32>
    %239 = vector.broadcast %238 : vector<16x1xf32> to vector<16x32xf32>
    %240 = arith.subf %230, %239 : vector<16x32xf32>
    %241 = arith.mulf %240, %240 : vector<16x32xf32>
    %cst_194 = arith.constant dense<0.000000e+00> : vector<16xf32>
    %242 = vector.multi_reduction <add>, %241, %cst_194 [1] : vector<16x32xf32> to vector<16xf32>
    %243 = vector.shape_cast %242 : vector<16xf32> to vector<16x1xf32>
    %cst_195 = arith.constant 3.200000e+01 : f32
    %244 = vector.broadcast %cst_195 : f32 to vector<16x1xf32>
    %245 = arith.divf %243, %244 : vector<16x1xf32>
    %246 = vector.broadcast %238 : vector<16x1xf32> to vector<16x32xf32>
    %247 = arith.subf %230, %246 : vector<16x32xf32>
    %cst_196 = arith.constant 9.99999974E-6 : f32
    %248 = vector.broadcast %cst_196 : f32 to vector<16x1xf32>
    %249 = arith.addf %245, %248 : vector<16x1xf32>
    %250 = math.rsqrt %249 : vector<16x1xf32>
    %251 = vector.broadcast %250 : vector<16x1xf32> to vector<16x32xf32>
    %252 = arith.mulf %247, %251 : vector<16x32xf32>
    %253 = vector.broadcast %232 : vector<1x32xf32> to vector<16x32xf32>
    %254 = arith.mulf %252, %253 : vector<16x32xf32>
    %255 = vector.broadcast %234 : vector<1x32xf32> to vector<16x32xf32>
    %256 = arith.addf %254, %255 : vector<16x32xf32>
    %c1_197 = arith.constant 1 : index
    %c0_198 = arith.constant 0 : index
    %257 = vector.load %arg26[%c1_197, %c0_198] : memref<18x36xf32, #tpu.memory_space<vmem>>, vector<16x32xf32>
    tpu.vector_store %arg26[%c1_197, %c0_198], %256 {strides = array<i32>} : memref<18x36xf32, #tpu.memory_space<vmem>>, vector<16x32xf32>,
    %c0_199 = arith.constant 0 : index
    %c0_200 = arith.constant 0 : index
    %258 = vector.load %arg26[%c0_199, %c0_200] : memref<18x36xf32, #tpu.memory_space<vmem>>, vector<16x32xf32>
    %c0_201 = arith.constant 0 : index
    %c0_202 = arith.constant 0 : index
    %c0_203 = arith.constant 0 : index
    %259 = vector.load %arg15[%c0_201, %c0_202, %c0_203] : memref<3x32x32xf32, #tpu.memory_space<vmem>>, vector<1x32x32xf32>
    %260 = vector.shape_cast %259 : vector<1x32x32xf32> to vector<32x32xf32>
    %cst_204 = arith.constant dense<0.000000e+00> : vector<16x32xf32>
    %261 = tpu.matmul %258, %260, %cst_204 {dimension_numbers = #tpu.dot_dimension_numbers<[1], [0], [0], [1], [0, 0, 1, 1], [], []>} : vector<16x32xf32>, vector<32x32xf32>, vector<16x32xf32> -> vector<16x32xf32>
    %c1_205 = arith.constant 1 : index
    %c0_206 = arith.constant 0 : index
    %262 = vector.load %arg26[%c1_205, %c0_206] : memref<18x36xf32, #tpu.memory_space<vmem>>, vector<16x32xf32>
    %c1_207 = arith.constant 1 : index
    %c0_208 = arith.constant 0 : index
    %c0_209 = arith.constant 0 : index
    %263 = vector.load %arg15[%c1_207, %c0_208, %c0_209] : memref<3x32x32xf32, #tpu.memory_space<vmem>>, vector<1x32x32xf32>
    %264 = vector.shape_cast %263 : vector<1x32x32xf32> to vector<32x32xf32>
    %cst_210 = arith.constant dense<0.000000e+00> : vector<16x32xf32>
    %265 = tpu.matmul %262, %264, %cst_210 {dimension_numbers = #tpu.dot_dimension_numbers<[1], [0], [0], [1], [0, 0, 1, 1], [], []>} : vector<16x32xf32>, vector<32x32xf32>, vector<16x32xf32> -> vector<16x32xf32>
    %266 = arith.addf %261, %265 : vector<16x32xf32>
    %c2_211 = arith.constant 2 : index
    %c0_212 = arith.constant 0 : index
    %267 = vector.load %arg26[%c2_211, %c0_212] : memref<18x36xf32, #tpu.memory_space<vmem>>, vector<16x32xf32>
    %c2_213 = arith.constant 2 : index
    %c0_214 = arith.constant 0 : index
    %c0_215 = arith.constant 0 : index
    %268 = vector.load %arg15[%c2_213, %c0_214, %c0_215] : memref<3x32x32xf32, #tpu.memory_space<vmem>>, vector<1x32x32xf32>
    %269 = vector.shape_cast %268 : vector<1x32x32xf32> to vector<32x32xf32>
    %cst_216 = arith.constant dense<0.000000e+00> : vector<16x32xf32>
    %270 = tpu.matmul %267, %269, %cst_216 {dimension_numbers = #tpu.dot_dimension_numbers<[1], [0], [0], [1], [0, 0, 1, 1], [], []>} : vector<16x32xf32>, vector<32x32xf32>, vector<16x32xf32> -> vector<16x32xf32>
    %271 = arith.addf %266, %270 : vector<16x32xf32>
    %c0_217 = arith.constant 0 : index
    %c0_218 = arith.constant 0 : index
    %272 = vector.load %arg16[%c0_217, %c0_218] : memref<1x32xf32, #tpu.memory_space<vmem>>, vector<1x32xf32>
    %273 = vector.broadcast %272 : vector<1x32xf32> to vector<16x32xf32>
    %274 = arith.addf %271, %273 : vector<16x32xf32>
    %cst_219 = arith.constant 0.000000e+00 : f32
    %275 = vector.broadcast %cst_219 : f32 to vector<16x32xf32>
    %276 = arith.maximumf %274, %275 : vector<16x32xf32>
    %c0_220 = arith.constant 0 : index
    %c0_221 = arith.constant 0 : index
    %277 = vector.load %arg17[%c0_220, %c0_221] : memref<32x32xf32, #tpu.memory_space<vmem>>, vector<32x32xf32>
    %c0_222 = arith.constant 0 : index
    %c0_223 = arith.constant 0 : index
    %278 = vector.load %arg18[%c0_222, %c0_223] : memref<1x32xf32, #tpu.memory_space<vmem>>, vector<1x32xf32>
    %cst_224 = arith.constant dense<0.000000e+00> : vector<16x32xf32>
    %279 = tpu.matmul %276, %277, %cst_224 {dimension_numbers = #tpu.dot_dimension_numbers<[1], [0], [0], [1], [0, 0, 1, 1], [], []>} : vector<16x32xf32>, vector<32x32xf32>, vector<16x32xf32> -> vector<16x32xf32>
    %280 = vector.broadcast %278 : vector<1x32xf32> to vector<16x32xf32>
    %281 = arith.addf %279, %280 : vector<16x32xf32>
    %c0_225 = arith.constant 0 : index
    %c0_226 = arith.constant 0 : index
    %282 = vector.load %arg19[%c0_225, %c0_226] : memref<64x32xf32, #tpu.memory_space<vmem>>, vector<64x32xf32>
    %283 = arith.mulf %281, %281 : vector<16x32xf32>
    %cst_227 = arith.constant dense<0.000000e+00> : vector<16xf32>
    %284 = vector.multi_reduction <add>, %283, %cst_227 [1] : vector<16x32xf32> to vector<16xf32>
    %285 = vector.shape_cast %284 : vector<16xf32> to vector<16x1xf32>
    %cst_228 = arith.constant dense<0.000000e+00> : vector<16x64xf32>
    %286 = tpu.matmul %281, %282, %cst_228 {dimension_numbers = #tpu.dot_dimension_numbers<[1], [1], [0], [0], [0, 0, 1, 0], [], []>} : vector<16x32xf32>, vector<64x32xf32>, vector<16x64xf32> -> vector<16x64xf32>
    %cst_229 = arith.constant 2.000000e+00 : f32
    %287 = vector.broadcast %cst_229 : f32 to vector<16x64xf32>
    %288 = arith.mulf %287, %286 : vector<16x64xf32>
    %289 = vector.broadcast %285 : vector<16x1xf32> to vector<16x64xf32>
    %290 = arith.subf %289, %288 : vector<16x64xf32>
    %c0_230 = arith.constant 0 : index
    %c0_231 = arith.constant 0 : index
    %291 = vector.load %arg20[%c0_230, %c0_231] : memref<1x64xf32, #tpu.memory_space<vmem>>, vector<1x64xf32>
    %292 = vector.broadcast %291 : vector<1x64xf32> to vector<16x64xf32>
    %293 = arith.addf %290, %292 : vector<16x64xf32>
    %cst_232 = arith.constant dense<0x7F800000> : vector<16xf32>
    %294 = vector.multi_reduction <minimumf>, %293, %cst_232 [1] : vector<16x64xf32> to vector<16xf32>
    %295 = vector.shape_cast %294 : vector<16xf32> to vector<16x1xf32>
    %296 = tpu.iota {dimensions = array<i32: 1>} : vector<16x64xi32>
    %297 = vector.broadcast %295 : vector<16x1xf32> to vector<16x64xf32>
    %298 = arith.cmpf ole, %293, %297 : vector<16x64xf32>
    %c64_i32 = arith.constant 64 : i32
    %299 = vector.broadcast %c64_i32 : i32 to vector<16x64xi32>
    %300 = arith.select %298, %296, %299 : vector<16x64xi1>, vector<16x64xi32>
    %cst_233 = arith.constant dense<2147483647> : vector<16xi32>
    %301 = vector.multi_reduction <minsi>, %300, %cst_233 [1] : vector<16x64xi32> to vector<16xi32>
    %302 = vector.shape_cast %301 : vector<16xi32> to vector<16x1xi32>
    %303 = vector.broadcast %302 : vector<16x1xi32> to vector<16x64xi32>
    %304 = arith.cmpi eq, %296, %303 : vector<16x64xi32>
    %305 = arith.extui %304 : vector<16x64xi1> to vector<16x64xi32>
    %306 = arith.sitofp %305 : vector<16x64xi32> to vector<16x64xf32>
    %cst_234 = arith.constant dense<0.000000e+00> : vector<16x32xf32>
    %307 = tpu.matmul %306, %282, %cst_234 {dimension_numbers = #tpu.dot_dimension_numbers<[1], [0], [0], [1], [0, 0, 1, 1], [], []>} : vector<16x64xf32>, vector<64x32xf32>, vector<16x32xf32> -> vector<16x32xf32>
    %308 = arith.subf %307, %281 : vector<16x32xf32>
    %309 = arith.mulf %308, %308 : vector<16x32xf32>
    %cst_235 = arith.constant dense<0.000000e+00> : vector<16xf32>
    %310 = vector.multi_reduction <add>, %309, %cst_235 [1] : vector<16x32xf32> to vector<16xf32>
    %311 = vector.shape_cast %310 : vector<16xf32> to vector<16x1xf32>
    %cst_236 = arith.constant dense<0.000000e+00> : vector<1xf32>
    %312 = vector.multi_reduction <add>, %311, %cst_236 [0] : vector<16x1xf32> to vector<1xf32>
    %313 = vector.shape_cast %312 : vector<1xf32> to vector<1x1xf32>
    %c0_237 = arith.constant 0 : index
    %c0_238 = arith.constant 0 : index
    %314 = vector.load %arg21[%c0_237, %c0_238] : memref<32x32xf32, #tpu.memory_space<vmem>>, vector<32x32xf32>
    %c0_239 = arith.constant 0 : index
    %c0_240 = arith.constant 0 : index
    %315 = vector.load %arg22[%c0_239, %c0_240] : memref<1x32xf32, #tpu.memory_space<vmem>>, vector<1x32xf32>
    %cst_241 = arith.constant dense<0.000000e+00> : vector<16x32xf32>
    %316 = tpu.matmul %307, %314, %cst_241 {dimension_numbers = #tpu.dot_dimension_numbers<[1], [0], [0], [1], [0, 0, 1, 1], [], []>} : vector<16x32xf32>, vector<32x32xf32>, vector<16x32xf32> -> vector<16x32xf32>
    %317 = vector.broadcast %315 : vector<1x32xf32> to vector<16x32xf32>
    %318 = arith.addf %316, %317 : vector<16x32xf32>
    %c1_242 = arith.constant 1 : index
    %c0_243 = arith.constant 0 : index
    %319 = vector.load %arg26[%c1_242, %c0_243] : memref<18x36xf32, #tpu.memory_space<vmem>>, vector<16x32xf32>
    tpu.vector_store %arg26[%c1_242, %c0_243], %318 {strides = array<i32>} : memref<18x36xf32, #tpu.memory_space<vmem>>, vector<16x32xf32>,
    %c0_244 = arith.constant 0 : index
    %c0_245 = arith.constant 0 : index
    %320 = vector.load %arg26[%c0_244, %c0_245] : memref<18x36xf32, #tpu.memory_space<vmem>>, vector<16x32xf32>
    %c0_246 = arith.constant 0 : index
    %c0_247 = arith.constant 0 : index
    %c0_248 = arith.constant 0 : index
    %321 = vector.load %arg23[%c0_246, %c0_247, %c0_248] : memref<3x32x32xf32, #tpu.memory_space<vmem>>, vector<1x32x32xf32>
    %322 = vector.shape_cast %321 : vector<1x32x32xf32> to vector<32x32xf32>
    %cst_249 = arith.constant dense<0.000000e+00> : vector<16x32xf32>
    %323 = tpu.matmul %320, %322, %cst_249 {dimension_numbers = #tpu.dot_dimension_numbers<[1], [0], [0], [1], [0, 0, 1, 1], [], []>} : vector<16x32xf32>, vector<32x32xf32>, vector<16x32xf32> -> vector<16x32xf32>
    %c1_250 = arith.constant 1 : index
    %c0_251 = arith.constant 0 : index
    %324 = vector.load %arg26[%c1_250, %c0_251] : memref<18x36xf32, #tpu.memory_space<vmem>>, vector<16x32xf32>
    %c1_252 = arith.constant 1 : index
    %c0_253 = arith.constant 0 : index
    %c0_254 = arith.constant 0 : index
    %325 = vector.load %arg23[%c1_252, %c0_253, %c0_254] : memref<3x32x32xf32, #tpu.memory_space<vmem>>, vector<1x32x32xf32>
    %326 = vector.shape_cast %325 : vector<1x32x32xf32> to vector<32x32xf32>
    %cst_255 = arith.constant dense<0.000000e+00> : vector<16x32xf32>
    %327 = tpu.matmul %324, %326, %cst_255 {dimension_numbers = #tpu.dot_dimension_numbers<[1], [0], [0], [1], [0, 0, 1, 1], [], []>} : vector<16x32xf32>, vector<32x32xf32>, vector<16x32xf32> -> vector<16x32xf32>
    %328 = arith.addf %323, %327 : vector<16x32xf32>
    %c2_256 = arith.constant 2 : index
    %c0_257 = arith.constant 0 : index
    %329 = vector.load %arg26[%c2_256, %c0_257] : memref<18x36xf32, #tpu.memory_space<vmem>>, vector<16x32xf32>
    %c2_258 = arith.constant 2 : index
    %c0_259 = arith.constant 0 : index
    %c0_260 = arith.constant 0 : index
    %330 = vector.load %arg23[%c2_258, %c0_259, %c0_260] : memref<3x32x32xf32, #tpu.memory_space<vmem>>, vector<1x32x32xf32>
    %331 = vector.shape_cast %330 : vector<1x32x32xf32> to vector<32x32xf32>
    %cst_261 = arith.constant dense<0.000000e+00> : vector<16x32xf32>
    %332 = tpu.matmul %329, %331, %cst_261 {dimension_numbers = #tpu.dot_dimension_numbers<[1], [0], [0], [1], [0, 0, 1, 1], [], []>} : vector<16x32xf32>, vector<32x32xf32>, vector<16x32xf32> -> vector<16x32xf32>
    %333 = arith.addf %328, %332 : vector<16x32xf32>
    %c0_262 = arith.constant 0 : index
    %c0_263 = arith.constant 0 : index
    %334 = vector.load %arg24[%c0_262, %c0_263] : memref<1x32xf32, #tpu.memory_space<vmem>>, vector<1x32xf32>
    %335 = vector.broadcast %334 : vector<1x32xf32> to vector<16x32xf32>
    %336 = arith.addf %333, %335 : vector<16x32xf32>
    %c0_264 = arith.constant 0 : index
    %c0_265 = arith.constant 0 : index
    %c0_266 = arith.constant 0 : index
    %337 = vector.load %arg25[%c0_264, %c0_265, %c0_266] : memref<1x24x32xf32, #tpu.memory_space<vmem>>, vector<1x16x32xf32>
    %338 = vector.shape_cast %337 : vector<1x16x32xf32> to vector<16x32xf32>
    %339 = vector.shape_cast %336 : vector<16x32xf32> to vector<1x16x32xf32>
    tpu.vector_store %arg25[%c0_264, %c0_265, %c0_266], %339 {strides = array<i32>} : memref<1x24x32xf32, #tpu.memory_space<vmem>>, vector<1x16x32xf32>,
    %340 = vector.shape_cast %313 : vector<1x1xf32> to vector<1x1xf32>
    %341 = vector.broadcast %340 : vector<1x1xf32> to vector<8x32xf32>
    %c0_267 = arith.constant 0 : index
    %c16 = arith.constant 16 : index
    %c0_268 = arith.constant 0 : index
    %342 = vector.load %arg25[%c0_267, %c16, %c0_268] : memref<1x24x32xf32, #tpu.memory_space<vmem>>, vector<1x8x32xf32>
    %343 = vector.shape_cast %342 : vector<1x8x32xf32> to vector<8x32xf32>
    %344 = vector.shape_cast %341 : vector<8x32xf32> to vector<1x8x32xf32>
    tpu.vector_store %arg25[%c0_267, %c16, %c0_268], %344 {strides = array<i32>} : memref<1x24x32xf32, #tpu.memory_space<vmem>>, vector<1x8x32xf32>,
    return
  }
  func.func @transform_0(%arg0: i32) -> (i32, i32, i32) {
    %c0_i32 = arith.constant 0 : i32
    %c0_i32_0 = arith.constant 0 : i32
    %c0_i32_1 = arith.constant 0 : i32
    return %arg0, %c0_i32, %c0_i32_0 : i32, i32, i32
  }
  func.func @transform_1(%arg0: i32) -> (i32, i32, i32) {
    %c0_i32 = arith.constant 0 : i32
    %c0_i32_0 = arith.constant 0 : i32
    %c0_i32_1 = arith.constant 0 : i32
    return %arg0, %c0_i32, %c0_i32_0 : i32, i32, i32
  }
  func.func @transform_2(%arg0: i32) -> (i32, i32) {
    %c0_i32 = arith.constant 0 : i32
    %c0_i32_0 = arith.constant 0 : i32
    %c0_i32_1 = arith.constant 0 : i32
    return %c0_i32, %c0_i32_0 : i32, i32
  }
  func.func @transform_3(%arg0: i32) -> (i32, i32, i32) {
    %c0_i32 = arith.constant 0 : i32
    %c0_i32_0 = arith.constant 0 : i32
    %c0_i32_1 = arith.constant 0 : i32
    %c0_i32_2 = arith.constant 0 : i32
    return %c0_i32, %c0_i32_0, %c0_i32_1 : i32, i32, i32
  }
  func.func @transform_4(%arg0: i32) -> (i32, i32) {
    %c0_i32 = arith.constant 0 : i32
    %c0_i32_0 = arith.constant 0 : i32
    %c0_i32_1 = arith.constant 0 : i32
    return %c0_i32, %c0_i32_0 : i32, i32
  }
  func.func @transform_5(%arg0: i32) -> (i32, i32, i32, i32) {
    %c0_i32 = arith.constant 0 : i32
    %c0_i32_0 = arith.constant 0 : i32
    %c0_i32_1 = arith.constant 0 : i32
    %c0_i32_2 = arith.constant 0 : i32
    %c0_i32_3 = arith.constant 0 : i32
    return %c0_i32, %c0_i32_0, %c0_i32_1, %c0_i32_2 : i32, i32, i32, i32
  }
  func.func @transform_6(%arg0: i32) -> (i32, i32, i32, i32) {
    %c0_i32 = arith.constant 0 : i32
    %c0_i32_0 = arith.constant 0 : i32
    %c0_i32_1 = arith.constant 0 : i32
    %c0_i32_2 = arith.constant 0 : i32
    %c0_i32_3 = arith.constant 0 : i32
    return %c0_i32, %c0_i32_0, %c0_i32_1, %c0_i32_2 : i32, i32, i32, i32
  }
  func.func @transform_7(%arg0: i32) -> (i32, i32, i32) {
    %c0_i32 = arith.constant 0 : i32
    %c0_i32_0 = arith.constant 0 : i32
    %c0_i32_1 = arith.constant 0 : i32
    %c0_i32_2 = arith.constant 0 : i32
    return %c0_i32, %c0_i32_0, %c0_i32_1 : i32, i32, i32
  }
  func.func @transform_8(%arg0: i32) -> (i32, i32, i32) {
    %c0_i32 = arith.constant 0 : i32
    %c0_i32_0 = arith.constant 0 : i32
    %c0_i32_1 = arith.constant 0 : i32
    %c0_i32_2 = arith.constant 0 : i32
    return %c0_i32, %c0_i32_0, %c0_i32_1 : i32, i32, i32
  }
  func.func @transform_9(%arg0: i32) -> (i32, i32, i32) {
    %c0_i32 = arith.constant 0 : i32
    %c0_i32_0 = arith.constant 0 : i32
    %c0_i32_1 = arith.constant 0 : i32
    %c0_i32_2 = arith.constant 0 : i32
    return %c0_i32, %c0_i32_0, %c0_i32_1 : i32, i32, i32
  }
  func.func @transform_10(%arg0: i32) -> (i32, i32, i32) {
    %c0_i32 = arith.constant 0 : i32
    %c0_i32_0 = arith.constant 0 : i32
    %c0_i32_1 = arith.constant 0 : i32
    %c0_i32_2 = arith.constant 0 : i32
    return %c0_i32, %c0_i32_0, %c0_i32_1 : i32, i32, i32
  }
  func.func @transform_11(%arg0: i32) -> (i32, i32, i32, i32) {
    %c0_i32 = arith.constant 0 : i32
    %c0_i32_0 = arith.constant 0 : i32
    %c0_i32_1 = arith.constant 0 : i32
    %c0_i32_2 = arith.constant 0 : i32
    %c0_i32_3 = arith.constant 0 : i32
    return %c0_i32, %c0_i32_0, %c0_i32_1, %c0_i32_2 : i32, i32, i32, i32
  }
  func.func @transform_12(%arg0: i32) -> (i32, i32) {
    %c0_i32 = arith.constant 0 : i32
    %c0_i32_0 = arith.constant 0 : i32
    %c0_i32_1 = arith.constant 0 : i32
    return %c0_i32, %c0_i32_0 : i32, i32
  }
  func.func @transform_13(%arg0: i32) -> (i32, i32) {
    %c0_i32 = arith.constant 0 : i32
    %c0_i32_0 = arith.constant 0 : i32
    %c0_i32_1 = arith.constant 0 : i32
    return %c0_i32, %c0_i32_0 : i32, i32
  }
  func.func @transform_14(%arg0: i32) -> (i32, i32, i32) {
    %c0_i32 = arith.constant 0 : i32
    %c0_i32_0 = arith.constant 0 : i32
    %c0_i32_1 = arith.constant 0 : i32
    %c0_i32_2 = arith.constant 0 : i32
    return %c0_i32, %c0_i32_0, %c0_i32_1 : i32, i32, i32
  }
  func.func @transform_15(%arg0: i32) -> (i32, i32) {
    %c0_i32 = arith.constant 0 : i32
    %c0_i32_0 = arith.constant 0 : i32
    %c0_i32_1 = arith.constant 0 : i32
    return %c0_i32, %c0_i32_0 : i32, i32
  }
  func.func @transform_16(%arg0: i32) -> (i32, i32) {
    %c0_i32 = arith.constant 0 : i32
    %c0_i32_0 = arith.constant 0 : i32
    %c0_i32_1 = arith.constant 0 : i32
    return %c0_i32, %c0_i32_0 : i32, i32
  }
  func.func @transform_17(%arg0: i32) -> (i32, i32) {
    %c0_i32 = arith.constant 0 : i32
    %c0_i32_0 = arith.constant 0 : i32
    %c0_i32_1 = arith.constant 0 : i32
    return %c0_i32, %c0_i32_0 : i32, i32
  }
  func.func @transform_18(%arg0: i32) -> (i32, i32) {
    %c0_i32 = arith.constant 0 : i32
    %c0_i32_0 = arith.constant 0 : i32
    %c0_i32_1 = arith.constant 0 : i32
    return %c0_i32, %c0_i32_0 : i32, i32
  }
  func.func @transform_19(%arg0: i32) -> (i32, i32) {
    %c0_i32 = arith.constant 0 : i32
    %c0_i32_0 = arith.constant 0 : i32
    %c0_i32_1 = arith.constant 0 : i32
    return %c0_i32, %c0_i32_0 : i32, i32
  }
  func.func @transform_20(%arg0: i32) -> (i32, i32) {
    %c0_i32 = arith.constant 0 : i32
    %c0_i32_0 = arith.constant 0 : i32
    %c0_i32_1 = arith.constant 0 : i32
    return %c0_i32, %c0_i32_0 : i32, i32
  }
  func.func @transform_21(%arg0: i32) -> (i32, i32) {
    %c0_i32 = arith.constant 0 : i32
    %c0_i32_0 = arith.constant 0 : i32
    %c0_i32_1 = arith.constant 0 : i32
    return %c0_i32, %c0_i32_0 : i32, i32
  }
  func.func @transform_22(%arg0: i32) -> (i32, i32, i32) {
    %c0_i32 = arith.constant 0 : i32
    %c0_i32_0 = arith.constant 0 : i32
    %c0_i32_1 = arith.constant 0 : i32
    %c0_i32_2 = arith.constant 0 : i32
    return %c0_i32, %c0_i32_0, %c0_i32_1 : i32, i32, i32
  }
  func.func @transform_23(%arg0: i32) -> (i32, i32) {
    %c0_i32 = arith.constant 0 : i32
    %c0_i32_0 = arith.constant 0 : i32
    %c0_i32_1 = arith.constant 0 : i32
    return %c0_i32, %c0_i32_0 : i32, i32
  }
  func.func @transform_24(%arg0: i32) -> (i32, i32, i32) {
    %c0_i32 = arith.constant 0 : i32
    %c0_i32_0 = arith.constant 0 : i32
    %c0_i32_1 = arith.constant 0 : i32
    return %arg0, %c0_i32, %c0_i32_0 : i32, i32, i32
  }
}

</mosaic_0001>

<llo_original>
// kernel: forward.1
$region0: #{forward.1}
  #allocation0 [shape = 'u32[]', space=smem, size = 0x4, offset = 0x4, fixed_abs, tag = 'smem constant byte address 0x4 - core index']
  #allocation1 [shape = 'u32[72,128]{1,0:T(1,128)}', space=vmem, size = 0x9000, scoped, tag = 'internal scratch']
  #allocation2 [shape = 'f32[18,36]{1,0:T(8,128)}', space=vmem, size = 0x3000, scoped, tag = 'scratch operand']
  %s0 = inlined_call_operand.vmem [shape: f32[2,16,4], index: 0, kind: input, shape index: {}]
  %s1 = inlined_call_operand.vmem [shape: f32[2,16,32], index: 1, kind: input, shape index: {}]
  %s2 = inlined_call_operand.hbm [shape: f32[4,4], index: 2, kind: input, shape index: {}]
  %s3 = inlined_call_operand.vmem [shape: f32[3,36,32], index: 3, kind: input, shape index: {}]
  %s4 = inlined_call_operand.hbm [shape: f32[1,32], index: 4, kind: input, shape index: {}]
  %s5 = inlined_call_operand.hbm [shape: f32[2,4,32,32], index: 5, kind: input, shape index: {}]
  %s6 = inlined_call_operand.vmem [shape: f32[2,4,1,32], index: 6, kind: input, shape index: {}]
  %s7 = inlined_call_operand.hbm [shape: f32[2,32,128], index: 7, kind: input, shape index: {}]
  %s8 = inlined_call_operand.hbm [shape: f32[2,1,128], index: 8, kind: input, shape index: {}]
  %s9 = inlined_call_operand.hbm [shape: f32[2,128,32], index: 9, kind: input, shape index: {}]
  %s10 = inlined_call_operand.hbm [shape: f32[2,1,32], index: 10, kind: input, shape index: {}]
  %s11 = inlined_call_operand.hbm [shape: f32[2,4,1,32], index: 11, kind: input, shape index: {}]
  %s12 = inlined_call_operand.vmem [shape: f32[64,32], index: 12, kind: input, shape index: {}]
  %s13 = inlined_call_operand.vmem [shape: f32[64,64], index: 13, kind: input, shape index: {}]
  %s14 = inlined_call_operand.hbm [shape: f32[3,32,32], index: 14, kind: input, shape index: {}]
  %s15 = inlined_call_operand.hbm [shape: f32[1,32], index: 15, kind: input, shape index: {}]
  %s16 = inlined_call_operand.vmem [shape: f32[32,32], index: 16, kind: input, shape index: {}]
  %s17 = inlined_call_operand.hbm [shape: f32[1,32], index: 17, kind: input, shape index: {}]
  %s18 = inlined_call_operand.hbm [shape: f32[64,32], index: 18, kind: input, shape index: {}]
  %s19 = inlined_call_operand.vmem [shape: f32[1,64], index: 19, kind: input, shape index: {}]
  %s20 = inlined_call_operand.hbm [shape: f32[32,32], index: 20, kind: input, shape index: {}]
  %s21 = inlined_call_operand.hbm [shape: f32[1,32], index: 21, kind: input, shape index: {}]
  %s22 = inlined_call_operand.hbm [shape: f32[3,32,32], index: 22, kind: input, shape index: {}]
  %s23 = inlined_call_operand.hbm [shape: f32[1,32], index: 23, kind: input, shape index: {}]
  %s24 = inlined_call_operand.vmem [shape: f32[2,24,32], index: 24, kind: output, shape index: {}]
  %s25 = sld [smem:[#allocation0]]
  $region193: #{forward.1} parent=0
    _
  %s27 = ssub.s32 1, %s25
  %s28 = scalar_select 0, %s27, %s25
  $region1: #{forward.1} parent=0
    #allocation3 [shape = 'u8[2048]{0}', space=vmem, size = 0x800, scoped, tag = 'input window, operand 2, single buffered']
    #allocation4 [shape = 's32[2]{0}', space=sflag, size = 0x8, scoped, tag = 'scoped memory for forward.1']
    #allocation5 [shape = 'u8[512]{0}', space=vmem, size = 0x400, scoped, tag = 'input window, operand 4, single buffered']
    #allocation6 [shape = 's32[1]{0}', space=sflag, size = 0x4, scoped, tag = 'scoped memory for forward.1']
    #allocation7 [shape = 'u8[131072]{0}', space=vmem, size = 0x20000, scoped, tag = 'input window, operand 5, single buffered']
    #allocation8 [shape = 'u8[32768]{0}', space=vmem, size = 0x8000, scoped, tag = 'input window, operand 7, single buffered']
    #allocation9 [shape = 's32[1]{0}', space=sflag, size = 0x4, scoped, tag = 'scoped memory for forward.1']
    #allocation10 [shape = 'u8[1024]{0}', space=vmem, size = 0x400, scoped, tag = 'input window, operand 8, single buffered']
    #allocation11 [shape = 'u8[131072]{0}', space=vmem, size = 0x20000, scoped, tag = 'input window, operand 9, single buffered']
    #allocation12 [shape = 's32[1]{0}', space=sflag, size = 0x4, scoped, tag = 'scoped memory for forward.1']
    #allocation13 [shape = 'u8[1024]{0}', space=vmem, size = 0x400, scoped, tag = 'input window, operand 10, single buffered']
    #allocation14 [shape = 'u8[4096]{0}', space=vmem, size = 0x1000, scoped, tag = 'input window, operand 11, single buffered']
    #allocation15 [shape = 's32[1]{0}', space=sflag, size = 0x4, scoped, tag = 'scoped memory for forward.1']
    #allocation16 [shape = 'u8[49152]{0}', space=vmem, size = 0xc000, scoped, tag = 'input window, operand 14, single buffered']
    #allocation17 [shape = 'u8[512]{0}', space=vmem, size = 0x400, scoped, tag = 'input window, operand 15, single buffered']
    #allocation18 [shape = 's32[1]{0}', space=sflag, size = 0x4, scoped, tag = 'scoped memory for forward.1']
    #allocation19 [shape = 'u8[512]{0}', space=vmem, size = 0x400, scoped, tag = 'input window, operand 17, single buffered']
    #allocation20 [shape = 'u8[32768]{0}', space=vmem, size = 0x8000, scoped, tag = 'input window, operand 18, single buffered']
    #allocation21 [shape = 's32[1]{0}', space=sflag, size = 0x4, scoped, tag = 'scoped memory for forward.1']
    #allocation22 [shape = 'u8[16384]{0}', space=vmem, size = 0x4000, scoped, tag = 'input window, operand 20, single buffered']
    #allocation23 [shape = 'u8[512]{0}', space=vmem, size = 0x400, scoped, tag = 'input window, operand 21, single buffered']
    #allocation24 [shape = 's32[1]{0}', space=sflag, size = 0x4, scoped, tag = 'scoped memory for forward.1']
    #allocation25 [shape = 'u8[49152]{0}', space=vmem, size = 0xc000, scoped, tag = 'input window, operand 22, single buffered']
    #allocation26 [shape = 'u8[512]{0}', space=vmem, size = 0x400, scoped, tag = 'input window, operand 23, single buffered']
    #allocation27 [shape = 's32[1]{0}', space=sflag, size = 0x4, scoped, tag = 'scoped memory for forward.1']
    %29 = vsyncpa [#allocation4], 0
    %30 = vsyncpa [#allocation6], 0
    %31 = vsyncpa [#allocation9], 0
    %32 = vsyncpa [#allocation12], 0
    %33 = vsyncpa [#allocation15], 0
    %34 = vsyncpa [#allocation18], 0
    %35 = vsyncpa [#allocation21], 0
    %36 = vsyncpa [#allocation24], 0
    %37 = vsyncpa [#allocation27], 0
    loop: start=0, step=1, limit=4
    $region2: #{forward.1} parent=1 // loop_pre_header
      _
    $region3: #{forward.1} parent=1 // loop_header
      %s39 = sphi 0, %s43
      %p40 = scmp.ge.s32.totalorder %s39, 4
      %s49 = sphi 0, %s51
      %s52 = sphi 0, %s49
      %s53 = sphi 0, %s52
      %s69 = sphi 0, %s53
      %s75 = sphi 0, %s77
      %s78 = sphi 0, %s75
      %s79 = sphi 0, %s78
      %s95 = sphi 0, %s79
      %s99 = sphi 0, %s99
      %s101 = sphi 0, %s99
      %s102 = sphi 0, %s101
      %s116 = sphi 0, %s102
      %s120 = sphi 0, %s120
      %s122 = sphi 0, %s120
      %s123 = sphi 0, %s122
      %s137 = sphi 0, %s123
      %s141 = sphi 0, %s141
      %s143 = sphi 0, %s141
      %s144 = sphi 0, %s143
      %s158 = sphi 0, %s144
      %s162 = sphi 0, %s162
      %s164 = sphi 0, %s162
      %s165 = sphi 0, %s164
      %s179 = sphi 0, %s165
      %s183 = sphi 0, %s183
      %s185 = sphi 0, %s183
      %s186 = sphi 0, %s185
      %s200 = sphi 0, %s186
      %s204 = sphi 0, %s204
      %s206 = sphi 0, %s204
      %s207 = sphi 0, %s206
      %s221 = sphi 0, %s207
      %s225 = sphi 0, %s225
      %s227 = sphi 0, %s225
      %s228 = sphi 0, %s227
      %s242 = sphi 0, %s228
      %s246 = sphi 0, %s246
      %s248 = sphi 0, %s246
      %s249 = sphi 0, %s248
      %s263 = sphi 0, %s249
      %s267 = sphi 0, %s267
      %s269 = sphi 0, %s267
      %s270 = sphi 0, %s269
      %s284 = sphi 0, %s270
      %s288 = sphi 0, %s288
      %s290 = sphi 0, %s288
      %s291 = sphi 0, %s290
      %s305 = sphi 0, %s291
      %s309 = sphi 0, %s309
      %s311 = sphi 0, %s309
      %s312 = sphi 0, %s311
      %s326 = sphi 0, %s312
      %s330 = sphi 0, %s330
      %s332 = sphi 0, %s330
      %s333 = sphi 0, %s332
      %s347 = sphi 0, %s333
      %s351 = sphi 0, %s351
      %s353 = sphi 0, %s351
      %s354 = sphi 0, %s353
      %s368 = sphi 0, %s354
      %s372 = sphi 0, %s372
      %s374 = sphi 0, %s372
      %s375 = sphi 0, %s374
      %s389 = sphi 0, %s375
      %s393 = sphi 0, %s393
      %s395 = sphi 0, %s393
      %s396 = sphi 0, %s395
      %s410 = sphi 0, %s396
      %s414 = sphi 0, %s414
      %s416 = sphi 0, %s414
      %s417 = sphi 0, %s416
      %s431 = sphi 0, %s417
      %s435 = sphi 0, %s435
      %s437 = sphi 0, %s435
      %s438 = sphi 0, %s437
      %s452 = sphi 0, %s438
      %s456 = sphi 0, %s456
      %s458 = sphi 0, %s456
      %s459 = sphi 0, %s458
      %s473 = sphi 0, %s459
      %s477 = sphi 0, %s477
      %s479 = sphi 0, %s477
      %s480 = sphi 0, %s479
      %s494 = sphi 0, %s480
      %s498 = sphi 0, %s498
      %s500 = sphi 0, %s498
      %s501 = sphi 0, %s500
      %s515 = sphi 0, %s501
      %s519 = sphi 0, %s519
      %s521 = sphi 0, %s519
      %s522 = sphi 0, %s521
      %s536 = sphi 0, %s522
      %s540 = sphi 0, %s540
      %s542 = sphi 0, %s540
      %s543 = sphi 0, %s542
      %s557 = sphi 0, %s543
      %s563 = sphi 0, %s565
      %s566 = sphi 0, %s563
      %s567 = sphi 0, %s566
      %s583 = sphi 0, %s567
    $region4: #{forward.1} parent=1 // loop_header_branch
      %42 = sbr.rel (%p40) target = $region8
    $region5: #{forward.1} parent=1 // loop_body
      %s44 = ssub.s32 %s39, 1
      %s45 = ssub.s32 %s39, 2
      %s46 = sadd.s32 %s39, 1
      %s47 = ssub.s32 %s39, %s46
      %p48 = scmp.eq.s32.totalorder %s47, 0
      %s50 = sadd.s32 %s49, 1
      %s51 = scalar_select %p48, %s49, %s50
      %p54 = pneg %p48
      %p55 = scmp.eq.s32.totalorder %s39, 1
      %p56 = por %p54, %p55
      %p57 = scmp.ne.s32.totalorder %s49, %s52
      %p58 = scmp.eq.s32.totalorder %s39, 0
      %p59 = por %p57, %p58
      %p60 = scmp.ne.s32.totalorder %s49, %s52
      %p61 = scmp.eq.s32.totalorder %s44, 1
      %p62 = por %p60, %p61
      %p63 = scmp.ne.s32.totalorder %s52, %s53
      %p64 = scmp.eq.s32.totalorder %s44, 0
      %p65 = por %p63, %p64
      %p66 = scmp.ne.s32.totalorder %s52, %s53
      %p67 = scmp.eq.s32.totalorder %s45, 1
      %p68 = por %p66, %p67
      %p70 = scmp.ne.s32.totalorder %s53, %s69
      %p71 = scmp.eq.s32.totalorder %s45, 0
      %p72 = por %p70, %p71
      %s73 = ssub.s32 %s39, %s46
      %p74 = scmp.eq.s32.totalorder %s73, 0
      %s76 = sadd.s32 %s75, 1
      %s77 = scalar_select %p74, %s75, %s76
      %p80 = pneg %p74
      %p81 = scmp.eq.s32.totalorder %s39, 1
      %p82 = por %p80, %p81
      %p83 = scmp.ne.s32.totalorder %s75, %s78
      %p84 = scmp.eq.s32.totalorder %s39, 0
      %p85 = por %p83, %p84
      %p86 = scmp.ne.s32.totalorder %s75, %s78
      %p87 = scmp.eq.s32.totalorder %s44, 1
      %p88 = por %p86, %p87
      %p89 = scmp.ne.s32.totalorder %s78, %s79
      %p90 = scmp.eq.s32.totalorder %s44, 0
      %p91 = por %p89, %p90
      %p92 = scmp.ne.s32.totalorder %s78, %s79
      %p93 = scmp.eq.s32.totalorder %s45, 1
      %p94 = por %p92, %p93
      %p96 = scmp.ne.s32.totalorder %s79, %s95
      %p97 = scmp.eq.s32.totalorder %s45, 0
      %p98 = por %p96, %p97
      %s100 = sadd.s32 %s99, 1
      %p103 = scmp.eq.s32.totalorder %s39, 1
      %p104 = scmp.ne.s32.totalorder %s99, %s101
      %p105 = scmp.eq.s32.totalorder %s39, 0
      %p106 = por %p104, %p105
      %p107 = scmp.ne.s32.totalorder %s99, %s101
      %p108 = scmp.eq.s32.totalorder %s44, 1
      %p109 = por %p107, %p108
      %p110 = scmp.ne.s32.totalorder %s101, %s102
      %p111 = scmp.eq.s32.totalorder %s44, 0
      %p112 = por %p110, %p111
      %p113 = scmp.ne.s32.totalorder %s101, %s102
      %p114 = scmp.eq.s32.totalorder %s45, 1
      %p115 = por %p113, %p114
      %p117 = scmp.ne.s32.totalorder %s102, %s116
      %p118 = scmp.eq.s32.totalorder %s45, 0
      %p119 = por %p117, %p118
      %s121 = sadd.s32 %s120, 1
      %p124 = scmp.eq.s32.totalorder %s39, 1
      %p125 = scmp.ne.s32.totalorder %s120, %s122
      %p126 = scmp.eq.s32.totalorder %s39, 0
      %p127 = por %p125, %p126
      %p128 = scmp.ne.s32.totalorder %s120, %s122
      %p129 = scmp.eq.s32.totalorder %s44, 1
      %p130 = por %p128, %p129
      %p131 = scmp.ne.s32.totalorder %s122, %s123
      %p132 = scmp.eq.s32.totalorder %s44, 0
      %p133 = por %p131, %p132
      %p134 = scmp.ne.s32.totalorder %s122, %s123
      %p135 = scmp.eq.s32.totalorder %s45, 1
      %p136 = por %p134, %p135
      %p138 = scmp.ne.s32.totalorder %s123, %s137
      %p139 = scmp.eq.s32.totalorder %s45, 0
      %p140 = por %p138, %p139
      %s142 = sadd.s32 %s141, 1
      %p145 = scmp.eq.s32.totalorder %s39, 1
      %p146 = scmp.ne.s32.totalorder %s141, %s143
      %p147 = scmp.eq.s32.totalorder %s39, 0
      %p148 = por %p146, %p147
      %p149 = scmp.ne.s32.totalorder %s141, %s143
      %p150 = scmp.eq.s32.totalorder %s44, 1
      %p151 = por %p149, %p150
      %p152 = scmp.ne.s32.totalorder %s143, %s144
      %p153 = scmp.eq.s32.totalorder %s44, 0
      %p154 = por %p152, %p153
      %p155 = scmp.ne.s32.totalorder %s143, %s144
      %p156 = scmp.eq.s32.totalorder %s45, 1
      %p157 = por %p155, %p156
      %p159 = scmp.ne.s32.totalorder %s144, %s158
      %p160 = scmp.eq.s32.totalorder %s45, 0
      %p161 = por %p159, %p160
      %s163 = sadd.s32 %s162, 1
      %p166 = scmp.eq.s32.totalorder %s39, 1
      %p167 = scmp.ne.s32.totalorder %s162, %s164
      %p168 = scmp.eq.s32.totalorder %s39, 0
      %p169 = por %p167, %p168
      %p170 = scmp.ne.s32.totalorder %s162, %s164
      %p171 = scmp.eq.s32.totalorder %s44, 1
      %p172 = por %p170, %p171
      %p173 = scmp.ne.s32.totalorder %s164, %s165
      %p174 = scmp.eq.s32.totalorder %s44, 0
      %p175 = por %p173, %p174
      %p176 = scmp.ne.s32.totalorder %s164, %s165
      %p177 = scmp.eq.s32.totalorder %s45, 1
      %p178 = por %p176, %p177
      %p180 = scmp.ne.s32.totalorder %s165, %s179
      %p181 = scmp.eq.s32.totalorder %s45, 0
      %p182 = por %p180, %p181
      %s184 = sadd.s32 %s183, 1
      %p187 = scmp.eq.s32.totalorder %s39, 1
      %p188 = scmp.ne.s32.totalorder %s183, %s185
      %p189 = scmp.eq.s32.totalorder %s39, 0
      %p190 = por %p188, %p189
      %p191 = scmp.ne.s32.totalorder %s183, %s185
      %p192 = scmp.eq.s32.totalorder %s44, 1
      %p193 = por %p191, %p192
      %p194 = scmp.ne.s32.totalorder %s185, %s186
      %p195 = scmp.eq.s32.totalorder %s44, 0
      %p196 = por %p194, %p195
      %p197 = scmp.ne.s32.totalorder %s185, %s186
      %p198 = scmp.eq.s32.totalorder %s45, 1
      %p199 = por %p197, %p198
      %p201 = scmp.ne.s32.totalorder %s186, %s200
      %p202 = scmp.eq.s32.totalorder %s45, 0
      %p203 = por %p201, %p202
      %s205 = sadd.s32 %s204, 1
      %p208 = scmp.eq.s32.totalorder %s39, 1
      %p209 = scmp.ne.s32.totalorder %s204, %s206
      %p210 = scmp.eq.s32.totalorder %s39, 0
      %p211 = por %p209, %p210
      %p212 = scmp.ne.s32.totalorder %s204, %s206
      %p213 = scmp.eq.s32.totalorder %s44, 1
      %p214 = por %p212, %p213
      %p215 = scmp.ne.s32.totalorder %s206, %s207
      %p216 = scmp.eq.s32.totalorder %s44, 0
      %p217 = por %p215, %p216
      %p218 = scmp.ne.s32.totalorder %s206, %s207
      %p219 = scmp.eq.s32.totalorder %s45, 1
      %p220 = por %p218, %p219
      %p222 = scmp.ne.s32.totalorder %s207, %s221
      %p223 = scmp.eq.s32.totalorder %s45, 0
      %p224 = por %p222, %p223
      %s226 = sadd.s32 %s225, 1
      %p229 = scmp.eq.s32.totalorder %s39, 1
      %p230 = scmp.ne.s32.totalorder %s225, %s227
      %p231 = scmp.eq.s32.totalorder %s39, 0
      %p232 = por %p230, %p231
      %p233 = scmp.ne.s32.totalorder %s225, %s227
      %p234 = scmp.eq.s32.totalorder %s44, 1
      %p235 = por %p233, %p234
      %p236 = scmp.ne.s32.totalorder %s227, %s228
      %p237 = scmp.eq.s32.totalorder %s44, 0
      %p238 = por %p236, %p237
      %p239 = scmp.ne.s32.totalorder %s227, %s228
      %p240 = scmp.eq.s32.totalorder %s45, 1
      %p241 = por %p239, %p240
      %p243 = scmp.ne.s32.totalorder %s228, %s242
      %p244 = scmp.eq.s32.totalorder %s45, 0
      %p245 = por %p243, %p244
      %s247 = sadd.s32 %s246, 1
      %p250 = scmp.eq.s32.totalorder %s39, 1
      %p251 = scmp.ne.s32.totalorder %s246, %s248
      %p252 = scmp.eq.s32.totalorder %s39, 0
      %p253 = por %p251, %p252
      %p254 = scmp.ne.s32.totalorder %s246, %s248
      %p255 = scmp.eq.s32.totalorder %s44, 1
      %p256 = por %p254, %p255
      %p257 = scmp.ne.s32.totalorder %s248, %s249
      %p258 = scmp.eq.s32.totalorder %s44, 0
      %p259 = por %p257, %p258
      %p260 = scmp.ne.s32.totalorder %s248, %s249
      %p261 = scmp.eq.s32.totalorder %s45, 1
      %p262 = por %p260, %p261
      %p264 = scmp.ne.s32.totalorder %s249, %s263
      %p265 = scmp.eq.s32.totalorder %s45, 0
      %p266 = por %p264, %p265
      %s268 = sadd.s32 %s267, 1
      %p271 = scmp.eq.s32.totalorder %s39, 1
      %p272 = scmp.ne.s32.totalorder %s267, %s269
      %p273 = scmp.eq.s32.totalorder %s39, 0
      %p274 = por %p272, %p273
      %p275 = scmp.ne.s32.totalorder %s267, %s269
      %p276 = scmp.eq.s32.totalorder %s44, 1
      %p277 = por %p275, %p276
      %p278 = scmp.ne.s32.totalorder %s269, %s270
      %p279 = scmp.eq.s32.totalorder %s44, 0
      %p280 = por %p278, %p279
      %p281 = scmp.ne.s32.totalorder %s269, %s270
      %p282 = scmp.eq.s32.totalorder %s45, 1
      %p283 = por %p281, %p282
      %p285 = scmp.ne.s32.totalorder %s270, %s284
      %p286 = scmp.eq.s32.totalorder %s45, 0
      %p287 = por %p285, %p286
      %s289 = sadd.s32 %s288, 1
      %p292 = scmp.eq.s32.totalorder %s39, 1
      %p293 = scmp.ne.s32.totalorder %s288, %s290
      %p294 = scmp.eq.s32.totalorder %s39, 0
      %p295 = por %p293, %p294
      %p296 = scmp.ne.s32.totalorder %s288, %s290
      %p297 = scmp.eq.s32.totalorder %s44, 1
      %p298 = por %p296, %p297
      %p299 = scmp.ne.s32.totalorder %s290, %s291
      %p300 = scmp.eq.s32.totalorder %s44, 0
      %p301 = por %p299, %p300
      %p302 = scmp.ne.s32.totalorder %s290, %s291
      %p303 = scmp.eq.s32.totalorder %s45, 1
      %p304 = por %p302, %p303
      %p306 = scmp.ne.s32.totalorder %s291, %s305
      %p307 = scmp.eq.s32.totalorder %s45, 0
      %p308 = por %p306, %p307
      %s310 = sadd.s32 %s309, 1
      %p313 = scmp.eq.s32.totalorder %s39, 1
      %p314 = scmp.ne.s32.totalorder %s309, %s311
      %p315 = scmp.eq.s32.totalorder %s39, 0
      %p316 = por %p314, %p315
      %p317 = scmp.ne.s32.totalorder %s309, %s311
      %p318 = scmp.eq.s32.totalorder %s44, 1
      %p319 = por %p317, %p318
      %p320 = scmp.ne.s32.totalorder %s311, %s312
      %p321 = scmp.eq.s32.totalorder %s44, 0
      %p322 = por %p320, %p321
      %p323 = scmp.ne.s32.totalorder %s311, %s312
      %p324 = scmp.eq.s32.totalorder %s45, 1
      %p325 = por %p323, %p324
      %p327 = scmp.ne.s32.totalorder %s312, %s326
      %p328 = scmp.eq.s32.totalorder %s45, 0
      %p329 = por %p327, %p328
      %s331 = sadd.s32 %s330, 1
      %p334 = scmp.eq.s32.totalorder %s39, 1
      %p335 = scmp.ne.s32.totalorder %s330, %s332
      %p336 = scmp.eq.s32.totalorder %s39, 0
      %p337 = por %p335, %p336
      %p338 = scmp.ne.s32.totalorder %s330, %s332
      %p339 = scmp.eq.s32.totalorder %s44, 1
      %p340 = por %p338, %p339
      %p341 = scmp.ne.s32.totalorder %s332, %s333
      %p342 = scmp.eq.s32.totalorder %s44, 0
      %p343 = por %p341, %p342
      %p344 = scmp.ne.s32.totalorder %s332, %s333
      %p345 = scmp.eq.s32.totalorder %s45, 1
      %p346 = por %p344, %p345
      %p348 = scmp.ne.s32.totalorder %s333, %s347
      %p349 = scmp.eq.s32.totalorder %s45, 0
      %p350 = por %p348, %p349
      %s352 = sadd.s32 %s351, 1
      %p355 = scmp.eq.s32.totalorder %s39, 1
      %p356 = scmp.ne.s32.totalorder %s351, %s353
      %p357 = scmp.eq.s32.totalorder %s39, 0
      %p358 = por %p356, %p357
      %p359 = scmp.ne.s32.totalorder %s351, %s353
      %p360 = scmp.eq.s32.totalorder %s44, 1
      %p361 = por %p359, %p360
      %p362 = scmp.ne.s32.totalorder %s353, %s354
      %p363 = scmp.eq.s32.totalorder %s44, 0
      %p364 = por %p362, %p363
      %p365 = scmp.ne.s32.totalorder %s353, %s354
      %p366 = scmp.eq.s32.totalorder %s45, 1
      %p367 = por %p365, %p366
      %p369 = scmp.ne.s32.totalorder %s354, %s368
      %p370 = scmp.eq.s32.totalorder %s45, 0
      %p371 = por %p369, %p370
      %s373 = sadd.s32 %s372, 1
      %p376 = scmp.eq.s32.totalorder %s39, 1
      %p377 = scmp.ne.s32.totalorder %s372, %s374
      %p378 = scmp.eq.s32.totalorder %s39, 0
      %p379 = por %p377, %p378
      %p380 = scmp.ne.s32.totalorder %s372, %s374
      %p381 = scmp.eq.s32.totalorder %s44, 1
      %p382 = por %p380, %p381
      %p383 = scmp.ne.s32.totalorder %s374, %s375
      %p384 = scmp.eq.s32.totalorder %s44, 0
      %p385 = por %p383, %p384
      %p386 = scmp.ne.s32.totalorder %s374, %s375
      %p387 = scmp.eq.s32.totalorder %s45, 1
      %p388 = por %p386, %p387
      %p390 = scmp.ne.s32.totalorder %s375, %s389
      %p391 = scmp.eq.s32.totalorder %s45, 0
      %p392 = por %p390, %p391
      %s394 = sadd.s32 %s393, 1
      %p397 = scmp.eq.s32.totalorder %s39, 1
      %p398 = scmp.ne.s32.totalorder %s393, %s395
      %p399 = scmp.eq.s32.totalorder %s39, 0
      %p400 = por %p398, %p399
      %p401 = scmp.ne.s32.totalorder %s393, %s395
      %p402 = scmp.eq.s32.totalorder %s44, 1
      %p403 = por %p401, %p402
      %p404 = scmp.ne.s32.totalorder %s395, %s396
      %p405 = scmp.eq.s32.totalorder %s44, 0
      %p406 = por %p404, %p405
      %p407 = scmp.ne.s32.totalorder %s395, %s396
      %p408 = scmp.eq.s32.totalorder %s45, 1
      %p409 = por %p407, %p408
      %p411 = scmp.ne.s32.totalorder %s396, %s410
      %p412 = scmp.eq.s32.totalorder %s45, 0
      %p413 = por %p411, %p412
      %s415 = sadd.s32 %s414, 1
      %p418 = scmp.eq.s32.totalorder %s39, 1
      %p419 = scmp.ne.s32.totalorder %s414, %s416
      %p420 = scmp.eq.s32.totalorder %s39, 0
      %p421 = por %p419, %p420
      %p422 = scmp.ne.s32.totalorder %s414, %s416
      %p423 = scmp.eq.s32.totalorder %s44, 1
      %p424 = por %p422, %p423
      %p425 = scmp.ne.s32.totalorder %s416, %s417
      %p426 = scmp.eq.s32.totalorder %s44, 0
      %p427 = por %p425, %p426
      %p428 = scmp.ne.s32.totalorder %s416, %s417
      %p429 = scmp.eq.s32.totalorder %s45, 1
      %p430 = por %p428, %p429
      %p432 = scmp.ne.s32.totalorder %s417, %s431
      %p433 = scmp.eq.s32.totalorder %s45, 0
      %p434 = por %p432, %p433
      %s436 = sadd.s32 %s435, 1
      %p439 = scmp.eq.s32.totalorder %s39, 1
      %p440 = scmp.ne.s32.totalorder %s435, %s437
      %p441 = scmp.eq.s32.totalorder %s39, 0
      %p442 = por %p440, %p441
      %p443 = scmp.ne.s32.totalorder %s435, %s437
      %p444 = scmp.eq.s32.totalorder %s44, 1
      %p445 = por %p443, %p444
      %p446 = scmp.ne.s32.totalorder %s437, %s438
      %p447 = scmp.eq.s32.totalorder %s44, 0
      %p448 = por %p446, %p447
      %p449 = scmp.ne.s32.totalorder %s437, %s438
      %p450 = scmp.eq.s32.totalorder %s45, 1
      %p451 = por %p449, %p450
      %p453 = scmp.ne.s32.totalorder %s438, %s452
      %p454 = scmp.eq.s32.totalorder %s45, 0
      %p455 = por %p453, %p454
      %s457 = sadd.s32 %s456, 1
      %p460 = scmp.eq.s32.totalorder %s39, 1
      %p461 = scmp.ne.s32.totalorder %s456, %s458
      %p462 = scmp.eq.s32.totalorder %s39, 0
      %p463 = por %p461, %p462
      %p464 = scmp.ne.s32.totalorder %s456, %s458
      %p465 = scmp.eq.s32.totalorder %s44, 1
      %p466 = por %p464, %p465
      %p467 = scmp.ne.s32.totalorder %s458, %s459
      %p468 = scmp.eq.s32.totalorder %s44, 0
      %p469 = por %p467, %p468
      %p470 = scmp.ne.s32.totalorder %s458, %s459
      %p471 = scmp.eq.s32.totalorder %s45, 1
      %p472 = por %p470, %p471
      %p474 = scmp.ne.s32.totalorder %s459, %s473
      %p475 = scmp.eq.s32.totalorder %s45, 0
      %p476 = por %p474, %p475
      %s478 = sadd.s32 %s477, 1
      %p481 = scmp.eq.s32.totalorder %s39, 1
      %p482 = scmp.ne.s32.totalorder %s477, %s479
      %p483 = scmp.eq.s32.totalorder %s39, 0
      %p484 = por %p482, %p483
      %p485 = scmp.ne.s32.totalorder %s477, %s479
      %p486 = scmp.eq.s32.totalorder %s44, 1
      %p487 = por %p485, %p486
      %p488 = scmp.ne.s32.totalorder %s479, %s480
      %p489 = scmp.eq.s32.totalorder %s44, 0
      %p490 = por %p488, %p489
      %p491 = scmp.ne.s32.totalorder %s479, %s480
      %p492 = scmp.eq.s32.totalorder %s45, 1
      %p493 = por %p491, %p492
      %p495 = scmp.ne.s32.totalorder %s480, %s494
      %p496 = scmp.eq.s32.totalorder %s45, 0
      %p497 = por %p495, %p496
      %s499 = sadd.s32 %s498, 1
      %p502 = scmp.eq.s32.totalorder %s39, 1
      %p503 = scmp.ne.s32.totalorder %s498, %s500
      %p504 = scmp.eq.s32.totalorder %s39, 0
      %p505 = por %p503, %p504
      %p506 = scmp.ne.s32.totalorder %s498, %s500
      %p507 = scmp.eq.s32.totalorder %s44, 1
      %p508 = por %p506, %p507
      %p509 = scmp.ne.s32.totalorder %s500, %s501
      %p510 = scmp.eq.s32.totalorder %s44, 0
      %p511 = por %p509, %p510
      %p512 = scmp.ne.s32.totalorder %s500, %s501
      %p513 = scmp.eq.s32.totalorder %s45, 1
      %p514 = por %p512, %p513
      %p516 = scmp.ne.s32.totalorder %s501, %s515
      %p517 = scmp.eq.s32.totalorder %s45, 0
      %p518 = por %p516, %p517
      %s520 = sadd.s32 %s519, 1
      %p523 = scmp.eq.s32.totalorder %s39, 1
      %p524 = scmp.ne.s32.totalorder %s519, %s521
      %p525 = scmp.eq.s32.totalorder %s39, 0
      %p526 = por %p524, %p525
      %p527 = scmp.ne.s32.totalorder %s519, %s521
      %p528 = scmp.eq.s32.totalorder %s44, 1
      %p529 = por %p527, %p528
      %p530 = scmp.ne.s32.totalorder %s521, %s522
      %p531 = scmp.eq.s32.totalorder %s44, 0
      %p532 = por %p530, %p531
      %p533 = scmp.ne.s32.totalorder %s521, %s522
      %p534 = scmp.eq.s32.totalorder %s45, 1
      %p535 = por %p533, %p534
      %p537 = scmp.ne.s32.totalorder %s522, %s536
      %p538 = scmp.eq.s32.totalorder %s45, 0
      %p539 = por %p537, %p538
      %s541 = sadd.s32 %s540, 1
      %p544 = scmp.eq.s32.totalorder %s39, 1
      %p545 = scmp.ne.s32.totalorder %s540, %s542
      %p546 = scmp.eq.s32.totalorder %s39, 0
      %p547 = por %p545, %p546
      %p548 = scmp.ne.s32.totalorder %s540, %s542
      %p549 = scmp.eq.s32.totalorder %s44, 1
      %p550 = por %p548, %p549
      %p551 = scmp.ne.s32.totalorder %s542, %s543
      %p552 = scmp.eq.s32.totalorder %s44, 0
      %p553 = por %p551, %p552
      %p554 = scmp.ne.s32.totalorder %s542, %s543
      %p555 = scmp.eq.s32.totalorder %s45, 1
      %p556 = por %p554, %p555
      %p558 = scmp.ne.s32.totalorder %s543, %s557
      %p559 = scmp.eq.s32.totalorder %s45, 0
      %p560 = por %p558, %p559
      %s561 = ssub.s32 %s39, %s46
      %p562 = scmp.eq.s32.totalorder %s561, 0
      %s564 = sadd.s32 %s563, 1
      %s565 = scalar_select %p562, %s563, %s564
      %p568 = pneg %p562
      %p569 = scmp.eq.s32.totalorder %s39, 1
      %p570 = por %p568, %p569
      %p571 = scmp.ne.s32.totalorder %s563, %s566
      %p572 = scmp.eq.s32.totalorder %s39, 0
      %p573 = por %p571, %p572
      %p574 = scmp.ne.s32.totalorder %s563, %s566
      %p575 = scmp.eq.s32.totalorder %s44, 1
      %p576 = por %p574, %p575
      %p577 = scmp.ne.s32.totalorder %s566, %s567
      %p578 = scmp.eq.s32.totalorder %s44, 0
      %p579 = por %p577, %p578
      %p580 = scmp.ne.s32.totalorder %s566, %s567
      %p581 = scmp.eq.s32.totalorder %s45, 1
      %p582 = por %p580, %p581
      %p584 = scmp.ne.s32.totalorder %s567, %s583
      %p585 = scmp.eq.s32.totalorder %s45, 0
      %p586 = por %p584, %p585
      %p587 = scmp.le.s32.totalorder 1, %s39
      %p588 = scmp.lt.s32.totalorder %s39, 3
      %p589 = pnand %p587, %p588
      %p590 = pneg %p589
      // Predicated region
      $region9: #{forward.1} parent=5 // pred_check
        _
      $region10: #{forward.1} parent=5 // pred_check_branch
        %592 = sbr.rel (%p589) target = $region12
      $region11: #{forward.1} parent=5 // pred_region
        %s593 = ssub.s32 %s39, 1
        // Predicated region
        $region13: #{forward.1} parent=11 // pred_check
          %p594 = pneg %p112
        $region14: #{forward.1} parent=11 // pred_check_branch
          %596 = sbr.rel (%p594) target = $region16
        $region15: #{forward.1} parent=11 // pred_region
          %598 = vsyncadd [#allocation4], 0
          %s600 = sshll.u32 %s2, 4
          %s601 = int_to_ptr.hbm [resolvable:$true] %s600
          %s602 = sshll.u32 [#allocation3], 4
          %s603 = int_to_ptr.vmem [resolvable:$true] %s602
          %605 = dma.hbm_to_vmem [thread:$0]  %s601, 64, %s603, [#allocation4]
        $region16: #{forward.1} parent=11 // pred_fallthru
          _
        // Predicated region
        $region17: #{forward.1} parent=11 // pred_check
          %p606 = pneg %p133
        $region18: #{forward.1} parent=11 // pred_check_branch
          %608 = sbr.rel (%p606) target = $region20
        $region19: #{forward.1} parent=11 // pred_region
          _
        $region20: #{forward.1} parent=11 // pred_fallthru
          _
        // Predicated region
        $region21: #{forward.1} parent=11 // pred_check
          %p609 = pneg %p154
        $region22: #{forward.1} parent=11 // pred_check_branch
          %611 = sbr.rel (%p609) target = $region24
        $region23: #{forward.1} parent=11 // pred_region
          %613 = vsyncadd [#allocation6], 0
          %s615 = sshll.u32 %s4, 4
          %s616 = int_to_ptr.hbm [resolvable:$true] %s615
          %s617 = sshll.u32 [#allocation5], 4
          %s618 = int_to_ptr.vmem [resolvable:$true] %s617
          %620 = dma.hbm_to_vmem [thread:$0]  %s616, 16, %s618, [#allocation6]
        $region24: #{forward.1} parent=11 // pred_fallthru
          _
        // Predicated region
        $region25: #{forward.1} parent=11 // pred_check
          %p621 = pneg %p175
        $region26: #{forward.1} parent=11 // pred_check_branch
          %623 = sbr.rel (%p621) target = $region28
        $region27: #{forward.1} parent=11 // pred_region
          %625 = vsyncadd [#allocation6], 0
          %s626 = sshll.u32 %s5, 4
          %s627 = int_to_ptr.hbm [resolvable:$true] %s626
          %s628 = sshll.u32 [#allocation7], 4
          %s629 = int_to_ptr.vmem [resolvable:$true] %s628
          %634 = dma.hbm_to_vmem [thread:$0]  %s627, 4096, %s629, [#allocation6], 128, 128, 8
        $region28: #{forward.1} parent=11 // pred_fallthru
          _
        // Predicated region
        $region29: #{forward.1} parent=11 // pred_check
          %p635 = pneg %p196
        $region30: #{forward.1} parent=11 // pred_check_branch
          %637 = sbr.rel (%p635) target = $region32
        $region31: #{forward.1} parent=11 // pred_region
          _
        $region32: #{forward.1} parent=11 // pred_fallthru
          _
        // Predicated region
        $region33: #{forward.1} parent=11 // pred_check
          %p638 = pneg %p217
        $region34: #{forward.1} parent=11 // pred_check_branch
          %640 = sbr.rel (%p638) target = $region36
        $region35: #{forward.1} parent=11 // pred_region
          %642 = vsyncadd [#allocation9], 0
          %s643 = sshll.u32 %s7, 4
          %s644 = int_to_ptr.hbm [resolvable:$true] %s643
          %s645 = sshll.u32 [#allocation8], 4
          %s646 = int_to_ptr.vmem [resolvable:$true] %s645
          %651 = dma.hbm_to_vmem [thread:$0]  %s644, 1024, %s646, [#allocation9], 128, 128, 8
        $region36: #{forward.1} parent=11 // pred_fallthru
          _
        // Predicated region
        $region37: #{forward.1} parent=11 // pred_check
          %p652 = pneg %p238
        $region38: #{forward.1} parent=11 // pred_check_branch
          %654 = sbr.rel (%p652) target = $region40
        $region39: #{forward.1} parent=11 // pred_region
          %656 = vsyncadd [#allocation9], 0
          %s657 = sshll.u32 %s8, 4
          %s658 = int_to_ptr.hbm [resolvable:$true] %s657
          %s659 = sshll.u32 [#allocation10], 4
          %s660 = int_to_ptr.vmem [resolvable:$true] %s659
          %665 = dma.hbm_to_vmem [thread:$0]  %s658, 32, %s660, [#allocation9], 16, 16, 1
        $region40: #{forward.1} parent=11 // pred_fallthru
          _
        // Predicated region
        $region41: #{forward.1} parent=11 // pred_check
          %p666 = pneg %p259
        $region42: #{forward.1} parent=11 // pred_check_branch
          %668 = sbr.rel (%p666) target = $region44
        $region43: #{forward.1} parent=11 // pred_region
          %670 = vsyncadd [#allocation12], 0
          %s671 = sshll.u32 %s9, 4
          %s672 = int_to_ptr.hbm [resolvable:$true] %s671
          %s673 = sshll.u32 [#allocation11], 4
          %s674 = int_to_ptr.vmem [resolvable:$true] %s673
          %679 = dma.hbm_to_vmem [thread:$0]  %s672, 4096, %s674, [#allocation12], 128, 128, 8
        $region44: #{forward.1} parent=11 // pred_fallthru
          _
        // Predicated region
        $region45: #{forward.1} parent=11 // pred_check
          %p680 = pneg %p280
        $region46: #{forward.1} parent=11 // pred_check_branch
          %682 = sbr.rel (%p680) target = $region48
        $region47: #{forward.1} parent=11 // pred_region
          %684 = vsyncadd [#allocation12], 0
          %s685 = sshll.u32 %s10, 4
          %s686 = int_to_ptr.hbm [resolvable:$true] %s685
          %s687 = sshll.u32 [#allocation13], 4
          %s688 = int_to_ptr.vmem [resolvable:$true] %s687
          %693 = dma.hbm_to_vmem [thread:$0]  %s686, 32, %s688, [#allocation12], 16, 16, 1
        $region48: #{forward.1} parent=11 // pred_fallthru
          _
        // Predicated region
        $region49: #{forward.1} parent=11 // pred_check
          %p694 = pneg %p301
        $region50: #{forward.1} parent=11 // pred_check_branch
          %696 = sbr.rel (%p694) target = $region52
        $region51: #{forward.1} parent=11 // pred_region
          %698 = vsyncadd [#allocation15], 0
          %s699 = sshll.u32 %s11, 4
          %s700 = int_to_ptr.hbm [resolvable:$true] %s699
          %s701 = sshll.u32 [#allocation14], 4
          %s702 = int_to_ptr.vmem [resolvable:$true] %s701
          %707 = dma.hbm_to_vmem [thread:$0]  %s700, 128, %s702, [#allocation15], 16, 16, 1
        $region52: #{forward.1} parent=11 // pred_fallthru
          _
        // Predicated region
        $region53: #{forward.1} parent=11 // pred_check
          %p708 = pneg %p322
        $region54: #{forward.1} parent=11 // pred_check_branch
          %710 = sbr.rel (%p708) target = $region56
        $region55: #{forward.1} parent=11 // pred_region
          _
        $region56: #{forward.1} parent=11 // pred_fallthru
          _
        // Predicated region
        $region57: #{forward.1} parent=11 // pred_check
          %p711 = pneg %p343
        $region58: #{forward.1} parent=11 // pred_check_branch
          %713 = sbr.rel (%p711) target = $region60
        $region59: #{forward.1} parent=11 // pred_region
          _
        $region60: #{forward.1} parent=11 // pred_fallthru
          _
        // Predicated region
        $region61: #{forward.1} parent=11 // pred_check
          %p714 = pneg %p364
        $region62: #{forward.1} parent=11 // pred_check_branch
          %716 = sbr.rel (%p714) target = $region64
        $region63: #{forward.1} parent=11 // pred_region
          %718 = vsyncadd [#allocation15], 0
          %s719 = sshll.u32 %s14, 4
          %s720 = int_to_ptr.hbm [resolvable:$true] %s719
          %s721 = sshll.u32 [#allocation16], 4
          %s722 = int_to_ptr.vmem [resolvable:$true] %s721
          %727 = dma.hbm_to_vmem [thread:$0]  %s720, 1536, %s722, [#allocation15], 128, 128, 8
        $region64: #{forward.1} parent=11 // pred_fallthru
          _
        // Predicated region
        $region65: #{forward.1} parent=11 // pred_check
          %p728 = pneg %p385
        $region66: #{forward.1} parent=11 // pred_check_branch
          %730 = sbr.rel (%p728) target = $region68
        $region67: #{forward.1} parent=11 // pred_region
          %732 = vsyncadd [#allocation18], 0
          %s734 = sshll.u32 %s15, 4
          %s735 = int_to_ptr.hbm [resolvable:$true] %s734
          %s736 = sshll.u32 [#allocation17], 4
          %s737 = int_to_ptr.vmem [resolvable:$true] %s736
          %739 = dma.hbm_to_vmem [thread:$0]  %s735, 16, %s737, [#allocation18]
        $region68: #{forward.1} parent=11 // pred_fallthru
          _
        // Predicated region
        $region69: #{forward.1} parent=11 // pred_check
          %p740 = pneg %p406
        $region70: #{forward.1} parent=11 // pred_check_branch
          %742 = sbr.rel (%p740) target = $region72
        $region71: #{forward.1} parent=11 // pred_region
          _
        $region72: #{forward.1} parent=11 // pred_fallthru
          _
        // Predicated region
        $region73: #{forward.1} parent=11 // pred_check
          %p743 = pneg %p427
        $region74: #{forward.1} parent=11 // pred_check_branch
          %745 = sbr.rel (%p743) target = $region76
        $region75: #{forward.1} parent=11 // pred_region
          %747 = vsyncadd [#allocation18], 0
          %s749 = sshll.u32 %s17, 4
          %s750 = int_to_ptr.hbm [resolvable:$true] %s749
          %s751 = sshll.u32 [#allocation19], 4
          %s752 = int_to_ptr.vmem [resolvable:$true] %s751
          %754 = dma.hbm_to_vmem [thread:$0]  %s750, 16, %s752, [#allocation18]
        $region76: #{forward.1} parent=11 // pred_fallthru
          _
        // Predicated region
        $region77: #{forward.1} parent=11 // pred_check
          %p755 = pneg %p448
        $region78: #{forward.1} parent=11 // pred_check_branch
          %757 = sbr.rel (%p755) target = $region80
        $region79: #{forward.1} parent=11 // pred_region
          %759 = vsyncadd [#allocation21], 0
          %s760 = sshll.u32 %s18, 4
          %s761 = int_to_ptr.hbm [resolvable:$true] %s760
          %s762 = sshll.u32 [#allocation20], 4
          %s763 = int_to_ptr.vmem [resolvable:$true] %s762
          %768 = dma.hbm_to_vmem [thread:$0]  %s761, 1024, %s763, [#allocation21], 128, 128, 8
        $region80: #{forward.1} parent=11 // pred_fallthru
          _
        // Predicated region
        $region81: #{forward.1} parent=11 // pred_check
          %p769 = pneg %p469
        $region82: #{forward.1} parent=11 // pred_check_branch
          %771 = sbr.rel (%p769) target = $region84
        $region83: #{forward.1} parent=11 // pred_region
          _
        $region84: #{forward.1} parent=11 // pred_fallthru
          _
        // Predicated region
        $region85: #{forward.1} parent=11 // pred_check
          %p772 = pneg %p490
        $region86: #{forward.1} parent=11 // pred_check_branch
          %774 = sbr.rel (%p772) target = $region88
        $region87: #{forward.1} parent=11 // pred_region
          %776 = vsyncadd [#allocation21], 0
          %s777 = sshll.u32 %s20, 4
          %s778 = int_to_ptr.hbm [resolvable:$true] %s777
          %s779 = sshll.u32 [#allocation22], 4
          %s780 = int_to_ptr.vmem [resolvable:$true] %s779
          %785 = dma.hbm_to_vmem [thread:$0]  %s778, 512, %s780, [#allocation21], 128, 128, 8
        $region88: #{forward.1} parent=11 // pred_fallthru
          _
        // Predicated region
        $region89: #{forward.1} parent=11 // pred_check
          %p786 = pneg %p511
        $region90: #{forward.1} parent=11 // pred_check_branch
          %788 = sbr.rel (%p786) target = $region92
        $region91: #{forward.1} parent=11 // pred_region
          %790 = vsyncadd [#allocation24], 0
          %s792 = sshll.u32 %s21, 4
          %s793 = int_to_ptr.hbm [resolvable:$true] %s792
          %s794 = sshll.u32 [#allocation23], 4
          %s795 = int_to_ptr.vmem [resolvable:$true] %s794
          %797 = dma.hbm_to_vmem [thread:$0]  %s793, 16, %s795, [#allocation24]
        $region92: #{forward.1} parent=11 // pred_fallthru
          _
        // Predicated region
        $region93: #{forward.1} parent=11 // pred_check
          %p798 = pneg %p532
        $region94: #{forward.1} parent=11 // pred_check_branch
          %800 = sbr.rel (%p798) target = $region96
        $region95: #{forward.1} parent=11 // pred_region
          %802 = vsyncadd [#allocation24], 0
          %s803 = sshll.u32 %s22, 4
          %s804 = int_to_ptr.hbm [resolvable:$true] %s803
          %s805 = sshll.u32 [#allocation25], 4
          %s806 = int_to_ptr.vmem [resolvable:$true] %s805
          %811 = dma.hbm_to_vmem [thread:$0]  %s804, 1536, %s806, [#allocation24], 128, 128, 8
        $region96: #{forward.1} parent=11 // pred_fallthru
          _
        // Predicated region
        $region97: #{forward.1} parent=11 // pred_check
          %p812 = pneg %p553
        $region98: #{forward.1} parent=11 // pred_check_branch
          %814 = sbr.rel (%p812) target = $region100
        $region99: #{forward.1} parent=11 // pred_region
          %816 = vsyncadd [#allocation27], 0
          %s818 = sshll.u32 %s23, 4
          %s819 = int_to_ptr.hbm [resolvable:$true] %s818
          %s820 = sshll.u32 [#allocation26], 4
          %s821 = int_to_ptr.vmem [resolvable:$true] %s820
          %823 = dma.hbm_to_vmem [thread:$0]  %s819, 16, %s821, [#allocation27]
        $region100: #{forward.1} parent=11 // pred_fallthru
          _
      $region12: #{forward.1} parent=5 // pred_fallthru
        _
      %p824 = scmp.lt.s32.totalorder %s39, 2
      // Predicated region
      $region101: #{forward.1} parent=5 // pred_check
        %p825 = pneg %p824
      $region102: #{forward.1} parent=5 // pred_check_branch
        %827 = sbr.rel (%p825) target = $region104
      $region103: #{forward.1} parent=5 // pred_region
        // Predicated region
        $region105: #{forward.1} parent=103 // pred_check
          %p828 = pneg %p59
        $region106: #{forward.1} parent=103 // pred_check_branch
          %830 = sbr.rel (%p828) target = $region108
        $region107: #{forward.1} parent=103 // pred_region
          %p831 = scmp.lt.s32.totalorder %s39, 1
          %s832 = scalar_select %p831, %s39, 1
          %s833 = smul.addr %s832, 2
          %s834 = smul.addr %s833, 8
          %s835 = scalar_lea.vmem %s0, %s834
        $region108: #{forward.1} parent=103 // pred_fallthru
          _
        // Predicated region
        $region109: #{forward.1} parent=103 // pred_check
          %p836 = pneg %p85
        $region110: #{forward.1} parent=103 // pred_check_branch
          %838 = sbr.rel (%p836) target = $region112
        $region111: #{forward.1} parent=103 // pred_region
          %p839 = scmp.lt.s32.totalorder %s39, 1
          %s840 = scalar_select %p839, %s39, 1
          %s841 = smul.addr %s840, 2
          %s842 = smul.addr %s841, 8
          %s843 = scalar_lea.vmem %s1, %s842
        $region112: #{forward.1} parent=103 // pred_fallthru
          _
      $region104: #{forward.1} parent=5 // pred_fallthru
        _
      %p844 = scmp.le.s32.totalorder 1, %s39
      %p845 = scmp.lt.s32.totalorder %s39, 3
      %p846 = pnand %p844, %p845
      %p847 = pneg %p846
      // Predicated region
      $region113: #{forward.1} parent=5 // pred_check
        _
      $region114: #{forward.1} parent=5 // pred_check_branch
        %849 = sbr.rel (%p846) target = $region116
      $region115: #{forward.1} parent=5 // pred_region
        %s850 = ssub.s32 %s39, 1
        // Predicated region
        $region117: #{forward.1} parent=115 // pred_check
          %p851 = pneg %p112
        $region118: #{forward.1} parent=115 // pred_check_branch
          %853 = sbr.rel (%p851) target = $region120
        $region119: #{forward.1} parent=115 // pred_region
          %855 = dma.done [#allocation4], 64
        $region120: #{forward.1} parent=115 // pred_fallthru
          _
        // Predicated region
        $region121: #{forward.1} parent=115 // pred_check
          %p856 = pneg %p154
        $region122: #{forward.1} parent=115 // pred_check_branch
          %858 = sbr.rel (%p856) target = $region124
        $region123: #{forward.1} parent=115 // pred_region
          %860 = dma.done [#allocation6], 16
        $region124: #{forward.1} parent=115 // pred_fallthru
          _
        // Predicated region
        $region125: #{forward.1} parent=115 // pred_check
          %p861 = pneg %p175
        $region126: #{forward.1} parent=115 // pred_check_branch
          %863 = sbr.rel (%p861) target = $region128
        $region127: #{forward.1} parent=115 // pred_region
          %865 = dma.done [#allocation6], 4096
        $region128: #{forward.1} parent=115 // pred_fallthru
          _
        // Predicated region
        $region129: #{forward.1} parent=115 // pred_check
          %p866 = pneg %p217
        $region130: #{forward.1} parent=115 // pred_check_branch
          %868 = sbr.rel (%p866) target = $region132
        $region131: #{forward.1} parent=115 // pred_region
          %870 = dma.done [#allocation9], 1024
        $region132: #{forward.1} parent=115 // pred_fallthru
          _
        // Predicated region
        $region133: #{forward.1} parent=115 // pred_check
          %p871 = pneg %p238
        $region134: #{forward.1} parent=115 // pred_check_branch
          %873 = sbr.rel (%p871) target = $region136
        $region135: #{forward.1} parent=115 // pred_region
          %875 = dma.done [#allocation9], 32
        $region136: #{forward.1} parent=115 // pred_fallthru
          _
        // Predicated region
        $region137: #{forward.1} parent=115 // pred_check
          %p876 = pneg %p259
        $region138: #{forward.1} parent=115 // pred_check_branch
          %878 = sbr.rel (%p876) target = $region140
        $region139: #{forward.1} parent=115 // pred_region
          %880 = dma.done [#allocation12], 4096
        $region140: #{forward.1} parent=115 // pred_fallthru
          _
        // Predicated region
        $region141: #{forward.1} parent=115 // pred_check
          %p881 = pneg %p280
        $region142: #{forward.1} parent=115 // pred_check_branch
          %883 = sbr.rel (%p881) target = $region144
        $region143: #{forward.1} parent=115 // pred_region
          %885 = dma.done [#allocation12], 32
        $region144: #{forward.1} parent=115 // pred_fallthru
          _
        // Predicated region
        $region145: #{forward.1} parent=115 // pred_check
          %p886 = pneg %p301
        $region146: #{forward.1} parent=115 // pred_check_branch
          %888 = sbr.rel (%p886) target = $region148
        $region147: #{forward.1} parent=115 // pred_region
          %890 = dma.done [#allocation15], 128
        $region148: #{forward.1} parent=115 // pred_fallthru
          _
        // Predicated region
        $region149: #{forward.1} parent=115 // pred_check
          %p891 = pneg %p364
        $region150: #{forward.1} parent=115 // pred_check_branch
          %893 = sbr.rel (%p891) target = $region152
        $region151: #{forward.1} parent=115 // pred_region
          %895 = dma.done [#allocation15], 1536
        $region152: #{forward.1} parent=115 // pred_fallthru
          _
        // Predicated region
        $region153: #{forward.1} parent=115 // pred_check
          %p896 = pneg %p385
        $region154: #{forward.1} parent=115 // pred_check_branch
          %898 = sbr.rel (%p896) target = $region156
        $region155: #{forward.1} parent=115 // pred_region
          %900 = dma.done [#allocation18], 16
        $region156: #{forward.1} parent=115 // pred_fallthru
          _
        // Predicated region
        $region157: #{forward.1} parent=115 // pred_check
          %p901 = pneg %p427
        $region158: #{forward.1} parent=115 // pred_check_branch
          %903 = sbr.rel (%p901) target = $region160
        $region159: #{forward.1} parent=115 // pred_region
          %905 = dma.done [#allocation18], 16
        $region160: #{forward.1} parent=115 // pred_fallthru
          _
        // Predicated region
        $region161: #{forward.1} parent=115 // pred_check
          %p906 = pneg %p448
        $region162: #{forward.1} parent=115 // pred_check_branch
          %908 = sbr.rel (%p906) target = $region164
        $region163: #{forward.1} parent=115 // pred_region
          %910 = dma.done [#allocation21], 1024
        $region164: #{forward.1} parent=115 // pred_fallthru
          _
        // Predicated region
        $region165: #{forward.1} parent=115 // pred_check
          %p911 = pneg %p490
        $region166: #{forward.1} parent=115 // pred_check_branch
          %913 = sbr.rel (%p911) target = $region168
        $region167: #{forward.1} parent=115 // pred_region
          %915 = dma.done [#allocation21], 512
        $region168: #{forward.1} parent=115 // pred_fallthru
          _
        // Predicated region
        $region169: #{forward.1} parent=115 // pred_check
          %p916 = pneg %p511
        $region170: #{forward.1} parent=115 // pred_check_branch
          %918 = sbr.rel (%p916) target = $region172
        $region171: #{forward.1} parent=115 // pred_region
          %920 = dma.done [#allocation24], 16
        $region172: #{forward.1} parent=115 // pred_fallthru
          _
        // Predicated region
        $region173: #{forward.1} parent=115 // pred_check
          %p921 = pneg %p532
        $region174: #{forward.1} parent=115 // pred_check_branch
          %923 = sbr.rel (%p921) target = $region176
        $region175: #{forward.1} parent=115 // pred_region
          %925 = dma.done [#allocation24], 1536
        $region176: #{forward.1} parent=115 // pred_fallthru
          _
        // Predicated region
        $region177: #{forward.1} parent=115 // pred_check
          %p926 = pneg %p553
        $region178: #{forward.1} parent=115 // pred_check_branch
          %928 = sbr.rel (%p926) target = $region180
        $region179: #{forward.1} parent=115 // pred_region
          %930 = dma.done [#allocation27], 16
        $region180: #{forward.1} parent=115 // pred_fallthru
          _
        %p931 = scmp.lt.s32.totalorder %s44, 1
        %s932 = scalar_select %p931, %s44, 1
        %s933 = smul.addr %s932, 2
        %s934 = smul.addr %s933, 8
        %s935 = scalar_lea.vmem %s0, %s934
        %p936 = pneg %p65
        %p937 = pneg %p62
        %p938 = scmp.lt.s32.totalorder %s44, 1
        %s939 = scalar_select %p938, %s44, 1
        %s940 = smul.addr %s939, 2
        %s941 = smul.addr %s940, 8
        %s942 = scalar_lea.vmem %s1, %s941
        %p943 = pneg %p91
        %p944 = pneg %p88
        %p945 = pneg %p112
        %p946 = pneg %p109
        %p947 = pneg %p133
        %p948 = pneg %p130
        %p949 = pneg %p154
        %p950 = pneg %p151
        %p951 = pneg %p175
        %p952 = pneg %p172
        %p953 = pneg %p196
        %p954 = pneg %p193
        %p955 = pneg %p217
        %p956 = pneg %p214
        %p957 = pneg %p238
        %p958 = pneg %p235
        %p959 = pneg %p259
        %p960 = pneg %p256
        %p961 = pneg %p280
        %p962 = pneg %p277
        %p963 = pneg %p301
        %p964 = pneg %p298
        %p965 = pneg %p322
        %p966 = pneg %p319
        %p967 = pneg %p343
        %p968 = pneg %p340
        %p969 = pneg %p364
        %p970 = pneg %p361
        %p971 = pneg %p385
        %p972 = pneg %p382
        %p973 = pneg %p406
        %p974 = pneg %p403
        %p975 = pneg %p427
        %p976 = pneg %p424
        %p977 = pneg %p448
        %p978 = pneg %p445
        %p979 = pneg %p469
        %p980 = pneg %p466
        %p981 = pneg %p490
        %p982 = pneg %p487
        %p983 = pneg %p511
        %p984 = pneg %p508
        %p985 = pneg %p532
        %p986 = pneg %p529
        %p987 = pneg %p553
        %p988 = pneg %p550
        %p989 = pneg %p579
        %p990 = pneg %p576
        %p991 = scmp.lt.s32.totalorder %s44, 1
        %s992 = scalar_select %p991, %s44, 1
        %s993 = smul.addr %s992, 3
        %s994 = smul.addr %s993, 8
        %s995 = scalar_lea.vmem %s24, %s994
        %p996 = scmp.lt.s32.totalorder %s44, 1
        %s997 = scalar_select %p996, %s44, 1
        %s998 = smul.addr %s997, 2
        %s999 = smul.addr %s998, 8
        %s1000 = scalar_lea.vmem %s0, %s999
        %p1001 = scmp.lt.s32.totalorder %s44, 1
        %s1002 = scalar_select %p1001, %s44, 1
        %s1003 = smul.addr %s1002, 2
        %s1004 = smul.addr %s1003, 8
        %s1005 = scalar_lea.vmem %s1, %s1004
        %p1006 = scmp.lt.s32.totalorder %s44, 1
        %s1007 = scalar_select %p1006, %s44, 1
        %s1008 = smul.addr %s1007, 3
        %s1009 = smul.addr %s1008, 8
        %s1010 = scalar_lea.vmem %s24, %s1009
        %v1011 = vld [vmem:[%s1005] sm:$0xff]
        %v1012 = vld [vmem:[%s1005 + $0x8] sm:$0xff]
        %v1013 = vld [vmem:[%s1000] sm:$0xff]
        %v1014 = vld [vmem:[%s1000 + $0x8] sm:$0xff]
        %v1015 = vld [vmem:[#allocation3] sm:$0xf]
        %vm1016 = vcmask 31744
        %v1018 = vsel %vm1016, %v1013, 0
        %v1021 = vsel %vm1016, %v1014, 0
        %vm1023 = vcmask 1043456
        %v1025 = vsel %vm1023, %v1015, 0
        %1027 = vmatpush.msra.mxu0 0.0
        %1028 = vmatpush.msra.mxu0 0.0
        %1029 = vmatpush.msra.mxu0 0.0
        %1030 = vmatpush.msra.mxu0 0.0
        %1031 = vmatpush.msra.mxu0 0.0
        %1032 = vmatpush.msra.mxu0 0.0
        %1033 = vmatpush.msra.mxu0 0.0
        %1034 = vmatpush.msra.mxu0 0.0
        %1035 = vmatpush.msra.mxu0 0.0
        %1036 = vmatpush.msra.mxu0 0.0
        %1037 = vmatpush.msra.mxu0 0.0
        %1038 = vmatpush.msra.mxu0 0.0
        %1039 = vmatpush.msra.mxu0 0.0
        %1040 = vmatpush.msra.mxu0 0.0
        %1041 = vmatpush.msra.mxu0 0.0
        %1042 = vmatpush.msra.mxu0 %v1025
        %1043 = vmatmul.f32.gmra.mxu0 %v1018
        %v1044 = vpop.f32.mrf.mxu0
        %v1045 = vadd.f32 0.0, %v1044
        %1046 = vmatmul.f32.gmra.mxu0 %v1021
        %v1047 = vpop.f32.mrf.mxu0
        %v1048 = vadd.f32 0.0, %v1047
        %1049 = vdwg.mxu0
        %vm1050 = vcmask 293888
        %1051 = vst.msk [vmem:[#allocation2] sm:$0xff] %vm1050, 0.0
        %1052 = vst.msk [vmem:[#allocation2 + $0x8] sm:$0xff] %vm1050, 0.0
        %vm1053 = vcmask 287744
        %1054 = vst.msk [vmem:[#allocation2 + $0x10] sm:$0x3] %vm1053, 0.0
        %1057 = vrot.lane.b32.xlu0 %v1045, 32
        %v1058 = vpop.permute.xlu0 %1057
        %1059 = vrot.lane.b32.xlu0 %v1048, 32
        %v1060 = vpop.permute.xlu0 %1059
        %vm1063 = vcmask 261120
        %v1064 = vsel %vm1063, %v1011, %v1058
        %v1065 = vsel %vm1063, %v1012, %v1060
        %1066 = vst.msk [vmem:[#allocation2 + $0x1] sm:$0xff] %vm1050, %v1064
        %1067 = vst.msk [vmem:[#allocation2 + $0x9] sm:$0xff] %vm1050, %v1065
        %v1068 = vld [vmem:[#allocation2] sm:$0xff]
        %v1069 = vld [vmem:[#allocation2 + $0x8] sm:$0xff]
        %v1070 = vld [vmem:[%s3] sm:$0xff]
        %v1071 = vld [vmem:[%s3 + $0x8] sm:$0xff]
        %v1072 = vld [vmem:[%s3 + $0x10] sm:$0xff]
        %v1073 = vld [vmem:[%s3 + $0x18] sm:$0xff]
        %v1074 = vld [vmem:[%s3 + $0x20] sm:$0xf]
        %v1075 = vld [vmem:[#allocation2 + $0x1] sm:$0xff]
        %v1076 = vld [vmem:[#allocation2 + $0x9] sm:$0xff]
        %s1077 = scalar_lea.vmem %s3, 40
        %v1078 = vld [vmem:[%s1077] sm:$0xff]
        %v1079 = vld [vmem:[%s1077 + $0x8] sm:$0xff]
        %v1080 = vld [vmem:[%s1077 + $0x10] sm:$0xff]
        %v1081 = vld [vmem:[%s1077 + $0x18] sm:$0xff]
        %v1082 = vld [vmem:[%s1077 + $0x20] sm:$0xf]
        %v1084 = vsel %vm1050, %v1075, 0
        %v1087 = vsel %vm1050, %v1076, 0
        %v1090 = vsel %vm1023, %v1082, 0
        %1092 = vmatpush.msra.mxu0 0.0
        %1093 = vmatpush.msra.mxu0 0.0
        %1094 = vmatpush.msra.mxu0 0.0
        %1095 = vmatpush.msra.mxu0 0.0
        %1096 = vmatpush.msra.mxu0 0.0
        %1097 = vmatpush.msra.mxu0 0.0
        %1098 = vmatpush.msra.mxu0 0.0
        %1099 = vmatpush.msra.mxu0 0.0
        %1100 = vmatpush.msra.mxu0 0.0
        %1101 = vmatpush.msra.mxu0 0.0
        %1102 = vmatpush.msra.mxu0 0.0
        %1103 = vmatpush.msra.mxu0 %v1090
        %1104 = vmatpush.msra.mxu0 %v1081
        %1105 = vmatpush.msra.mxu0 %v1080
        %1106 = vmatpush.msra.mxu0 %v1079
        %1107 = vmatpush.msra.mxu0 %v1078
        %1108 = vmatmul.f32.gmra.mxu0 %v1084
        %v1109 = vpop.f32.mrf.mxu0
        %v1110 = vadd.f32 0.0, %v1109
        %1111 = vmatmul.f32.gmra.mxu0 %v1087
        %v1112 = vpop.f32.mrf.mxu0
        %v1113 = vadd.f32 0.0, %v1112
        %1114 = vdwg.mxu0
        %v1116 = vsel %vm1050, %v1068, 0
        %v1119 = vsel %vm1050, %v1069, 0
        %v1122 = vsel %vm1023, %v1074, 0
        %1124 = vmatpush.msra.mxu0 0.0
        %1125 = vmatpush.msra.mxu0 0.0
        %1126 = vmatpush.msra.mxu0 0.0
        %1127 = vmatpush.msra.mxu0 0.0
        %1128 = vmatpush.msra.mxu0 0.0
        %1129 = vmatpush.msra.mxu0 0.0
        %1130 = vmatpush.msra.mxu0 0.0
        %1131 = vmatpush.msra.mxu0 0.0
        %1132 = vmatpush.msra.mxu0 0.0
        %1133 = vmatpush.msra.mxu0 0.0
        %1134 = vmatpush.msra.mxu0 0.0
        %1135 = vmatpush.msra.mxu0 %v1122
        %1136 = vmatpush.msra.mxu0 %v1073
        %1137 = vmatpush.msra.mxu0 %v1072
        %1138 = vmatpush.msra.mxu0 %v1071
        %1139 = vmatpush.msra.mxu0 %v1070
        %1140 = vmatmul.f32.gmra.mxu0 %v1116
        %v1141 = vpop.f32.mrf.mxu0
        %v1142 = vadd.f32 %v1110, %v1141
        %1143 = vmatmul.f32.gmra.mxu0 %v1119
        %v1144 = vpop.f32.mrf.mxu0
        %v1145 = vadd.f32 %v1113, %v1144
        %1146 = vdwg.mxu0
        %v1147 = vld [vmem:[#allocation2 + $0x2] sm:$0xff]
        %v1148 = vld [vmem:[#allocation2 + $0xa] sm:$0xff]
        %s1149 = scalar_lea.vmem %s3, 80
        %v1150 = vld [vmem:[%s1149] sm:$0xff]
        %v1151 = vld [vmem:[%s1149 + $0x8] sm:$0xff]
        %v1152 = vld [vmem:[%s1149 + $0x10] sm:$0xff]
        %v1153 = vld [vmem:[%s1149 + $0x18] sm:$0xff]
        %v1154 = vld [vmem:[%s1149 + $0x20] sm:$0xf]
        %v1156 = vsel %vm1050, %v1147, 0
        %v1159 = vsel %vm1050, %v1148, 0
        %v1162 = vsel %vm1023, %v1154, 0
        %1164 = vmatpush.msra.mxu0 0.0
        %1165 = vmatpush.msra.mxu0 0.0
        %1166 = vmatpush.msra.mxu0 0.0
        %1167 = vmatpush.msra.mxu0 0.0
        %1168 = vmatpush.msra.mxu0 0.0
        %1169 = vmatpush.msra.mxu0 0.0
        %1170 = vmatpush.msra.mxu0 0.0
        %1171 = vmatpush.msra.mxu0 0.0
        %1172 = vmatpush.msra.mxu0 0.0
        %1173 = vmatpush.msra.mxu0 0.0
        %1174 = vmatpush.msra.mxu0 0.0
        %1175 = vmatpush.msra.mxu0 %v1162
        %1176 = vmatpush.msra.mxu0 %v1153
        %1177 = vmatpush.msra.mxu0 %v1152
        %1178 = vmatpush.msra.mxu0 %v1151
        %1179 = vmatpush.msra.mxu0 %v1150
        %1180 = vmatmul.f32.gmra.mxu0 %v1156
        %v1181 = vpop.f32.mrf.mxu0
        %v1182 = vadd.f32 0.0, %v1181
        %1183 = vmatmul.f32.gmra.mxu0 %v1159
        %v1184 = vpop.f32.mrf.mxu0
        %v1185 = vadd.f32 0.0, %v1184
        %1186 = vdwg.mxu0
        %v1187 = vadd.f32 %v1142, %v1182
        %v1188 = vadd.f32 %v1145, %v1185
        %v1189 = vld [vmem:[#allocation5] sm:$0x1]
        %v1191 = vperm.slane %v1189, 0
        %v1193 = vadd.f32 %v1187, %v1191
        %v1194 = vadd.f32 %v1188, %v1191
        %v1195 = vld [vmem:[%s12] sm:$0xff]
        %v1196 = vld [vmem:[%s12 + $0x8] sm:$0xff]
        %v1197 = vld [vmem:[%s12 + $0x10] sm:$0xff]
        %v1198 = vld [vmem:[%s12 + $0x18] sm:$0xff]
        %v1199 = vld [vmem:[%s12 + $0x20] sm:$0xff]
        %v1200 = vld [vmem:[%s12 + $0x28] sm:$0xff]
        %v1201 = vld [vmem:[%s12 + $0x30] sm:$0xff]
        %v1202 = vld [vmem:[%s12 + $0x38] sm:$0xff]
        %v1203 = vld [vmem:[%s13] sm:$0xff]
        %v1204 = vld [vmem:[%s13 + $0x8] sm:$0xff]
        %v1205 = vld [vmem:[%s13 + $0x10] sm:$0xff]
        %v1206 = vld [vmem:[%s13 + $0x18] sm:$0xff]
        %v1207 = vld [vmem:[%s13 + $0x20] sm:$0xff]
        %v1208 = vld [vmem:[%s13 + $0x28] sm:$0xff]
        %v1209 = vld [vmem:[%s13 + $0x30] sm:$0xff]
        %v1210 = vld [vmem:[%s13 + $0x38] sm:$0xff]
        %v1211 = vld [vmem:[#allocation7] sm:$0xff]
        %v1212 = vld [vmem:[#allocation7 + $0x8] sm:$0xff]
        %v1213 = vld [vmem:[#allocation7 + $0x10] sm:$0xff]
        %v1214 = vld [vmem:[#allocation7 + $0x18] sm:$0xff]
        %v1215 = vld [vmem:[%s6] sm:$0x1]
        %v1217 = vperm.slane %v1215, 0
        %v1220 = vsel %vm1063, %v1193, 0
        %v1223 = vsel %vm1063, %v1194, 0
        %1225 = vmatpush.msra.mxu0 0.0
        %1226 = vmatpush.msra.mxu0 0.0
        %1227 = vmatpush.msra.mxu0 0.0
        %1228 = vmatpush.msra.mxu0 0.0
        %1229 = vmatpush.msra.mxu0 0.0
        %1230 = vmatpush.msra.mxu0 0.0
        %1231 = vmatpush.msra.mxu0 0.0
        %1232 = vmatpush.msra.mxu0 0.0
        %1233 = vmatpush.msra.mxu0 0.0
        %1234 = vmatpush.msra.mxu0 0.0
        %1235 = vmatpush.msra.mxu0 0.0
        %1236 = vmatpush.msra.mxu0 0.0
        %1237 = vmatpush.msra.mxu0 %v1214
        %1238 = vmatpush.msra.mxu0 %v1213
        %1239 = vmatpush.msra.mxu0 %v1212
        %1240 = vmatpush.msra.mxu0 %v1211
        %1241 = vmatmul.f32.gmra.mxu0 %v1220
        %v1242 = vpop.f32.mrf.mxu0
        %v1243 = vadd.f32 %v1217, %v1242
        %1244 = vmatmul.f32.gmra.mxu0 %v1223
        %v1245 = vpop.f32.mrf.mxu0
        %v1246 = vadd.f32 %v1217, %v1245
        %1247 = vdwg.mxu0
        %s1248 = scalar_lea.vmem [#allocation7], 32
        %v1249 = vld [vmem:[%s1248] sm:$0xff]
        %v1250 = vld [vmem:[%s1248 + $0x8] sm:$0xff]
        %v1251 = vld [vmem:[%s1248 + $0x10] sm:$0xff]
        %v1252 = vld [vmem:[%s1248 + $0x18] sm:$0xff]
        %s1253 = scalar_lea.vmem %s6, 1
        %v1254 = vld [vmem:[%s1253] sm:$0x1]
        %v1256 = vperm.slane %v1254, 0
        %1258 = vmatpush.msra.mxu0 0.0
        %1259 = vmatpush.msra.mxu0 0.0
        %1260 = vmatpush.msra.mxu0 0.0
        %1261 = vmatpush.msra.mxu0 0.0
        %1262 = vmatpush.msra.mxu0 0.0
        %1263 = vmatpush.msra.mxu0 0.0
        %1264 = vmatpush.msra.mxu0 0.0
        %1265 = vmatpush.msra.mxu0 0.0
        %1266 = vmatpush.msra.mxu0 0.0
        %1267 = vmatpush.msra.mxu0 0.0
        %1268 = vmatpush.msra.mxu0 0.0
        %1269 = vmatpush.msra.mxu0 0.0
        %1270 = vmatpush.msra.mxu0 %v1252
        %1271 = vmatpush.msra.mxu0 %v1251
        %1272 = vmatpush.msra.mxu0 %v1250
        %1273 = vmatpush.msra.mxu0 %v1249
        %1274 = vmatmul.f32.gmra.mxu0 %v1220
        %v1275 = vpop.f32.mrf.mxu0
        %v1276 = vadd.f32 %v1256, %v1275
        %1277 = vmatmul.f32.gmra.mxu0 %v1223
        %v1278 = vpop.f32.mrf.mxu0
        %v1279 = vadd.f32 %v1256, %v1278
        %1280 = vdwg.mxu0
        %s1281 = scalar_lea.vmem [#allocation7], 64
        %v1282 = vld [vmem:[%s1281] sm:$0xff]
        %v1283 = vld [vmem:[%s1281 + $0x8] sm:$0xff]
        %v1284 = vld [vmem:[%s1281 + $0x10] sm:$0xff]
        %v1285 = vld [vmem:[%s1281 + $0x18] sm:$0xff]
        %s1286 = scalar_lea.vmem %s6, 2
        %v1287 = vld [vmem:[%s1286] sm:$0x1]
        %v1289 = vperm.slane %v1287, 0
        %1291 = vmatpush.msra.mxu0 0.0
        %1292 = vmatpush.msra.mxu0 0.0
        %1293 = vmatpush.msra.mxu0 0.0
        %1294 = vmatpush.msra.mxu0 0.0
        %1295 = vmatpush.msra.mxu0 0.0
        %1296 = vmatpush.msra.mxu0 0.0
        %1297 = vmatpush.msra.mxu0 0.0
        %1298 = vmatpush.msra.mxu0 0.0
        %1299 = vmatpush.msra.mxu0 0.0
        %1300 = vmatpush.msra.mxu0 0.0
        %1301 = vmatpush.msra.mxu0 0.0
        %1302 = vmatpush.msra.mxu0 0.0
        %1303 = vmatpush.msra.mxu0 %v1285
        %1304 = vmatpush.msra.mxu0 %v1284
        %1305 = vmatpush.msra.mxu0 %v1283
        %1306 = vmatpush.msra.mxu0 %v1282
        %1307 = vmatmul.f32.gmra.mxu0 %v1220
        %v1308 = vpop.f32.mrf.mxu0
        %v1309 = vadd.f32 %v1289, %v1308
        %1310 = vmatmul.f32.gmra.mxu0 %v1223
        %v1311 = vpop.f32.mrf.mxu0
        %v1312 = vadd.f32 %v1289, %v1311
        %1313 = vdwg.mxu0
        %v1314 = vmul.f32 %v1276, %v1195
        %v1315 = vmul.f32 %v1279, %v1196
        %v1316 = vmul.f32 %v1276, %v1197
        %v1317 = vmul.f32 %v1279, %v1198
        %v1318 = vmul.f32 %v1276, %v1199
        %v1319 = vmul.f32 %v1279, %v1200
        %v1320 = vmul.f32 %v1276, %v1201
        %v1321 = vmul.f32 %v1279, %v1202
        %v1322 = vmul.f32 %v1309, %v1195
        %v1323 = vmul.f32 %v1312, %v1196
        %v1324 = vmul.f32 %v1309, %v1197
        %v1325 = vmul.f32 %v1312, %v1198
        %v1326 = vmul.f32 %v1309, %v1199
        %v1327 = vmul.f32 %v1312, %v1200
        %v1328 = vmul.f32 %v1309, %v1201
        %v1329 = vmul.f32 %v1312, %v1202
        %v1331 = vsel %vm1063, %v1243, 0
        %v1334 = vsel %vm1063, %v1246, 0
        %v1337 = vsel %vm1063, %v1314, 0
        %v1340 = vsel %vm1063, %v1315, 0
        %v1343 = vsel %vm1063, %v1316, 0
        %v1346 = vsel %vm1063, %v1317, 0
        %v1349 = vsel %vm1063, %v1318, 0
        %v1352 = vsel %vm1063, %v1319, 0
        %v1355 = vsel %vm1063, %v1320, 0
        %v1358 = vsel %vm1063, %v1321, 0
        %1360 = vmatpush.xpose.msra.mxu0 0.0
        %1361 = vmatpush.xpose.msra.mxu0 0.0
        %1362 = vmatpush.xpose.msra.mxu0 0.0
        %1363 = vmatpush.xpose.msra.mxu0 0.0
        %1364 = vmatpush.xpose.msra.mxu0 0.0
        %1365 = vmatpush.xpose.msra.mxu0 0.0
        %1366 = vmatpush.xpose.msra.mxu0 0.0
        %1367 = vmatpush.xpose.msra.mxu0 0.0
        %1368 = vmatpush.xpose.msra.mxu0 %v1358
        %1369 = vmatpush.xpose.msra.mxu0 %v1355
        %1370 = vmatpush.xpose.msra.mxu0 %v1352
        %1371 = vmatpush.xpose.msra.mxu0 %v1349
        %1372 = vmatpush.xpose.msra.mxu0 %v1346
        %1373 = vmatpush.xpose.msra.mxu0 %v1343
        %1374 = vmatpush.xpose.msra.mxu0 %v1340
        %1375 = vmatpush.xpose.msra.mxu0 %v1337
        %1376 = vmatmul.f32.gmra.mxu0 %v1331
        %v1377 = vpop.f32.mrf.mxu0
        %v1378 = vadd.f32 0.0, %v1377
        %1379 = vmatmul.f32.gmra.mxu0 %v1334
        %v1380 = vpop.f32.mrf.mxu0
        %v1381 = vadd.f32 0.0, %v1380
        %1382 = vdwg.mxu0
        %v1383 = vmul.f32 %v1378, 0.35355338
        %v1384 = vmul.f32 %v1381, 0.35355338
        %vm1385 = vcmask 523264
        %v1386 = vsel %vm1385, %v1383, -inf
        %1387 = vmax.xlane.f32.xlu0 %v1386
        %v1388 = vpop.xlane.xlu0 %1387
        %v1389 = vsel %vm1385, %v1384, -inf
        %1390 = vmax.xlane.f32.xlu0 %v1389
        %v1391 = vpop.xlane.xlu0 %1390
        %v1392 = vsub.f32 %v1383, %v1388
        %v1393 = vsub.f32 %v1384, %v1391
        %v1394 = vmul.f32 %v1392, 1.442695
        %v1395 = vpow.pop %v1394
        %v1396 = vmul.f32 %v1393, 1.442695
        %v1397 = vpow.pop %v1396
        %v1399 = vsel %vm1385, %v1395, 0
        %v1402 = vsel %vm1385, %v1397, 0
        %1404 = vmatpush.msra.mxu0 0.0
        %1405 = vmatpush.msra.mxu0 0.0
        %1406 = vmatpush.msra.mxu0 0.0
        %1407 = vmatpush.msra.mxu0 0.0
        %1408 = vmatpush.msra.mxu0 0.0
        %1409 = vmatpush.msra.mxu0 0.0
        %1410 = vmatpush.msra.mxu0 0.0
        %1411 = vmatpush.msra.mxu0 0.0
        %1412 = vmatpush.msra.mxu0 %v1210
        %1413 = vmatpush.msra.mxu0 %v1209
        %1414 = vmatpush.msra.mxu0 %v1208
        %1415 = vmatpush.msra.mxu0 %v1207
        %1416 = vmatpush.msra.mxu0 %v1206
        %1417 = vmatpush.msra.mxu0 %v1205
        %1418 = vmatpush.msra.mxu0 %v1204
        %1419 = vmatpush.msra.mxu0 %v1203
        %1420 = vmatmul.f32.gmra.mxu0 %v1399
        %v1421 = vpop.f32.mrf.mxu0
        %v1422 = vadd.f32 0.0, %v1421
        %1423 = vmatmul.f32.gmra.mxu0 %v1402
        %v1424 = vpop.f32.mrf.mxu0
        %v1425 = vadd.f32 0.0, %v1424
        %1426 = vdwg.mxu0
        %v1427 = vrcp.pop %v1422
        %v1428 = vrcp.pop %v1425
        %v1429 = vmul.f32 %v1395, %v1427
        %v1430 = vmul.f32 %v1397, %v1428
        %v1432 = vsel %vm1385, %v1429, 0
        %v1435 = vsel %vm1385, %v1430, 0
        %1437 = vmatpush.msra.mxu0 0.0
        %1438 = vmatpush.msra.mxu0 0.0
        %1439 = vmatpush.msra.mxu0 0.0
        %1440 = vmatpush.msra.mxu0 0.0
        %1441 = vmatpush.msra.mxu0 0.0
        %1442 = vmatpush.msra.mxu0 0.0
        %1443 = vmatpush.msra.mxu0 0.0
        %1444 = vmatpush.msra.mxu0 0.0
        %1445 = vmatpush.msra.mxu0 %v1329
        %1446 = vmatpush.msra.mxu0 %v1328
        %1447 = vmatpush.msra.mxu0 %v1327
        %1448 = vmatpush.msra.mxu0 %v1326
        %1449 = vmatpush.msra.mxu0 %v1325
        %1450 = vmatpush.msra.mxu0 %v1324
        %1451 = vmatpush.msra.mxu0 %v1323
        %1452 = vmatpush.msra.mxu0 %v1322
        %1453 = vmatmul.f32.gmra.mxu0 %v1432
        %v1454 = vpop.f32.mrf.mxu0
        %v1455 = vadd.f32 0.0, %v1454
        %1456 = vmatmul.f32.gmra.mxu0 %v1435
        %v1457 = vpop.f32.mrf.mxu0
        %v1458 = vadd.f32 0.0, %v1457
        %1459 = vdwg.mxu0
        %s1460 = scalar_lea.vmem [#allocation7], 96
        %v1461 = vld [vmem:[%s1460] sm:$0xff]
        %v1462 = vld [vmem:[%s1460 + $0x8] sm:$0xff]
        %v1463 = vld [vmem:[%s1460 + $0x10] sm:$0xff]
        %v1464 = vld [vmem:[%s1460 + $0x18] sm:$0xff]
        %s1465 = scalar_lea.vmem %s6, 3
        %v1466 = vld [vmem:[%s1465] sm:$0x1]
        %v1468 = vperm.slane %v1466, 0
        %v1471 = vsel %vm1063, %v1455, 0
        %v1474 = vsel %vm1063, %v1458, 0
        %1476 = vmatpush.msra.mxu0 0.0
        %1477 = vmatpush.msra.mxu0 0.0
        %1478 = vmatpush.msra.mxu0 0.0
        %1479 = vmatpush.msra.mxu0 0.0
        %1480 = vmatpush.msra.mxu0 0.0
        %1481 = vmatpush.msra.mxu0 0.0
        %1482 = vmatpush.msra.mxu0 0.0
        %1483 = vmatpush.msra.mxu0 0.0
        %1484 = vmatpush.msra.mxu0 0.0
        %1485 = vmatpush.msra.mxu0 0.0
        %1486 = vmatpush.msra.mxu0 0.0
        %1487 = vmatpush.msra.mxu0 0.0
        %1488 = vmatpush.msra.mxu0 %v1464
        %1489 = vmatpush.msra.mxu0 %v1463
        %1490 = vmatpush.msra.mxu0 %v1462
        %1491 = vmatpush.msra.mxu0 %v1461
        %1492 = vmatmul.f32.gmra.mxu0 %v1471
        %v1493 = vpop.f32.mrf.mxu0
        %v1494 = vadd.f32 %v1468, %v1493
        %1495 = vmatmul.f32.gmra.mxu0 %v1474
        %v1496 = vpop.f32.mrf.mxu0
        %v1497 = vadd.f32 %v1468, %v1496
        %1498 = vdwg.mxu0
        %v1499 = vadd.f32 %v1193, %v1494
        %v1500 = vadd.f32 %v1194, %v1497
        %v1501 = vld [vmem:[#allocation14] sm:$0x1]
        %s1502 = scalar_lea.vmem [#allocation14], 1
        %v1503 = vld [vmem:[%s1502] sm:$0x1]
        %v1504 = vsel %vm1063, %v1499, 0.0
        %1505 = vadd.xlane.f32.xlu0 %v1504
        %v1506 = vpop.xlane.xlu0 %1505
        %v1507 = vsel %vm1063, %v1500, 0.0
        %1508 = vadd.xlane.f32.xlu0 %v1507
        %v1509 = vpop.xlane.xlu0 %1508
        %v1510 = vrcp.pop 32.0
        %v1511 = vmul.f32 32.0, %v1510
        %v1512 = vsub.f32 1.0, %v1511
        %v1513 = vmul.f32 %v1510, %v1512
        %v1514 = vadd.f32 %v1510, %v1513
        %vm1515 = vweird.f32 %v1510
        %v1516 = vsel %vm1515, %v1510, %v1514
        %v1517 = vmul.f32 %v1506, %v1516
        %v1518 = vmul.f32 %v1509, %v1516
        %v1519 = vsub.f32 %v1499, %v1517
        %v1520 = vsub.f32 %v1500, %v1518
        %v1521 = vmul.f32 %v1519, %v1519
        %v1522 = vmul.f32 %v1520, %v1520
        %v1523 = vsel %vm1063, %v1521, 0.0
        %1524 = vadd.xlane.f32.xlu0 %v1523
        %v1525 = vpop.xlane.xlu0 %1524
        %v1526 = vsel %vm1063, %v1522, 0.0
        %1527 = vadd.xlane.f32.xlu0 %v1526
        %v1528 = vpop.xlane.xlu0 %1527
        %v1529 = vmul.f32 %v1525, %v1516
        %v1530 = vmul.f32 %v1528, %v1516
        %v1531 = vadd.f32 %v1529, 1e-05
        %v1532 = vadd.f32 %v1530, 1e-05
        %v1533 = vrsqrt.pop %v1531
        %v1534 = vmul.f32 %v1533, %v1531
        %v1535 = vmul.f32 %v1534, %v1533
        %v1536 = vmul.f32 0.5, %v1535
        %v1537 = vsub.f32 1.5, %v1536
        %v1538 = vmul.f32 %v1533, %v1537
        %vm1539 = vweird.f32 %v1531
        %vm1540 = vweird.f32 %v1533
        %vm1541 = vmor %vm1539, %vm1540
        %v1542 = vsel %vm1541, %v1533, %v1538
        %v1543 = vrsqrt.pop %v1532
        %v1544 = vmul.f32 %v1543, %v1532
        %v1545 = vmul.f32 %v1544, %v1543
        %v1546 = vmul.f32 0.5, %v1545
        %v1547 = vsub.f32 1.5, %v1546
        %v1548 = vmul.f32 %v1543, %v1547
        %vm1549 = vweird.f32 %v1532
        %vm1550 = vweird.f32 %v1543
        %vm1551 = vmor %vm1549, %vm1550
        %v1552 = vsel %vm1551, %v1543, %v1548
        %v1553 = vmul.f32 %v1519, %v1542
        %v1554 = vmul.f32 %v1520, %v1552
        %v1556 = vperm.slane %v1501, 0
        %v1558 = vmul.f32 %v1553, %v1556
        %v1559 = vmul.f32 %v1554, %v1556
        %v1561 = vperm.slane %v1503, 0
        %v1563 = vadd.f32 %v1558, %v1561
        %v1564 = vadd.f32 %v1559, %v1561
        %v1565 = vld [vmem:[#allocation8] sm:$0xff]
        %v1566 = vld [vmem:[#allocation8 + $0x8] sm:$0xff]
        %v1567 = vld [vmem:[#allocation8 + $0x10] sm:$0xff]
        %v1568 = vld [vmem:[#allocation8 + $0x18] sm:$0xff]
        %v1569 = vld [vmem:[#allocation10] sm:$0x1]
        %v1571 = vperm.slane %v1569, 0
        %v1574 = vsel %vm1063, %v1563, 0
        %v1577 = vsel %vm1063, %v1564, 0
        %1579 = vmatpush.msra.mxu0 0.0
        %1580 = vmatpush.msra.mxu0 0.0
        %1581 = vmatpush.msra.mxu0 0.0
        %1582 = vmatpush.msra.mxu0 0.0
        %1583 = vmatpush.msra.mxu0 0.0
        %1584 = vmatpush.msra.mxu0 0.0
        %1585 = vmatpush.msra.mxu0 0.0
        %1586 = vmatpush.msra.mxu0 0.0
        %1587 = vmatpush.msra.mxu0 0.0
        %1588 = vmatpush.msra.mxu0 0.0
        %1589 = vmatpush.msra.mxu0 0.0
        %1590 = vmatpush.msra.mxu0 0.0
        %1591 = vmatpush.msra.mxu0 %v1568
        %1592 = vmatpush.msra.mxu0 %v1567
        %1593 = vmatpush.msra.mxu0 %v1566
        %1594 = vmatpush.msra.mxu0 %v1565
        %1595 = vmatmul.f32.gmra.mxu0 %v1574
        %v1596 = vpop.f32.mrf.mxu0
        %v1597 = vadd.f32 %v1571, %v1596
        %1598 = vmatmul.f32.gmra.mxu0 %v1577
        %v1599 = vpop.f32.mrf.mxu0
        %v1600 = vadd.f32 %v1571, %v1599
        %1601 = vdwg.mxu0
        %v1602 = vmax.f32 %v1597, 0.0
        %v1603 = vmax.f32 %v1600, 0.0
        %v1604 = vld [vmem:[#allocation11] sm:$0xff]
        %v1605 = vld [vmem:[#allocation11 + $0x8] sm:$0xff]
        %v1606 = vld [vmem:[#allocation11 + $0x10] sm:$0xff]
        %v1607 = vld [vmem:[#allocation11 + $0x18] sm:$0xff]
        %v1608 = vld [vmem:[#allocation11 + $0x20] sm:$0xff]
        %v1609 = vld [vmem:[#allocation11 + $0x28] sm:$0xff]
        %v1610 = vld [vmem:[#allocation11 + $0x30] sm:$0xff]
        %v1611 = vld [vmem:[#allocation11 + $0x38] sm:$0xff]
        %v1612 = vld [vmem:[#allocation11 + $0x40] sm:$0xff]
        %v1613 = vld [vmem:[#allocation11 + $0x48] sm:$0xff]
        %v1614 = vld [vmem:[#allocation11 + $0x50] sm:$0xff]
        %v1615 = vld [vmem:[#allocation11 + $0x58] sm:$0xff]
        %v1616 = vld [vmem:[#allocation11 + $0x60] sm:$0xff]
        %v1617 = vld [vmem:[#allocation11 + $0x68] sm:$0xff]
        %v1618 = vld [vmem:[#allocation11 + $0x70] sm:$0xff]
        %v1619 = vld [vmem:[#allocation11 + $0x78] sm:$0xff]
        %v1620 = vld [vmem:[#allocation13] sm:$0x1]
        %v1622 = vperm.slane %v1620, 0
        %1624 = vmatpush.msra.mxu0 %v1619
        %1625 = vmatpush.msra.mxu0 %v1618
        %1626 = vmatpush.msra.mxu0 %v1617
        %1627 = vmatpush.msra.mxu0 %v1616
        %1628 = vmatpush.msra.mxu0 %v1615
        %1629 = vmatpush.msra.mxu0 %v1614
        %1630 = vmatpush.msra.mxu0 %v1613
        %1631 = vmatpush.msra.mxu0 %v1612
        %1632 = vmatpush.msra.mxu0 %v1611
        %1633 = vmatpush.msra.mxu0 %v1610
        %1634 = vmatpush.msra.mxu0 %v1609
        %1635 = vmatpush.msra.mxu0 %v1608
        %1636 = vmatpush.msra.mxu0 %v1607
        %1637 = vmatpush.msra.mxu0 %v1606
        %1638 = vmatpush.msra.mxu0 %v1605
        %1639 = vmatpush.msra.mxu0 %v1604
        %1640 = vmatmul.f32.gmra.mxu0 %v1602
        %v1641 = vpop.f32.mrf.mxu0
        %v1642 = vadd.f32 %v1622, %v1641
        %1643 = vmatmul.f32.gmra.mxu0 %v1603
        %v1644 = vpop.f32.mrf.mxu0
        %v1645 = vadd.f32 %v1622, %v1644
        %1646 = vdwg.mxu0
        %v1647 = vadd.f32 %v1563, %v1642
        %v1648 = vadd.f32 %v1564, %v1645
        %s1649 = scalar_lea.vmem [#allocation14], 2
        %v1650 = vld [vmem:[%s1649] sm:$0x1]
        %s1651 = scalar_lea.vmem [#allocation14], 3
        %v1652 = vld [vmem:[%s1651] sm:$0x1]
        %v1653 = vsel %vm1063, %v1647, 0.0
        %1654 = vadd.xlane.f32.xlu0 %v1653
        %v1655 = vpop.xlane.xlu0 %1654
        %v1656 = vsel %vm1063, %v1648, 0.0
        %1657 = vadd.xlane.f32.xlu0 %v1656
        %v1658 = vpop.xlane.xlu0 %1657
        %v1659 = vmul.f32 %v1655, %v1516
        %v1660 = vmul.f32 %v1658, %v1516
        %v1661 = vsub.f32 %v1647, %v1659
        %v1662 = vsub.f32 %v1648, %v1660
        %v1663 = vmul.f32 %v1661, %v1661
        %v1664 = vmul.f32 %v1662, %v1662
        %v1665 = vsel %vm1063, %v1663, 0.0
        %1666 = vadd.xlane.f32.xlu0 %v1665
        %v1667 = vpop.xlane.xlu0 %1666
        %v1668 = vsel %vm1063, %v1664, 0.0
        %1669 = vadd.xlane.f32.xlu0 %v1668
        %v1670 = vpop.xlane.xlu0 %1669
        %v1671 = vmul.f32 %v1667, %v1516
        %v1672 = vmul.f32 %v1670, %v1516
        %v1673 = vadd.f32 %v1671, 1e-05
        %v1674 = vadd.f32 %v1672, 1e-05
        %v1675 = vrsqrt.pop %v1673
        %v1676 = vmul.f32 %v1675, %v1673
        %v1677 = vmul.f32 %v1676, %v1675
        %v1678 = vmul.f32 0.5, %v1677
        %v1679 = vsub.f32 1.5, %v1678
        %v1680 = vmul.f32 %v1675, %v1679
        %vm1681 = vweird.f32 %v1673
        %vm1682 = vweird.f32 %v1675
        %vm1683 = vmor %vm1681, %vm1682
        %v1684 = vsel %vm1683, %v1675, %v1680
        %v1685 = vrsqrt.pop %v1674
        %v1686 = vmul.f32 %v1685, %v1674
        %v1687 = vmul.f32 %v1686, %v1685
        %v1688 = vmul.f32 0.5, %v1687
        %v1689 = vsub.f32 1.5, %v1688
        %v1690 = vmul.f32 %v1685, %v1689
        %vm1691 = vweird.f32 %v1674
        %vm1692 = vweird.f32 %v1685
        %vm1693 = vmor %vm1691, %vm1692
        %v1694 = vsel %vm1693, %v1685, %v1690
        %v1695 = vmul.f32 %v1661, %v1684
        %v1696 = vmul.f32 %v1662, %v1694
        %v1698 = vperm.slane %v1650, 0
        %v1700 = vmul.f32 %v1695, %v1698
        %v1701 = vmul.f32 %v1696, %v1698
        %v1703 = vperm.slane %v1652, 0
        %v1705 = vadd.f32 %v1700, %v1703
        %v1706 = vadd.f32 %v1701, %v1703
        %s1707 = scalar_lea.vmem [#allocation7], 128
        %v1708 = vld [vmem:[%s1707] sm:$0xff]
        %v1709 = vld [vmem:[%s1707 + $0x8] sm:$0xff]
        %v1710 = vld [vmem:[%s1707 + $0x10] sm:$0xff]
        %v1711 = vld [vmem:[%s1707 + $0x18] sm:$0xff]
        %s1712 = scalar_lea.vmem %s6, 4
        %v1713 = vld [vmem:[%s1712] sm:$0x1]
        %v1715 = vperm.slane %v1713, 0
        %v1718 = vsel %vm1063, %v1705, 0
        %v1721 = vsel %vm1063, %v1706, 0
        %1723 = vmatpush.msra.mxu0 0.0
        %1724 = vmatpush.msra.mxu0 0.0
        %1725 = vmatpush.msra.mxu0 0.0
        %1726 = vmatpush.msra.mxu0 0.0
        %1727 = vmatpush.msra.mxu0 0.0
        %1728 = vmatpush.msra.mxu0 0.0
        %1729 = vmatpush.msra.mxu0 0.0
        %1730 = vmatpush.msra.mxu0 0.0
        %1731 = vmatpush.msra.mxu0 0.0
        %1732 = vmatpush.msra.mxu0 0.0
        %1733 = vmatpush.msra.mxu0 0.0
        %1734 = vmatpush.msra.mxu0 0.0
        %1735 = vmatpush.msra.mxu0 %v1711
        %1736 = vmatpush.msra.mxu0 %v1710
        %1737 = vmatpush.msra.mxu0 %v1709
        %1738 = vmatpush.msra.mxu0 %v1708
        %1739 = vmatmul.f32.gmra.mxu0 %v1718
        %v1740 = vpop.f32.mrf.mxu0
        %v1741 = vadd.f32 %v1715, %v1740
        %1742 = vmatmul.f32.gmra.mxu0 %v1721
        %v1743 = vpop.f32.mrf.mxu0
        %v1744 = vadd.f32 %v1715, %v1743
        %1745 = vdwg.mxu0
        %s1746 = scalar_lea.vmem [#allocation7], 160
        %v1747 = vld [vmem:[%s1746] sm:$0xff]
        %v1748 = vld [vmem:[%s1746 + $0x8] sm:$0xff]
        %v1749 = vld [vmem:[%s1746 + $0x10] sm:$0xff]
        %v1750 = vld [vmem:[%s1746 + $0x18] sm:$0xff]
        %s1751 = scalar_lea.vmem %s6, 5
        %v1752 = vld [vmem:[%s1751] sm:$0x1]
        %v1754 = vperm.slane %v1752, 0
        %1756 = vmatpush.msra.mxu0 0.0
        %1757 = vmatpush.msra.mxu0 0.0
        %1758 = vmatpush.msra.mxu0 0.0
        %1759 = vmatpush.msra.mxu0 0.0
        %1760 = vmatpush.msra.mxu0 0.0
        %1761 = vmatpush.msra.mxu0 0.0
        %1762 = vmatpush.msra.mxu0 0.0
        %1763 = vmatpush.msra.mxu0 0.0
        %1764 = vmatpush.msra.mxu0 0.0
        %1765 = vmatpush.msra.mxu0 0.0
        %1766 = vmatpush.msra.mxu0 0.0
        %1767 = vmatpush.msra.mxu0 0.0
        %1768 = vmatpush.msra.mxu0 %v1750
        %1769 = vmatpush.msra.mxu0 %v1749
        %1770 = vmatpush.msra.mxu0 %v1748
        %1771 = vmatpush.msra.mxu0 %v1747
        %1772 = vmatmul.f32.gmra.mxu0 %v1718
        %v1773 = vpop.f32.mrf.mxu0
        %v1774 = vadd.f32 %v1754, %v1773
        %1775 = vmatmul.f32.gmra.mxu0 %v1721
        %v1776 = vpop.f32.mrf.mxu0
        %v1777 = vadd.f32 %v1754, %v1776
        %1778 = vdwg.mxu0
        %s1779 = scalar_lea.vmem [#allocation7], 192
        %v1780 = vld [vmem:[%s1779] sm:$0xff]
        %v1781 = vld [vmem:[%s1779 + $0x8] sm:$0xff]
        %v1782 = vld [vmem:[%s1779 + $0x10] sm:$0xff]
        %v1783 = vld [vmem:[%s1779 + $0x18] sm:$0xff]
        %s1784 = scalar_lea.vmem %s6, 6
        %v1785 = vld [vmem:[%s1784] sm:$0x1]
        %v1787 = vperm.slane %v1785, 0
        %1789 = vmatpush.msra.mxu0 0.0
        %1790 = vmatpush.msra.mxu0 0.0
        %1791 = vmatpush.msra.mxu0 0.0
        %1792 = vmatpush.msra.mxu0 0.0
        %1793 = vmatpush.msra.mxu0 0.0
        %1794 = vmatpush.msra.mxu0 0.0
        %1795 = vmatpush.msra.mxu0 0.0
        %1796 = vmatpush.msra.mxu0 0.0
        %1797 = vmatpush.msra.mxu0 0.0
        %1798 = vmatpush.msra.mxu0 0.0
        %1799 = vmatpush.msra.mxu0 0.0
        %1800 = vmatpush.msra.mxu0 0.0
        %1801 = vmatpush.msra.mxu0 %v1783
        %1802 = vmatpush.msra.mxu0 %v1782
        %1803 = vmatpush.msra.mxu0 %v1781
        %1804 = vmatpush.msra.mxu0 %v1780
        %1805 = vmatmul.f32.gmra.mxu0 %v1718
        %v1806 = vpop.f32.mrf.mxu0
        %v1807 = vadd.f32 %v1787, %v1806
        %1808 = vmatmul.f32.gmra.mxu0 %v1721
        %v1809 = vpop.f32.mrf.mxu0
        %v1810 = vadd.f32 %v1787, %v1809
        %1811 = vdwg.mxu0
        %v1812 = vmul.f32 %v1774, %v1195
        %v1813 = vmul.f32 %v1777, %v1196
        %v1814 = vmul.f32 %v1774, %v1197
        %v1815 = vmul.f32 %v1777, %v1198
        %v1816 = vmul.f32 %v1774, %v1199
        %v1817 = vmul.f32 %v1777, %v1200
        %v1818 = vmul.f32 %v1774, %v1201
        %v1819 = vmul.f32 %v1777, %v1202
        %v1820 = vmul.f32 %v1807, %v1195
        %v1821 = vmul.f32 %v1810, %v1196
        %v1822 = vmul.f32 %v1807, %v1197
        %v1823 = vmul.f32 %v1810, %v1198
        %v1824 = vmul.f32 %v1807, %v1199
        %v1825 = vmul.f32 %v1810, %v1200
        %v1826 = vmul.f32 %v1807, %v1201
        %v1827 = vmul.f32 %v1810, %v1202
        %v1829 = vsel %vm1063, %v1741, 0
        %v1832 = vsel %vm1063, %v1744, 0
        %v1835 = vsel %vm1063, %v1812, 0
        %v1838 = vsel %vm1063, %v1813, 0
        %v1841 = vsel %vm1063, %v1814, 0
        %v1844 = vsel %vm1063, %v1815, 0
        %v1847 = vsel %vm1063, %v1816, 0
        %v1850 = vsel %vm1063, %v1817, 0
        %v1853 = vsel %vm1063, %v1818, 0
        %v1856 = vsel %vm1063, %v1819, 0
        %1858 = vmatpush.xpose.msra.mxu0 0.0
        %1859 = vmatpush.xpose.msra.mxu0 0.0
        %1860 = vmatpush.xpose.msra.mxu0 0.0
        %1861 = vmatpush.xpose.msra.mxu0 0.0
        %1862 = vmatpush.xpose.msra.mxu0 0.0
        %1863 = vmatpush.xpose.msra.mxu0 0.0
        %1864 = vmatpush.xpose.msra.mxu0 0.0
        %1865 = vmatpush.xpose.msra.mxu0 0.0
        %1866 = vmatpush.xpose.msra.mxu0 %v1856
        %1867 = vmatpush.xpose.msra.mxu0 %v1853
        %1868 = vmatpush.xpose.msra.mxu0 %v1850
        %1869 = vmatpush.xpose.msra.mxu0 %v1847
        %1870 = vmatpush.xpose.msra.mxu0 %v1844
        %1871 = vmatpush.xpose.msra.mxu0 %v1841
        %1872 = vmatpush.xpose.msra.mxu0 %v1838
        %1873 = vmatpush.xpose.msra.mxu0 %v1835
        %1874 = vmatmul.f32.gmra.mxu0 %v1829
        %v1875 = vpop.f32.mrf.mxu0
        %v1876 = vadd.f32 0.0, %v1875
        %1877 = vmatmul.f32.gmra.mxu0 %v1832
        %v1878 = vpop.f32.mrf.mxu0
        %v1879 = vadd.f32 0.0, %v1878
        %1880 = vdwg.mxu0
        %v1881 = vmul.f32 %v1876, 0.35355338
        %v1882 = vmul.f32 %v1879, 0.35355338
        %v1883 = vsel %vm1385, %v1881, -inf
        %1884 = vmax.xlane.f32.xlu0 %v1883
        %v1885 = vpop.xlane.xlu0 %1884
        %v1886 = vsel %vm1385, %v1882, -inf
        %1887 = vmax.xlane.f32.xlu0 %v1886
        %v1888 = vpop.xlane.xlu0 %1887
        %v1889 = vsub.f32 %v1881, %v1885
        %v1890 = vsub.f32 %v1882, %v1888
        %v1891 = vmul.f32 %v1889, 1.442695
        %v1892 = vpow.pop %v1891
        %v1893 = vmul.f32 %v1890, 1.442695
        %v1894 = vpow.pop %v1893
        %v1896 = vsel %vm1385, %v1892, 0
        %v1899 = vsel %vm1385, %v1894, 0
        %1901 = vmatpush.msra.mxu0 0.0
        %1902 = vmatpush.msra.mxu0 0.0
        %1903 = vmatpush.msra.mxu0 0.0
        %1904 = vmatpush.msra.mxu0 0.0
        %1905 = vmatpush.msra.mxu0 0.0
        %1906 = vmatpush.msra.mxu0 0.0
        %1907 = vmatpush.msra.mxu0 0.0
        %1908 = vmatpush.msra.mxu0 0.0
        %1909 = vmatpush.msra.mxu0 %v1210
        %1910 = vmatpush.msra.mxu0 %v1209
        %1911 = vmatpush.msra.mxu0 %v1208
        %1912 = vmatpush.msra.mxu0 %v1207
        %1913 = vmatpush.msra.mxu0 %v1206
        %1914 = vmatpush.msra.mxu0 %v1205
        %1915 = vmatpush.msra.mxu0 %v1204
        %1916 = vmatpush.msra.mxu0 %v1203
        %1917 = vmatmul.f32.gmra.mxu0 %v1896
        %v1918 = vpop.f32.mrf.mxu0
        %v1919 = vadd.f32 0.0, %v1918
        %1920 = vmatmul.f32.gmra.mxu0 %v1899
        %v1921 = vpop.f32.mrf.mxu0
        %v1922 = vadd.f32 0.0, %v1921
        %1923 = vdwg.mxu0
        %v1924 = vrcp.pop %v1919
        %v1925 = vrcp.pop %v1922
        %v1926 = vmul.f32 %v1892, %v1924
        %v1927 = vmul.f32 %v1894, %v1925
        %v1929 = vsel %vm1385, %v1926, 0
        %v1932 = vsel %vm1385, %v1927, 0
        %1934 = vmatpush.msra.mxu0 0.0
        %1935 = vmatpush.msra.mxu0 0.0
        %1936 = vmatpush.msra.mxu0 0.0
        %1937 = vmatpush.msra.mxu0 0.0
        %1938 = vmatpush.msra.mxu0 0.0
        %1939 = vmatpush.msra.mxu0 0.0
        %1940 = vmatpush.msra.mxu0 0.0
        %1941 = vmatpush.msra.mxu0 0.0
        %1942 = vmatpush.msra.mxu0 %v1827
        %1943 = vmatpush.msra.mxu0 %v1826
        %1944 = vmatpush.msra.mxu0 %v1825
        %1945 = vmatpush.msra.mxu0 %v1824
        %1946 = vmatpush.msra.mxu0 %v1823
        %1947 = vmatpush.msra.mxu0 %v1822
        %1948 = vmatpush.msra.mxu0 %v1821
        %1949 = vmatpush.msra.mxu0 %v1820
        %1950 = vmatmul.f32.gmra.mxu0 %v1929
        %v1951 = vpop.f32.mrf.mxu0
        %v1952 = vadd.f32 0.0, %v1951
        %1953 = vmatmul.f32.gmra.mxu0 %v1932
        %v1954 = vpop.f32.mrf.mxu0
        %v1955 = vadd.f32 0.0, %v1954
        %1956 = vdwg.mxu0
        %s1957 = scalar_lea.vmem [#allocation7], 224
        %v1958 = vld [vmem:[%s1957] sm:$0xff]
        %v1959 = vld [vmem:[%s1957 + $0x8] sm:$0xff]
        %v1960 = vld [vmem:[%s1957 + $0x10] sm:$0xff]
        %v1961 = vld [vmem:[%s1957 + $0x18] sm:$0xff]
        %s1962 = scalar_lea.vmem %s6, 7
        %v1963 = vld [vmem:[%s1962] sm:$0x1]
        %v1965 = vperm.slane %v1963, 0
        %v1968 = vsel %vm1063, %v1952, 0
        %v1971 = vsel %vm1063, %v1955, 0
        %1973 = vmatpush.msra.mxu0 0.0
        %1974 = vmatpush.msra.mxu0 0.0
        %1975 = vmatpush.msra.mxu0 0.0
        %1976 = vmatpush.msra.mxu0 0.0
        %1977 = vmatpush.msra.mxu0 0.0
        %1978 = vmatpush.msra.mxu0 0.0
        %1979 = vmatpush.msra.mxu0 0.0
        %1980 = vmatpush.msra.mxu0 0.0
        %1981 = vmatpush.msra.mxu0 0.0
        %1982 = vmatpush.msra.mxu0 0.0
        %1983 = vmatpush.msra.mxu0 0.0
        %1984 = vmatpush.msra.mxu0 0.0
        %1985 = vmatpush.msra.mxu0 %v1961
        %1986 = vmatpush.msra.mxu0 %v1960
        %1987 = vmatpush.msra.mxu0 %v1959
        %1988 = vmatpush.msra.mxu0 %v1958
        %1989 = vmatmul.f32.gmra.mxu0 %v1968
        %v1990 = vpop.f32.mrf.mxu0
        %v1991 = vadd.f32 %v1965, %v1990
        %1992 = vmatmul.f32.gmra.mxu0 %v1971
        %v1993 = vpop.f32.mrf.mxu0
        %v1994 = vadd.f32 %v1965, %v1993
        %1995 = vdwg.mxu0
        %v1996 = vadd.f32 %v1705, %v1991
        %v1997 = vadd.f32 %v1706, %v1994
        %s1998 = scalar_lea.vmem [#allocation14], 4
        %v1999 = vld [vmem:[%s1998] sm:$0x1]
        %s2000 = scalar_lea.vmem [#allocation14], 5
        %v2001 = vld [vmem:[%s2000] sm:$0x1]
        %v2002 = vsel %vm1063, %v1996, 0.0
        %2003 = vadd.xlane.f32.xlu0 %v2002
        %v2004 = vpop.xlane.xlu0 %2003
        %v2005 = vsel %vm1063, %v1997, 0.0
        %2006 = vadd.xlane.f32.xlu0 %v2005
        %v2007 = vpop.xlane.xlu0 %2006
        %v2008 = vmul.f32 %v2004, %v1516
        %v2009 = vmul.f32 %v2007, %v1516
        %v2010 = vsub.f32 %v1996, %v2008
        %v2011 = vsub.f32 %v1997, %v2009
        %v2012 = vmul.f32 %v2010, %v2010
        %v2013 = vmul.f32 %v2011, %v2011
        %v2014 = vsel %vm1063, %v2012, 0.0
        %2015 = vadd.xlane.f32.xlu0 %v2014
        %v2016 = vpop.xlane.xlu0 %2015
        %v2017 = vsel %vm1063, %v2013, 0.0
        %2018 = vadd.xlane.f32.xlu0 %v2017
        %v2019 = vpop.xlane.xlu0 %2018
        %v2020 = vmul.f32 %v2016, %v1516
        %v2021 = vmul.f32 %v2019, %v1516
        %v2022 = vadd.f32 %v2020, 1e-05
        %v2023 = vadd.f32 %v2021, 1e-05
        %v2024 = vrsqrt.pop %v2022
        %v2025 = vmul.f32 %v2024, %v2022
        %v2026 = vmul.f32 %v2025, %v2024
        %v2027 = vmul.f32 0.5, %v2026
        %v2028 = vsub.f32 1.5, %v2027
        %v2029 = vmul.f32 %v2024, %v2028
        %vm2030 = vweird.f32 %v2022
        %vm2031 = vweird.f32 %v2024
        %vm2032 = vmor %vm2030, %vm2031
        %v2033 = vsel %vm2032, %v2024, %v2029
        %v2034 = vrsqrt.pop %v2023
        %v2035 = vmul.f32 %v2034, %v2023
        %v2036 = vmul.f32 %v2035, %v2034
        %v2037 = vmul.f32 0.5, %v2036
        %v2038 = vsub.f32 1.5, %v2037
        %v2039 = vmul.f32 %v2034, %v2038
        %vm2040 = vweird.f32 %v2023
        %vm2041 = vweird.f32 %v2034
        %vm2042 = vmor %vm2040, %vm2041
        %v2043 = vsel %vm2042, %v2034, %v2039
        %v2044 = vmul.f32 %v2010, %v2033
        %v2045 = vmul.f32 %v2011, %v2043
        %v2047 = vperm.slane %v1999, 0
        %v2049 = vmul.f32 %v2044, %v2047
        %v2050 = vmul.f32 %v2045, %v2047
        %v2052 = vperm.slane %v2001, 0
        %v2054 = vadd.f32 %v2049, %v2052
        %v2055 = vadd.f32 %v2050, %v2052
        %s2056 = scalar_lea.vmem [#allocation8], 32
        %v2057 = vld [vmem:[%s2056] sm:$0xff]
        %v2058 = vld [vmem:[%s2056 + $0x8] sm:$0xff]
        %v2059 = vld [vmem:[%s2056 + $0x10] sm:$0xff]
        %v2060 = vld [vmem:[%s2056 + $0x18] sm:$0xff]
        %s2061 = scalar_lea.vmem [#allocation10], 1
        %v2062 = vld [vmem:[%s2061] sm:$0x1]
        %v2064 = vperm.slane %v2062, 0
        %v2067 = vsel %vm1063, %v2054, 0
        %v2070 = vsel %vm1063, %v2055, 0
        %2072 = vmatpush.msra.mxu0 0.0
        %2073 = vmatpush.msra.mxu0 0.0
        %2074 = vmatpush.msra.mxu0 0.0
        %2075 = vmatpush.msra.mxu0 0.0
        %2076 = vmatpush.msra.mxu0 0.0
        %2077 = vmatpush.msra.mxu0 0.0
        %2078 = vmatpush.msra.mxu0 0.0
        %2079 = vmatpush.msra.mxu0 0.0
        %2080 = vmatpush.msra.mxu0 0.0
        %2081 = vmatpush.msra.mxu0 0.0
        %2082 = vmatpush.msra.mxu0 0.0
        %2083 = vmatpush.msra.mxu0 0.0
        %2084 = vmatpush.msra.mxu0 %v2060
        %2085 = vmatpush.msra.mxu0 %v2059
        %2086 = vmatpush.msra.mxu0 %v2058
        %2087 = vmatpush.msra.mxu0 %v2057
        %2088 = vmatmul.f32.gmra.mxu0 %v2067
        %v2089 = vpop.f32.mrf.mxu0
        %v2090 = vadd.f32 %v2064, %v2089
        %2091 = vmatmul.f32.gmra.mxu0 %v2070
        %v2092 = vpop.f32.mrf.mxu0
        %v2093 = vadd.f32 %v2064, %v2092
        %2094 = vdwg.mxu0
        %v2095 = vmax.f32 %v2090, 0.0
        %v2096 = vmax.f32 %v2093, 0.0
        %s2097 = scalar_lea.vmem [#allocation11], 128
        %v2098 = vld [vmem:[%s2097] sm:$0xff]
        %v2099 = vld [vmem:[%s2097 + $0x8] sm:$0xff]
        %v2100 = vld [vmem:[%s2097 + $0x10] sm:$0xff]
        %v2101 = vld [vmem:[%s2097 + $0x18] sm:$0xff]
        %v2102 = vld [vmem:[%s2097 + $0x20] sm:$0xff]
        %v2103 = vld [vmem:[%s2097 + $0x28] sm:$0xff]
        %v2104 = vld [vmem:[%s2097 + $0x30] sm:$0xff]
        %v2105 = vld [vmem:[%s2097 + $0x38] sm:$0xff]
        %v2106 = vld [vmem:[%s2097 + $0x40] sm:$0xff]
        %v2107 = vld [vmem:[%s2097 + $0x48] sm:$0xff]
        %v2108 = vld [vmem:[%s2097 + $0x50] sm:$0xff]
        %v2109 = vld [vmem:[%s2097 + $0x58] sm:$0xff]
        %v2110 = vld [vmem:[%s2097 + $0x60] sm:$0xff]
        %v2111 = vld [vmem:[%s2097 + $0x68] sm:$0xff]
        %v2112 = vld [vmem:[%s2097 + $0x70] sm:$0xff]
        %v2113 = vld [vmem:[%s2097 + $0x78] sm:$0xff]
        %s2114 = scalar_lea.vmem [#allocation13], 1
        %v2115 = vld [vmem:[%s2114] sm:$0x1]
        %v2117 = vperm.slane %v2115, 0
        %2119 = vmatpush.msra.mxu0 %v2113
        %2120 = vmatpush.msra.mxu0 %v2112
        %2121 = vmatpush.msra.mxu0 %v2111
        %2122 = vmatpush.msra.mxu0 %v2110
        %2123 = vmatpush.msra.mxu0 %v2109
        %2124 = vmatpush.msra.mxu0 %v2108
        %2125 = vmatpush.msra.mxu0 %v2107
        %2126 = vmatpush.msra.mxu0 %v2106
        %2127 = vmatpush.msra.mxu0 %v2105
        %2128 = vmatpush.msra.mxu0 %v2104
        %2129 = vmatpush.msra.mxu0 %v2103
        %2130 = vmatpush.msra.mxu0 %v2102
        %2131 = vmatpush.msra.mxu0 %v2101
        %2132 = vmatpush.msra.mxu0 %v2100
        %2133 = vmatpush.msra.mxu0 %v2099
        %2134 = vmatpush.msra.mxu0 %v2098
        %2135 = vmatmul.f32.gmra.mxu0 %v2095
        %v2136 = vpop.f32.mrf.mxu0
        %v2137 = vadd.f32 %v2117, %v2136
        %2138 = vmatmul.f32.gmra.mxu0 %v2096
        %v2139 = vpop.f32.mrf.mxu0
        %v2140 = vadd.f32 %v2117, %v2139
        %2141 = vdwg.mxu0
        %v2142 = vadd.f32 %v2054, %v2137
        %v2143 = vadd.f32 %v2055, %v2140
        %s2144 = scalar_lea.vmem [#allocation14], 6
        %v2145 = vld [vmem:[%s2144] sm:$0x1]
        %s2146 = scalar_lea.vmem [#allocation14], 7
        %v2147 = vld [vmem:[%s2146] sm:$0x1]
        %v2148 = vsel %vm1063, %v2142, 0.0
        %2149 = vadd.xlane.f32.xlu0 %v2148
        %v2150 = vpop.xlane.xlu0 %2149
        %v2151 = vsel %vm1063, %v2143, 0.0
        %2152 = vadd.xlane.f32.xlu0 %v2151
        %v2153 = vpop.xlane.xlu0 %2152
        %v2154 = vmul.f32 %v2150, %v1516
        %v2155 = vmul.f32 %v2153, %v1516
        %v2156 = vsub.f32 %v2142, %v2154
        %v2157 = vsub.f32 %v2143, %v2155
        %v2158 = vmul.f32 %v2156, %v2156
        %v2159 = vmul.f32 %v2157, %v2157
        %v2160 = vsel %vm1063, %v2158, 0.0
        %2161 = vadd.xlane.f32.xlu0 %v2160
        %v2162 = vpop.xlane.xlu0 %2161
        %v2163 = vsel %vm1063, %v2159, 0.0
        %2164 = vadd.xlane.f32.xlu0 %v2163
        %v2165 = vpop.xlane.xlu0 %2164
        %v2166 = vmul.f32 %v2162, %v1516
        %v2167 = vmul.f32 %v2165, %v1516
        %v2168 = vadd.f32 %v2166, 1e-05
        %v2169 = vadd.f32 %v2167, 1e-05
        %v2170 = vrsqrt.pop %v2168
        %v2171 = vmul.f32 %v2170, %v2168
        %v2172 = vmul.f32 %v2171, %v2170
        %v2173 = vmul.f32 0.5, %v2172
        %v2174 = vsub.f32 1.5, %v2173
        %v2175 = vmul.f32 %v2170, %v2174
        %vm2176 = vweird.f32 %v2168
        %vm2177 = vweird.f32 %v2170
        %vm2178 = vmor %vm2176, %vm2177
        %v2179 = vsel %vm2178, %v2170, %v2175
        %v2180 = vrsqrt.pop %v2169
        %v2181 = vmul.f32 %v2180, %v2169
        %v2182 = vmul.f32 %v2181, %v2180
        %v2183 = vmul.f32 0.5, %v2182
        %v2184 = vsub.f32 1.5, %v2183
        %v2185 = vmul.f32 %v2180, %v2184
        %vm2186 = vweird.f32 %v2169
        %vm2187 = vweird.f32 %v2180
        %vm2188 = vmor %vm2186, %vm2187
        %v2189 = vsel %vm2188, %v2180, %v2185
        %v2190 = vmul.f32 %v2156, %v2179
        %v2191 = vmul.f32 %v2157, %v2189
        %v2193 = vperm.slane %v2145, 0
        %v2195 = vmul.f32 %v2190, %v2193
        %v2196 = vmul.f32 %v2191, %v2193
        %v2198 = vperm.slane %v2147, 0
        %v2200 = vadd.f32 %v2195, %v2198
        %v2201 = vadd.f32 %v2196, %v2198
        %2202 = vst.msk [vmem:[#allocation2 + $0x1] sm:$0xff] %vm1063, %v2200
        %2203 = vst.msk [vmem:[#allocation2 + $0x9] sm:$0xff] %vm1063, %v2201
        %v2204 = vld [vmem:[#allocation2] sm:$0xff]
        %v2205 = vld [vmem:[#allocation2 + $0x8] sm:$0xff]
        %v2206 = vld [vmem:[#allocation16] sm:$0xff]
        %v2207 = vld [vmem:[#allocation16 + $0x8] sm:$0xff]
        %v2208 = vld [vmem:[#allocation16 + $0x10] sm:$0xff]
        %v2209 = vld [vmem:[#allocation16 + $0x18] sm:$0xff]
        %v2210 = vld [vmem:[#allocation2 + $0x1] sm:$0xff]
        %v2211 = vld [vmem:[#allocation2 + $0x9] sm:$0xff]
        %s2212 = scalar_lea.vmem [#allocation16], 32
        %v2213 = vld [vmem:[%s2212] sm:$0xff]
        %v2214 = vld [vmem:[%s2212 + $0x8] sm:$0xff]
        %v2215 = vld [vmem:[%s2212 + $0x10] sm:$0xff]
        %v2216 = vld [vmem:[%s2212 + $0x18] sm:$0xff]
        %v2218 = vsel %vm1063, %v2210, 0
        %v2221 = vsel %vm1063, %v2211, 0
        %2223 = vmatpush.msra.mxu0 0.0
        %2224 = vmatpush.msra.mxu0 0.0
        %2225 = vmatpush.msra.mxu0 0.0
        %2226 = vmatpush.msra.mxu0 0.0
        %2227 = vmatpush.msra.mxu0 0.0
        %2228 = vmatpush.msra.mxu0 0.0
        %2229 = vmatpush.msra.mxu0 0.0
        %2230 = vmatpush.msra.mxu0 0.0
        %2231 = vmatpush.msra.mxu0 0.0
        %2232 = vmatpush.msra.mxu0 0.0
        %2233 = vmatpush.msra.mxu0 0.0
        %2234 = vmatpush.msra.mxu0 0.0
        %2235 = vmatpush.msra.mxu0 %v2216
        %2236 = vmatpush.msra.mxu0 %v2215
        %2237 = vmatpush.msra.mxu0 %v2214
        %2238 = vmatpush.msra.mxu0 %v2213
        %2239 = vmatmul.f32.gmra.mxu0 %v2218
        %v2240 = vpop.f32.mrf.mxu0
        %v2241 = vadd.f32 0.0, %v2240
        %2242 = vmatmul.f32.gmra.mxu0 %v2221
        %v2243 = vpop.f32.mrf.mxu0
        %v2244 = vadd.f32 0.0, %v2243
        %2245 = vdwg.mxu0
        %v2247 = vsel %vm1063, %v2204, 0
        %v2250 = vsel %vm1063, %v2205, 0
        %2252 = vmatpush.msra.mxu0 0.0
        %2253 = vmatpush.msra.mxu0 0.0
        %2254 = vmatpush.msra.mxu0 0.0
        %2255 = vmatpush.msra.mxu0 0.0
        %2256 = vmatpush.msra.mxu0 0.0
        %2257 = vmatpush.msra.mxu0 0.0
        %2258 = vmatpush.msra.mxu0 0.0
        %2259 = vmatpush.msra.mxu0 0.0
        %2260 = vmatpush.msra.mxu0 0.0
        %2261 = vmatpush.msra.mxu0 0.0
        %2262 = vmatpush.msra.mxu0 0.0
        %2263 = vmatpush.msra.mxu0 0.0
        %2264 = vmatpush.msra.mxu0 %v2209
        %2265 = vmatpush.msra.mxu0 %v2208
        %2266 = vmatpush.msra.mxu0 %v2207
        %2267 = vmatpush.msra.mxu0 %v2206
        %2268 = vmatmul.f32.gmra.mxu0 %v2247
        %v2269 = vpop.f32.mrf.mxu0
        %v2270 = vadd.f32 %v2241, %v2269
        %2271 = vmatmul.f32.gmra.mxu0 %v2250
        %v2272 = vpop.f32.mrf.mxu0
        %v2273 = vadd.f32 %v2244, %v2272
        %2274 = vdwg.mxu0
        %v2275 = vld [vmem:[#allocation2 + $0x2] sm:$0xff]
        %v2276 = vld [vmem:[#allocation2 + $0xa] sm:$0xff]
        %s2277 = scalar_lea.vmem [#allocation16], 64
        %v2278 = vld [vmem:[%s2277] sm:$0xff]
        %v2279 = vld [vmem:[%s2277 + $0x8] sm:$0xff]
        %v2280 = vld [vmem:[%s2277 + $0x10] sm:$0xff]
        %v2281 = vld [vmem:[%s2277 + $0x18] sm:$0xff]
        %v2283 = vsel %vm1063, %v2275, 0
        %v2286 = vsel %vm1063, %v2276, 0
        %2288 = vmatpush.msra.mxu0 0.0
        %2289 = vmatpush.msra.mxu0 0.0
        %2290 = vmatpush.msra.mxu0 0.0
        %2291 = vmatpush.msra.mxu0 0.0
        %2292 = vmatpush.msra.mxu0 0.0
        %2293 = vmatpush.msra.mxu0 0.0
        %2294 = vmatpush.msra.mxu0 0.0
        %2295 = vmatpush.msra.mxu0 0.0
        %2296 = vmatpush.msra.mxu0 0.0
        %2297 = vmatpush.msra.mxu0 0.0
        %2298 = vmatpush.msra.mxu0 0.0
        %2299 = vmatpush.msra.mxu0 0.0
        %2300 = vmatpush.msra.mxu0 %v2281
        %2301 = vmatpush.msra.mxu0 %v2280
        %2302 = vmatpush.msra.mxu0 %v2279
        %2303 = vmatpush.msra.mxu0 %v2278
        %2304 = vmatmul.f32.gmra.mxu0 %v2283
        %v2305 = vpop.f32.mrf.mxu0
        %v2306 = vadd.f32 0.0, %v2305
        %2307 = vmatmul.f32.gmra.mxu0 %v2286
        %v2308 = vpop.f32.mrf.mxu0
        %v2309 = vadd.f32 0.0, %v2308
        %2310 = vdwg.mxu0
        %v2311 = vadd.f32 %v2270, %v2306
        %v2312 = vadd.f32 %v2273, %v2309
        %v2313 = vld [vmem:[#allocation17] sm:$0x1]
        %v2315 = vperm.slane %v2313, 0
        %v2317 = vadd.f32 %v2311, %v2315
        %v2318 = vadd.f32 %v2312, %v2315
        %v2319 = vmax.f32 %v2317, 0.0
        %v2320 = vmax.f32 %v2318, 0.0
        %v2321 = vld [vmem:[%s16] sm:$0xff]
        %v2322 = vld [vmem:[%s16 + $0x8] sm:$0xff]
        %v2323 = vld [vmem:[%s16 + $0x10] sm:$0xff]
        %v2324 = vld [vmem:[%s16 + $0x18] sm:$0xff]
        %v2325 = vld [vmem:[#allocation19] sm:$0x1]
        %v2327 = vperm.slane %v2325, 0
        %v2330 = vsel %vm1063, %v2319, 0
        %v2333 = vsel %vm1063, %v2320, 0
        %2335 = vmatpush.msra.mxu0 0.0
        %2336 = vmatpush.msra.mxu0 0.0
        %2337 = vmatpush.msra.mxu0 0.0
        %2338 = vmatpush.msra.mxu0 0.0
        %2339 = vmatpush.msra.mxu0 0.0
        %2340 = vmatpush.msra.mxu0 0.0
        %2341 = vmatpush.msra.mxu0 0.0
        %2342 = vmatpush.msra.mxu0 0.0
        %2343 = vmatpush.msra.mxu0 0.0
        %2344 = vmatpush.msra.mxu0 0.0
        %2345 = vmatpush.msra.mxu0 0.0
        %2346 = vmatpush.msra.mxu0 0.0
        %2347 = vmatpush.msra.mxu0 %v2324
        %2348 = vmatpush.msra.mxu0 %v2323
        %2349 = vmatpush.msra.mxu0 %v2322
        %2350 = vmatpush.msra.mxu0 %v2321
        %2351 = vmatmul.f32.gmra.mxu0 %v2330
        %v2352 = vpop.f32.mrf.mxu0
        %v2353 = vadd.f32 %v2327, %v2352
        %2354 = vmatmul.f32.gmra.mxu0 %v2333
        %v2355 = vpop.f32.mrf.mxu0
        %v2356 = vadd.f32 %v2327, %v2355
        %2357 = vdwg.mxu0
        %v2358 = vld [vmem:[#allocation20] sm:$0xff]
        %v2359 = vld [vmem:[#allocation20 + $0x8] sm:$0xff]
        %v2360 = vld [vmem:[#allocation20 + $0x10] sm:$0xff]
        %v2361 = vld [vmem:[#allocation20 + $0x18] sm:$0xff]
        %v2362 = vld [vmem:[#allocation20 + $0x20] sm:$0xff]
        %v2363 = vld [vmem:[#allocation20 + $0x28] sm:$0xff]
        %v2364 = vld [vmem:[#allocation20 + $0x30] sm:$0xff]
        %v2365 = vld [vmem:[#allocation20 + $0x38] sm:$0xff]
        %v2366 = vmul.f32 %v2353, %v2353
        %v2367 = vmul.f32 %v2356, %v2356
        %v2368 = vsel %vm1063, %v2366, 0.0
        %2369 = vadd.xlane.f32.xlu0 %v2368
        %v2370 = vpop.xlane.xlu0 %2369
        %v2371 = vsel %vm1063, %v2367, 0.0
        %2372 = vadd.xlane.f32.xlu0 %v2371
        %v2373 = vpop.xlane.xlu0 %2372
        %v2375 = vsel %vm1063, %v2353, 0
        %v2378 = vsel %vm1063, %v2356, 0
        %v2381 = vsel %vm1063, %v2358, 0
        %v2384 = vsel %vm1063, %v2359, 0
        %v2387 = vsel %vm1063, %v2360, 0
        %v2390 = vsel %vm1063, %v2361, 0
        %v2393 = vsel %vm1063, %v2362, 0
        %v2396 = vsel %vm1063, %v2363, 0
        %v2399 = vsel %vm1063, %v2364, 0
        %v2402 = vsel %vm1063, %v2365, 0
        %2404 = vmatpush.xpose.msra.mxu0 0.0
        %2405 = vmatpush.xpose.msra.mxu0 0.0
        %2406 = vmatpush.xpose.msra.mxu0 0.0
        %2407 = vmatpush.xpose.msra.mxu0 0.0
        %2408 = vmatpush.xpose.msra.mxu0 0.0
        %2409 = vmatpush.xpose.msra.mxu0 0.0
        %2410 = vmatpush.xpose.msra.mxu0 0.0
        %2411 = vmatpush.xpose.msra.mxu0 0.0
        %2412 = vmatpush.xpose.msra.mxu0 %v2402
        %2413 = vmatpush.xpose.msra.mxu0 %v2399
        %2414 = vmatpush.xpose.msra.mxu0 %v2396
        %2415 = vmatpush.xpose.msra.mxu0 %v2393
        %2416 = vmatpush.xpose.msra.mxu0 %v2390
        %2417 = vmatpush.xpose.msra.mxu0 %v2387
        %2418 = vmatpush.xpose.msra.mxu0 %v2384
        %2419 = vmatpush.xpose.msra.mxu0 %v2381
        %2420 = vmatmul.f32.gmra.mxu0 %v2375
        %v2421 = vpop.f32.mrf.mxu0
        %v2422 = vadd.f32 0.0, %v2421
        %2423 = vmatmul.f32.gmra.mxu0 %v2378
        %v2424 = vpop.f32.mrf.mxu0
        %v2425 = vadd.f32 0.0, %v2424
        %2426 = vdwg.mxu0
        %v2427 = vmul.f32 %v2422, 2.0
        %v2428 = vmul.f32 %v2425, 2.0
        %v2429 = vsub.f32 %v2370, %v2427
        %v2430 = vsub.f32 %v2373, %v2428
        %v2431 = vld [vmem:[%s19] sm:$0x1]
        %v2433 = vperm.slane %v2431, 0
        %v2435 = vadd.f32 %v2429, %v2433
        %v2436 = vadd.f32 %v2430, %v2433
        %v2437 = vsel %vm1385, %v2435, inf
        %2438 = vmin.xlane.f32.xlu0 %v2437
        %v2439 = vpop.xlane.xlu0 %2438
        %v2440 = vsel %vm1385, %v2436, inf
        %2441 = vmin.xlane.f32.xlu0 %v2440
        %v2442 = vpop.xlane.xlu0 %2441
        %v2443 = vlaneseq
        %v2444 = vand.u32 %v2443, 127
        %vm2445 = vcmp.le.f32.partialorder %v2435, %v2439
        %vm2446 = vcmp.le.f32.partialorder %v2436, %v2442
        %v2447 = vsel %vm2445, %v2444, 64
        %v2448 = vsel %vm2446, %v2444, 64
        %v2449 = vsel %vm1385, %v2447, 2147483647
        %v2450 = vand.u32 %v2449, 65535
        %v2451 = vshra.s32 %v2449, 16
        %v2452 = vcvt.s32.f32 %v2450
        %v2453 = vcvt.s32.f32 %v2451
        %2454 = vmin.xlane.f32.xlu0 %v2453
        %v2455 = vpop.xlane.xlu0 %2454
        %vm2456 = vcmp.eq.f32.partialorder %v2453, %v2455
        %v2457 = vsel %vm2456, %v2452, inf
        %2458 = vmin.xlane.f32.xlu0 %v2457
        %v2459 = vpop.xlane.xlu0 %2458
        %v2460 = vcvt.f32.s32 %v2459
        %v2461 = vcvt.f32.s32 %v2455
        %v2462 = vshll.u32 %v2461, 16
        %v2463 = vadd.s32 %v2462, %v2460
        %v2464 = vsel %vm1385, %v2448, 2147483647
        %v2465 = vand.u32 %v2464, 65535
        %v2466 = vshra.s32 %v2464, 16
        %v2467 = vcvt.s32.f32 %v2465
        %v2468 = vcvt.s32.f32 %v2466
        %2469 = vmin.xlane.f32.xlu0 %v2468
        %v2470 = vpop.xlane.xlu0 %2469
        %vm2471 = vcmp.eq.f32.partialorder %v2468, %v2470
        %v2472 = vsel %vm2471, %v2467, inf
        %2473 = vmin.xlane.f32.xlu0 %v2472
        %v2474 = vpop.xlane.xlu0 %2473
        %v2475 = vcvt.f32.s32 %v2474
        %v2476 = vcvt.f32.s32 %v2470
        %v2477 = vshll.u32 %v2476, 16
        %v2478 = vadd.s32 %v2477, %v2475
        %vm2479 = vcmp.eq.s32.totalorder %v2444, %v2463
        %vm2480 = vcmp.eq.s32.totalorder %v2444, %v2478
        %v2481 = vsel %vm2479, 1, 0
        %v2482 = vsel %vm2480, 1, 0
        %v2483 = vcvt.s32.f32 %v2481
        %v2484 = vcvt.s32.f32 %v2482
        %v2486 = vsel %vm1385, %v2483, 0
        %v2489 = vsel %vm1385, %v2484, 0
        %2491 = vmatpush.msra.mxu0 0.0
        %2492 = vmatpush.msra.mxu0 0.0
        %2493 = vmatpush.msra.mxu0 0.0
        %2494 = vmatpush.msra.mxu0 0.0
        %2495 = vmatpush.msra.mxu0 0.0
        %2496 = vmatpush.msra.mxu0 0.0
        %2497 = vmatpush.msra.mxu0 0.0
        %2498 = vmatpush.msra.mxu0 0.0
        %2499 = vmatpush.msra.mxu0 %v2365
        %2500 = vmatpush.msra.mxu0 %v2364
        %2501 = vmatpush.msra.mxu0 %v2363
        %2502 = vmatpush.msra.mxu0 %v2362
        %2503 = vmatpush.msra.mxu0 %v2361
        %2504 = vmatpush.msra.mxu0 %v2360
        %2505 = vmatpush.msra.mxu0 %v2359
        %2506 = vmatpush.msra.mxu0 %v2358
        %2507 = vmatmul.f32.gmra.mxu0 %v2486
        %v2508 = vpop.f32.mrf.mxu0
        %v2509 = vadd.f32 0.0, %v2508
        %2510 = vmatmul.f32.gmra.mxu0 %v2489
        %v2511 = vpop.f32.mrf.mxu0
        %v2512 = vadd.f32 0.0, %v2511
        %2513 = vdwg.mxu0
        %v2514 = vsub.f32 %v2509, %v2353
        %v2515 = vsub.f32 %v2512, %v2356
        %v2516 = vmul.f32 %v2514, %v2514
        %v2517 = vmul.f32 %v2515, %v2515
        %v2518 = vsel %vm1063, %v2516, 0.0
        %2519 = vadd.xlane.f32.xlu0 %v2518
        %v2520 = vpop.xlane.xlu0 %2519
        %v2521 = vsel %vm1063, %v2517, 0.0
        %2522 = vadd.xlane.f32.xlu0 %v2521
        %v2523 = vpop.xlane.xlu0 %2522
        %v2524 = vadd.f32 %v2520, %v2523
        %v2525 = vrot.slane %v2524, 4
        %v2526 = vadd.f32 %v2524, %v2525
        %v2527 = vrot.slane %v2526, 2
        %v2528 = vadd.f32 %v2526, %v2527
        %v2529 = vrot.slane %v2528, 1
        %v2530 = vadd.f32 %v2528, %v2529
        %v2531 = vld [vmem:[#allocation22] sm:$0xff]
        %v2532 = vld [vmem:[#allocation22 + $0x8] sm:$0xff]
        %v2533 = vld [vmem:[#allocation22 + $0x10] sm:$0xff]
        %v2534 = vld [vmem:[#allocation22 + $0x18] sm:$0xff]
        %v2535 = vld [vmem:[#allocation23] sm:$0x1]
        %v2537 = vperm.slane %v2535, 0
        %v2540 = vsel %vm1063, %v2509, 0
        %v2543 = vsel %vm1063, %v2512, 0
        %2545 = vmatpush.msra.mxu0 0.0
        %2546 = vmatpush.msra.mxu0 0.0
        %2547 = vmatpush.msra.mxu0 0.0
        %2548 = vmatpush.msra.mxu0 0.0
        %2549 = vmatpush.msra.mxu0 0.0
        %2550 = vmatpush.msra.mxu0 0.0
        %2551 = vmatpush.msra.mxu0 0.0
        %2552 = vmatpush.msra.mxu0 0.0
        %2553 = vmatpush.msra.mxu0 0.0
        %2554 = vmatpush.msra.mxu0 0.0
        %2555 = vmatpush.msra.mxu0 0.0
        %2556 = vmatpush.msra.mxu0 0.0
        %2557 = vmatpush.msra.mxu0 %v2534
        %2558 = vmatpush.msra.mxu0 %v2533
        %2559 = vmatpush.msra.mxu0 %v2532
        %2560 = vmatpush.msra.mxu0 %v2531
        %2561 = vmatmul.f32.gmra.mxu0 %v2540
        %v2562 = vpop.f32.mrf.mxu0
        %v2563 = vadd.f32 %v2537, %v2562
        %2564 = vmatmul.f32.gmra.mxu0 %v2543
        %v2565 = vpop.f32.mrf.mxu0
        %v2566 = vadd.f32 %v2537, %v2565
        %2567 = vdwg.mxu0
        %2568 = vst.msk [vmem:[#allocation2 + $0x1] sm:$0xff] %vm1063, %v2563
        %2569 = vst.msk [vmem:[#allocation2 + $0x9] sm:$0xff] %vm1063, %v2566
        %v2570 = vld [vmem:[#allocation2] sm:$0xff]
        %v2571 = vld [vmem:[#allocation2 + $0x8] sm:$0xff]
        %v2572 = vld [vmem:[#allocation25] sm:$0xff]
        %v2573 = vld [vmem:[#allocation25 + $0x8] sm:$0xff]
        %v2574 = vld [vmem:[#allocation25 + $0x10] sm:$0xff]
        %v2575 = vld [vmem:[#allocation25 + $0x18] sm:$0xff]
        %v2576 = vld [vmem:[#allocation2 + $0x1] sm:$0xff]
        %v2577 = vld [vmem:[#allocation2 + $0x9] sm:$0xff]
        %s2578 = scalar_lea.vmem [#allocation25], 32
        %v2579 = vld [vmem:[%s2578] sm:$0xff]
        %v2580 = vld [vmem:[%s2578 + $0x8] sm:$0xff]
        %v2581 = vld [vmem:[%s2578 + $0x10] sm:$0xff]
        %v2582 = vld [vmem:[%s2578 + $0x18] sm:$0xff]
        %v2584 = vsel %vm1063, %v2576, 0
        %v2587 = vsel %vm1063, %v2577, 0
        %2589 = vmatpush.msra.mxu0 0.0
        %2590 = vmatpush.msra.mxu0 0.0
        %2591 = vmatpush.msra.mxu0 0.0
        %2592 = vmatpush.msra.mxu0 0.0
        %2593 = vmatpush.msra.mxu0 0.0
        %2594 = vmatpush.msra.mxu0 0.0
        %2595 = vmatpush.msra.mxu0 0.0
        %2596 = vmatpush.msra.mxu0 0.0
        %2597 = vmatpush.msra.mxu0 0.0
        %2598 = vmatpush.msra.mxu0 0.0
        %2599 = vmatpush.msra.mxu0 0.0
        %2600 = vmatpush.msra.mxu0 0.0
        %2601 = vmatpush.msra.mxu0 %v2582
        %2602 = vmatpush.msra.mxu0 %v2581
        %2603 = vmatpush.msra.mxu0 %v2580
        %2604 = vmatpush.msra.mxu0 %v2579
        %2605 = vmatmul.f32.gmra.mxu0 %v2584
        %v2606 = vpop.f32.mrf.mxu0
        %v2607 = vadd.f32 0.0, %v2606
        %2608 = vmatmul.f32.gmra.mxu0 %v2587
        %v2609 = vpop.f32.mrf.mxu0
        %v2610 = vadd.f32 0.0, %v2609
        %2611 = vdwg.mxu0
        %v2613 = vsel %vm1063, %v2570, 0
        %v2616 = vsel %vm1063, %v2571, 0
        %2618 = vmatpush.msra.mxu0 0.0
        %2619 = vmatpush.msra.mxu0 0.0
        %2620 = vmatpush.msra.mxu0 0.0
        %2621 = vmatpush.msra.mxu0 0.0
        %2622 = vmatpush.msra.mxu0 0.0
        %2623 = vmatpush.msra.mxu0 0.0
        %2624 = vmatpush.msra.mxu0 0.0
        %2625 = vmatpush.msra.mxu0 0.0
        %2626 = vmatpush.msra.mxu0 0.0
        %2627 = vmatpush.msra.mxu0 0.0
        %2628 = vmatpush.msra.mxu0 0.0
        %2629 = vmatpush.msra.mxu0 0.0
        %2630 = vmatpush.msra.mxu0 %v2575
        %2631 = vmatpush.msra.mxu0 %v2574
        %2632 = vmatpush.msra.mxu0 %v2573
        %2633 = vmatpush.msra.mxu0 %v2572
        %2634 = vmatmul.f32.gmra.mxu0 %v2613
        %v2635 = vpop.f32.mrf.mxu0
        %v2636 = vadd.f32 %v2607, %v2635
        %2637 = vmatmul.f32.gmra.mxu0 %v2616
        %v2638 = vpop.f32.mrf.mxu0
        %v2639 = vadd.f32 %v2610, %v2638
        %2640 = vdwg.mxu0
        %v2641 = vld [vmem:[#allocation2 + $0x2] sm:$0xff]
        %v2642 = vld [vmem:[#allocation2 + $0xa] sm:$0xff]
        %s2643 = scalar_lea.vmem [#allocation25], 64
        %v2644 = vld [vmem:[%s2643] sm:$0xff]
        %v2645 = vld [vmem:[%s2643 + $0x8] sm:$0xff]
        %v2646 = vld [vmem:[%s2643 + $0x10] sm:$0xff]
        %v2647 = vld [vmem:[%s2643 + $0x18] sm:$0xff]
        %v2649 = vsel %vm1063, %v2641, 0
        %v2652 = vsel %vm1063, %v2642, 0
        %2654 = vmatpush.msra.mxu0 0.0
        %2655 = vmatpush.msra.mxu0 0.0
        %2656 = vmatpush.msra.mxu0 0.0
        %2657 = vmatpush.msra.mxu0 0.0
        %2658 = vmatpush.msra.mxu0 0.0
        %2659 = vmatpush.msra.mxu0 0.0
        %2660 = vmatpush.msra.mxu0 0.0
        %2661 = vmatpush.msra.mxu0 0.0
        %2662 = vmatpush.msra.mxu0 0.0
        %2663 = vmatpush.msra.mxu0 0.0
        %2664 = vmatpush.msra.mxu0 0.0
        %2665 = vmatpush.msra.mxu0 0.0
        %2666 = vmatpush.msra.mxu0 %v2647
        %2667 = vmatpush.msra.mxu0 %v2646
        %2668 = vmatpush.msra.mxu0 %v2645
        %2669 = vmatpush.msra.mxu0 %v2644
        %2670 = vmatmul.f32.gmra.mxu0 %v2649
        %v2671 = vpop.f32.mrf.mxu0
        %v2672 = vadd.f32 0.0, %v2671
        %2673 = vmatmul.f32.gmra.mxu0 %v2652
        %v2674 = vpop.f32.mrf.mxu0
        %v2675 = vadd.f32 0.0, %v2674
        %2676 = vdwg.mxu0
        %v2677 = vadd.f32 %v2636, %v2672
        %v2678 = vadd.f32 %v2639, %v2675
        %v2679 = vld [vmem:[#allocation26] sm:$0x1]
        %v2681 = vperm.slane %v2679, 0
        %v2683 = vadd.f32 %v2677, %v2681
        %v2684 = vadd.f32 %v2678, %v2681
        %2685 = vst.msk [vmem:[%s1010] sm:$0xff] %vm1063, %v2683
        %2686 = vst.msk [vmem:[%s1010 + $0x8] sm:$0xff] %vm1063, %v2684
        %2687 = vst.msk [vmem:[%s1010 + $0x10] sm:$0xff] %vm1063, %v2530
        %p2688 = scmp.lt.s32.totalorder %s44, 1
        %s2689 = scalar_select %p2688, %s44, 1
        %s2690 = smul.addr %s2689, 3
        %s2691 = smul.addr %s2690, 8
        %s2692 = scalar_lea.vmem %s24, %s2691
        // Predicated region
        $region181: #{forward.1} parent=115 // pred_check
          %p2693 = pneg %p576
        $region182: #{forward.1} parent=115 // pred_check_branch
          %2695 = sbr.rel (%p2693) target = $region184
        $region183: #{forward.1} parent=115 // pred_region
          _
        $region184: #{forward.1} parent=115 // pred_fallthru
          _
      $region116: #{forward.1} parent=5 // pred_fallthru
        _
      %p2696 = scmp.le.s32.totalorder 2, %s39
      // Predicated region
      $region185: #{forward.1} parent=5 // pred_check
        %p2697 = pneg %p2696
      $region186: #{forward.1} parent=5 // pred_check_branch
        %2699 = sbr.rel (%p2697) target = $region188
      $region187: #{forward.1} parent=5 // pred_region
        %s2700 = ssub.s32 %s39, 2
        // Predicated region
        $region189: #{forward.1} parent=187 // pred_check
          %p2701 = pneg %p582
        $region190: #{forward.1} parent=187 // pred_check_branch
          %2703 = sbr.rel (%p2701) target = $region192
        $region191: #{forward.1} parent=187 // pred_region
          %p2704 = scmp.lt.s32.totalorder %s45, 1
          %s2705 = scalar_select %p2704, %s45, 1
          %s2706 = smul.addr %s2705, 3
          %s2707 = smul.addr %s2706, 8
          %s2708 = scalar_lea.vmem %s24, %s2707
        $region192: #{forward.1} parent=187 // pred_fallthru
          _
      $region188: #{forward.1} parent=5 // pred_fallthru
        _
    $region6: #{forward.1} parent=1 // loop_footer
      %s43 = sadd.s32 1, %s39
    $region7: #{forward.1} parent=1 // loop_footer_branch
      %38 = sbr.rel target = $region3
    $region8: #{forward.1} parent=1 // loop_exit
      _
    %2709 = vsyncpa [#allocation4], 1
    %s2710 = scalar_lea.sflag [#allocation4], 1
    %2711 = vsyncpa %s2710, 1
    %2712 = vsyncpa [#allocation6], 1
    %2713 = vsyncpa [#allocation9], 1
    %2714 = vsyncpa [#allocation12], 1
    %2715 = vsyncpa [#allocation15], 1
    %2716 = vsyncpa [#allocation18], 1
    %2717 = vsyncpa [#allocation21], 1
    %2718 = vsyncpa [#allocation24], 1
    %2719 = vsyncpa [#allocation27], 1

</llo_original>
